<compile_context>
chip_gen: v7x
topology: tpu7x:2x2x1
jax: 0.10.0
libtpu: 0.0.40
codegen_flags: <defaults>
</compile_context>

<pallas_src>
import functools

import jax
import jax.numpy as jnp
from jax import lax
from jax.experimental import pallas as pl
from jax.experimental.pallas import tpu as pltpu

FEATURE_DIM = 2
LATENT_DIM = 128
NUM_BLADES = 67
HEAD_PAD = 128  # lane-dense padded width of the fused policy+value head (>= NUM_BLADES + 1)


def _ppo_kernel(x_ref,      # (T, B, F)      time-major input sequence, f32
                wih_ref,    # (F, 4H)        W_ih^T, gate columns [i|f|o|g], f32
                whh_ref,    # (H, 4H)        W_hh^T, gate columns [i|f|o|g], bf16
                b_ref,      # (1, 4H)        b_ih + b_hh, gate columns [i|f|o|g], f32
                wh_ref,     # (H, HEAD_PAD)  fused head: [W_policy^T | W_value^T | 0 pad], f32
                bh_ref,     # (1, HEAD_PAD)  fused head bias, f32
                out_ref,    # (B, HEAD_PAD)  [softmax(policy) | value | 0 pad], f32
                gx_ref,     # VMEM scratch (T, B, 4H): precomputed x @ W_ih + b
                *, num_blades):
    T, B, _ = x_ref.shape
    H = whh_ref.shape[0]

    wih = wih_ref[...]
    bias = b_ref[...]
    whh_bf = whh_ref[...]  # already bf16 (cast once in the wrapper, not per call)

    # ---- Input projection for all timesteps: off the serial critical path. ----
    for t in range(T):  # static unroll; T independent tiny matmuls (K = F = 2)
        gx_ref[t] = jnp.dot(x_ref[t], wih, preferred_element_type=jnp.float32) + bias

    # ---- Serial LSTM recurrence: only h @ W_hh + precomputed gates per step. ----
    def step(t, carry):
        h, c = carry
        gates = gx_ref[t] + jnp.dot(h.astype(jnp.bfloat16), whh_bf,
                                    preferred_element_type=jnp.float32)  # (B, 4H)
        # Gate columns are [i | f | o | g]: one contiguous sigmoid + one tanh.
        sig = jax.nn.sigmoid(gates[:, :3 * H])
        g_g = jnp.tanh(gates[:, 3 * H:])
        i_g = sig[:, 0:H]
        f_g = sig[:, H:2 * H]
        o_g = sig[:, 2 * H:3 * H]
        c_new = f_g * c + i_g * g_g
        h_new = o_g * jnp.tanh(c_new)
        return h_new, c_new

    h0 = jnp.zeros((B, H), jnp.float32)
    c0 = jnp.zeros((B, H), jnp.float32)
    h_last, _ = lax.fori_loop(0, T, step, (h0, c0), unroll=True)

    # ---- Fused policy+value head: single MXU dot, single lane-dense store. ----
    head = jnp.dot(h_last, wh_ref[...], preferred_element_type=jnp.float32) + bh_ref[...]
    col = lax.broadcasted_iota(jnp.int32, head.shape, 1)
    is_policy = col < num_blades
    masked = jnp.where(is_policy, head, jnp.float32(-1e30))
    m = jnp.max(masked, axis=-1, keepdims=True)
    e = jnp.exp(masked - m)  # exactly 0 in the value/pad columns
    # Exact reciprocal kept so softmax rows sum to 1 (matches torch.softmax semantics).
    probs = e * pl.reciprocal(jnp.sum(e, axis=-1, keepdims=True), approx=False)
    value = head[:, num_blades:num_blades + 1]                 # (B, 1)
    is_value = (col == num_blades).astype(jnp.float32)
    out_ref[...] = probs + is_value * value


def ppo_actor_critic_forward(x, params, *, num_blades=NUM_BLADES):
    """x: (B, T, F) float32 (batch_first, like PyTorch). Returns (policy, value)."""
    B, T, F = x.shape
    H = params["whh_t"].shape[0]
    head_pad = params["w_head"].shape[1]

    x_tbf = jnp.transpose(x, (1, 0, 2))  # (T, B, F): dynamic timestep index on leading axis

    # Advisory cost hint so XLA overlaps this tiny kernel with surrounding ops.
    flops = 2 * T * B * F * 4 * H + 2 * T * B * H * 4 * H + 2 * B * H * head_pad
    transcendentals = T * B * 5 * H + B * head_pad
    bytes_accessed = (4 * (T * B * F + F * 4 * H + 4 * H + H * head_pad + head_pad
                           + B * head_pad)
                      + 2 * H * 4 * H)  # W_hh travels as bf16

    vmem = pl.BlockSpec(memory_space=pltpu.MemorySpace.VMEM)
    out = pl.pallas_call(
        functools.partial(_ppo_kernel, num_blades=num_blades),
        out_shape=jax.ShapeDtypeStruct((B, head_pad), jnp.float32),
        in_specs=[vmem] * 6,
        out_specs=vmem,
        scratch_shapes=[pltpu.VMEM((T, B, 4 * H), jnp.float32)],
        cost_estimate=pl.CostEstimate(flops=flops,
                                      transcendentals=transcendentals,
                                      bytes_accessed=bytes_accessed),
    )(x_tbf, params["wih_t"], params["whh_t"], params["b"],
      params["w_head"], params["b_head"])

    policy = out[:, :num_blades]
    value = out[:, num_blades:num_blades + 1]
    return policy, value


def _reorder_gates(w, H):
    """Permute last-axis gate blocks from PyTorch's [i|f|g|o] to [i|f|o|g]."""
    return jnp.concatenate([w[..., :2 * H], w[..., 3 * H:4 * H], w[..., 2 * H:3 * H]], axis=-1)


def prepare_params(raw, head_pad=HEAD_PAD):
    """Convert PyTorch-layout weights into the kernel's permuted / fused / padded layout."""
    H = raw["w_hh"].shape[1]
    nb = raw["w_p"].shape[0]
    assert head_pad >= nb + 1 and head_pad % 128 == 0
    wih_t = _reorder_gates(raw["w_ih"].T, H)                                    # (F, 4H) f32
    whh_t = _reorder_gates(raw["w_hh"].T, H).astype(jnp.bfloat16)               # (H, 4H) bf16
    b = _reorder_gates((raw["b_ih"] + raw["b_hh"]).reshape(1, 4 * H), H)        # (1, 4H) f32
    w_head = jnp.zeros((H, head_pad), jnp.float32)
    w_head = w_head.at[:, :nb].set(raw["w_p"].T).at[:, nb:nb + 1].set(raw["w_v"].T)
    b_head = jnp.zeros((1, head_pad), jnp.float32)
    b_head = b_head.at[0, :nb].set(raw["b_p"]).at[0, nb].set(raw["b_v"][0])
    return {"wih_t": wih_t, "whh_t": whh_t, "b": b, "w_head": w_head, "b_head": b_head}


def init_raw_params(key, feature_dim=FEATURE_DIM, latent_dim=LATENT_DIM, num_blades=NUM_BLADES):
    """Deterministic synthetic parameters in the PyTorch module's native layout."""
    ks = jax.random.split(key, 8)
    H = latent_dim
    s = 1.0 / jnp.sqrt(jnp.float32(H))
    return {
        "w_ih": jax.random.uniform(ks[0], (4 * H, feature_dim), jnp.float32, -s, s),
        "w_hh": jax.random.uniform(ks[1], (4 * H, H), jnp.float32, -s, s),
        "b_ih": jax.random.uniform(ks[2], (4 * H,), jnp.float32, -s, s),
        "b_hh": jax.random.uniform(ks[3], (4 * H,), jnp.float32, -s, s),
        "w_p": jax.random.uniform(ks[4], (num_blades, H), jnp.float32, -s, s),
        "b_p": jax.random.uniform(ks[5], (num_blades,), jnp.float32, -s, s),
        "w_v": jax.random.uniform(ks[6], (1, H), jnp.float32, -s, s),
        "b_v": jax.random.uniform(ks[7], (1,), jnp.float32, -s, s),
    }


def reference_forward(x, raw):
    """Pure-JAX float32 reference matching the PyTorch forward (for correctness check)."""
    B, T, _ = x.shape
    H = raw["w_hh"].shape[1]
    w_ih_t, w_hh_t = raw["w_ih"].T, raw["w_hh"].T
    b = raw["b_ih"] + raw["b_hh"]
    h = jnp.zeros((B, H), jnp.float32)
    c = jnp.zeros((B, H), jnp.float32)
    for t in range(T):
        g = x[:, t, :] @ w_ih_t + h @ w_hh_t + b
        i = jax.nn.sigmoid(g[:, :H])
        f = jax.nn.sigmoid(g[:, H:2 * H])
        gg = jnp.tanh(g[:, 2 * H:3 * H])
        o = jax.nn.sigmoid(g[:, 3 * H:])
        c = f * c + i * gg
        h = o * jnp.tanh(c)
    logits = h @ raw["w_p"].T + raw["b_p"]
    policy = jax.nn.softmax(logits, axis=-1)
    value = h @ raw["w_v"].T + raw["b_v"]
    return policy, value


if __name__ == "__main__":
    key = jax.random.PRNGKey(0)
    k_x, k_p = jax.random.split(key)

    B, T = 2, 8
    x = jax.random.normal(k_x, (B, T, FEATURE_DIM), jnp.float32)  # (batch, seq, feature)
    raw = init_raw_params(k_p)
    params = prepare_params(raw)

    policy, value = jax.jit(ppo_actor_critic_forward)(x, params)
    jax.block_until_ready((policy, value))

    assert policy.shape == (B, NUM_BLADES)
    assert value.shape == (B, 1)
    # softmax rows should sum to 1 (exact reciprocal used in-kernel)
    assert bool(jnp.allclose(jnp.sum(policy, axis=-1), 1.0, atol=1e-5))

    # Compare against a pure-JAX f32 reference (tolerance covers bf16 recurrent weights).
    policy_ref, value_ref = reference_forward(x, raw)
    assert bool(jnp.allclose(policy, policy_ref, atol=2e-2))
    assert bool(jnp.allclose(value, value_ref, atol=2e-2))

    print("KERNEL_OK")
</pallas_src>

<mosaic_0001>
module attributes {stable_mosaic.version = 11 : i64} {
  func.func @_ppo_kernel(%arg0: memref<8x2x2xf32, #tpu.memory_space<vmem>>, %arg1: memref<2x512xf32, #tpu.memory_space<vmem>>, %arg2: memref<128x512xbf16, #tpu.memory_space<vmem>>, %arg3: memref<1x512xf32, #tpu.memory_space<vmem>>, %arg4: memref<128x128xf32, #tpu.memory_space<vmem>>, %arg5: memref<1x128xf32, #tpu.memory_space<vmem>>, %arg6: memref<2x128xf32, #tpu.memory_space<vmem>>, %arg7: memref<8x2x512xf32, #tpu.memory_space<vmem>>) attributes {dimension_semantics = [], scalar_prefetch = 0 : i64, scratch_operands = 1 : i64, tpu.core_type = #tpu.core_type<tc>} {
    %c0 = arith.constant 0 : index
    %c0_0 = arith.constant 0 : index
    %0 = vector.load %arg1[%c0, %c0_0] : memref<2x512xf32, #tpu.memory_space<vmem>>, vector<2x512xf32>
    %c0_1 = arith.constant 0 : index
    %c0_2 = arith.constant 0 : index
    %1 = vector.load %arg3[%c0_1, %c0_2] : memref<1x512xf32, #tpu.memory_space<vmem>>, vector<1x512xf32>
    %c0_3 = arith.constant 0 : index
    %c0_4 = arith.constant 0 : index
    %2 = vector.load %arg2[%c0_3, %c0_4] : memref<128x512xbf16, #tpu.memory_space<vmem>>, vector<128x512xbf16>
    %c0_5 = arith.constant 0 : index
    %c0_6 = arith.constant 0 : index
    %c0_7 = arith.constant 0 : index
    %3 = vector.load %arg0[%c0_5, %c0_6, %c0_7] : memref<8x2x2xf32, #tpu.memory_space<vmem>>, vector<1x2x2xf32>
    %4 = vector.shape_cast %3 : vector<1x2x2xf32> to vector<2x2xf32>
    %cst = arith.constant dense<0.000000e+00> : vector<2x512xf32>
    %5 = tpu.matmul %4, %0, %cst {dimension_numbers = #tpu.dot_dimension_numbers<[1], [0], [0], [1], [0, 0, 1, 1], [], []>} : vector<2x2xf32>, vector<2x512xf32>, vector<2x512xf32> -> vector<2x512xf32>
    %6 = vector.broadcast %1 : vector<1x512xf32> to vector<2x512xf32>
    %7 = arith.addf %5, %6 : vector<2x512xf32>
    %c0_8 = arith.constant 0 : index
    %c0_9 = arith.constant 0 : index
    %c0_10 = arith.constant 0 : index
    %8 = vector.load %arg7[%c0_8, %c0_9, %c0_10] : memref<8x2x512xf32, #tpu.memory_space<vmem>>, vector<1x2x512xf32>
    %9 = vector.shape_cast %8 : vector<1x2x512xf32> to vector<2x512xf32>
    %10 = vector.shape_cast %7 : vector<2x512xf32> to vector<1x2x512xf32>
    tpu.vector_store %arg7[%c0_8, %c0_9, %c0_10], %10 {strides = array<i32>} : memref<8x2x512xf32, #tpu.memory_space<vmem>>, vector<1x2x512xf32>,
    %c1 = arith.constant 1 : index
    %c0_11 = arith.constant 0 : index
    %c0_12 = arith.constant 0 : index
    %11 = vector.load %arg0[%c1, %c0_11, %c0_12] : memref<8x2x2xf32, #tpu.memory_space<vmem>>, vector<1x2x2xf32>
    %12 = vector.shape_cast %11 : vector<1x2x2xf32> to vector<2x2xf32>
    %cst_13 = arith.constant dense<0.000000e+00> : vector<2x512xf32>
    %13 = tpu.matmul %12, %0, %cst_13 {dimension_numbers = #tpu.dot_dimension_numbers<[1], [0], [0], [1], [0, 0, 1, 1], [], []>} : vector<2x2xf32>, vector<2x512xf32>, vector<2x512xf32> -> vector<2x512xf32>
    %14 = vector.broadcast %1 : vector<1x512xf32> to vector<2x512xf32>
    %15 = arith.addf %13, %14 : vector<2x512xf32>
    %c1_14 = arith.constant 1 : index
    %c0_15 = arith.constant 0 : index
    %c0_16 = arith.constant 0 : index
    %16 = vector.load %arg7[%c1_14, %c0_15, %c0_16] : memref<8x2x512xf32, #tpu.memory_space<vmem>>, vector<1x2x512xf32>
    %17 = vector.shape_cast %16 : vector<1x2x512xf32> to vector<2x512xf32>
    %18 = vector.shape_cast %15 : vector<2x512xf32> to vector<1x2x512xf32>
    tpu.vector_store %arg7[%c1_14, %c0_15, %c0_16], %18 {strides = array<i32>} : memref<8x2x512xf32, #tpu.memory_space<vmem>>, vector<1x2x512xf32>,
    %c2 = arith.constant 2 : index
    %c0_17 = arith.constant 0 : index
    %c0_18 = arith.constant 0 : index
    %19 = vector.load %arg0[%c2, %c0_17, %c0_18] : memref<8x2x2xf32, #tpu.memory_space<vmem>>, vector<1x2x2xf32>
    %20 = vector.shape_cast %19 : vector<1x2x2xf32> to vector<2x2xf32>
    %cst_19 = arith.constant dense<0.000000e+00> : vector<2x512xf32>
    %21 = tpu.matmul %20, %0, %cst_19 {dimension_numbers = #tpu.dot_dimension_numbers<[1], [0], [0], [1], [0, 0, 1, 1], [], []>} : vector<2x2xf32>, vector<2x512xf32>, vector<2x512xf32> -> vector<2x512xf32>
    %22 = vector.broadcast %1 : vector<1x512xf32> to vector<2x512xf32>
    %23 = arith.addf %21, %22 : vector<2x512xf32>
    %c2_20 = arith.constant 2 : index
    %c0_21 = arith.constant 0 : index
    %c0_22 = arith.constant 0 : index
    %24 = vector.load %arg7[%c2_20, %c0_21, %c0_22] : memref<8x2x512xf32, #tpu.memory_space<vmem>>, vector<1x2x512xf32>
    %25 = vector.shape_cast %24 : vector<1x2x512xf32> to vector<2x512xf32>
    %26 = vector.shape_cast %23 : vector<2x512xf32> to vector<1x2x512xf32>
    tpu.vector_store %arg7[%c2_20, %c0_21, %c0_22], %26 {strides = array<i32>} : memref<8x2x512xf32, #tpu.memory_space<vmem>>, vector<1x2x512xf32>,
    %c3 = arith.constant 3 : index
    %c0_23 = arith.constant 0 : index
    %c0_24 = arith.constant 0 : index
    %27 = vector.load %arg0[%c3, %c0_23, %c0_24] : memref<8x2x2xf32, #tpu.memory_space<vmem>>, vector<1x2x2xf32>
    %28 = vector.shape_cast %27 : vector<1x2x2xf32> to vector<2x2xf32>
    %cst_25 = arith.constant dense<0.000000e+00> : vector<2x512xf32>
    %29 = tpu.matmul %28, %0, %cst_25 {dimension_numbers = #tpu.dot_dimension_numbers<[1], [0], [0], [1], [0, 0, 1, 1], [], []>} : vector<2x2xf32>, vector<2x512xf32>, vector<2x512xf32> -> vector<2x512xf32>
    %30 = vector.broadcast %1 : vector<1x512xf32> to vector<2x512xf32>
    %31 = arith.addf %29, %30 : vector<2x512xf32>
    %c3_26 = arith.constant 3 : index
    %c0_27 = arith.constant 0 : index
    %c0_28 = arith.constant 0 : index
    %32 = vector.load %arg7[%c3_26, %c0_27, %c0_28] : memref<8x2x512xf32, #tpu.memory_space<vmem>>, vector<1x2x512xf32>
    %33 = vector.shape_cast %32 : vector<1x2x512xf32> to vector<2x512xf32>
    %34 = vector.shape_cast %31 : vector<2x512xf32> to vector<1x2x512xf32>
    tpu.vector_store %arg7[%c3_26, %c0_27, %c0_28], %34 {strides = array<i32>} : memref<8x2x512xf32, #tpu.memory_space<vmem>>, vector<1x2x512xf32>,
    %c4 = arith.constant 4 : index
    %c0_29 = arith.constant 0 : index
    %c0_30 = arith.constant 0 : index
    %35 = vector.load %arg0[%c4, %c0_29, %c0_30] : memref<8x2x2xf32, #tpu.memory_space<vmem>>, vector<1x2x2xf32>
    %36 = vector.shape_cast %35 : vector<1x2x2xf32> to vector<2x2xf32>
    %cst_31 = arith.constant dense<0.000000e+00> : vector<2x512xf32>
    %37 = tpu.matmul %36, %0, %cst_31 {dimension_numbers = #tpu.dot_dimension_numbers<[1], [0], [0], [1], [0, 0, 1, 1], [], []>} : vector<2x2xf32>, vector<2x512xf32>, vector<2x512xf32> -> vector<2x512xf32>
    %38 = vector.broadcast %1 : vector<1x512xf32> to vector<2x512xf32>
    %39 = arith.addf %37, %38 : vector<2x512xf32>
    %c4_32 = arith.constant 4 : index
    %c0_33 = arith.constant 0 : index
    %c0_34 = arith.constant 0 : index
    %40 = vector.load %arg7[%c4_32, %c0_33, %c0_34] : memref<8x2x512xf32, #tpu.memory_space<vmem>>, vector<1x2x512xf32>
    %41 = vector.shape_cast %40 : vector<1x2x512xf32> to vector<2x512xf32>
    %42 = vector.shape_cast %39 : vector<2x512xf32> to vector<1x2x512xf32>
    tpu.vector_store %arg7[%c4_32, %c0_33, %c0_34], %42 {strides = array<i32>} : memref<8x2x512xf32, #tpu.memory_space<vmem>>, vector<1x2x512xf32>,
    %c5 = arith.constant 5 : index
    %c0_35 = arith.constant 0 : index
    %c0_36 = arith.constant 0 : index
    %43 = vector.load %arg0[%c5, %c0_35, %c0_36] : memref<8x2x2xf32, #tpu.memory_space<vmem>>, vector<1x2x2xf32>
    %44 = vector.shape_cast %43 : vector<1x2x2xf32> to vector<2x2xf32>
    %cst_37 = arith.constant dense<0.000000e+00> : vector<2x512xf32>
    %45 = tpu.matmul %44, %0, %cst_37 {dimension_numbers = #tpu.dot_dimension_numbers<[1], [0], [0], [1], [0, 0, 1, 1], [], []>} : vector<2x2xf32>, vector<2x512xf32>, vector<2x512xf32> -> vector<2x512xf32>
    %46 = vector.broadcast %1 : vector<1x512xf32> to vector<2x512xf32>
    %47 = arith.addf %45, %46 : vector<2x512xf32>
    %c5_38 = arith.constant 5 : index
    %c0_39 = arith.constant 0 : index
    %c0_40 = arith.constant 0 : index
    %48 = vector.load %arg7[%c5_38, %c0_39, %c0_40] : memref<8x2x512xf32, #tpu.memory_space<vmem>>, vector<1x2x512xf32>
    %49 = vector.shape_cast %48 : vector<1x2x512xf32> to vector<2x512xf32>
    %50 = vector.shape_cast %47 : vector<2x512xf32> to vector<1x2x512xf32>
    tpu.vector_store %arg7[%c5_38, %c0_39, %c0_40], %50 {strides = array<i32>} : memref<8x2x512xf32, #tpu.memory_space<vmem>>, vector<1x2x512xf32>,
    %c6 = arith.constant 6 : index
    %c0_41 = arith.constant 0 : index
    %c0_42 = arith.constant 0 : index
    %51 = vector.load %arg0[%c6, %c0_41, %c0_42] : memref<8x2x2xf32, #tpu.memory_space<vmem>>, vector<1x2x2xf32>
    %52 = vector.shape_cast %51 : vector<1x2x2xf32> to vector<2x2xf32>
    %cst_43 = arith.constant dense<0.000000e+00> : vector<2x512xf32>
    %53 = tpu.matmul %52, %0, %cst_43 {dimension_numbers = #tpu.dot_dimension_numbers<[1], [0], [0], [1], [0, 0, 1, 1], [], []>} : vector<2x2xf32>, vector<2x512xf32>, vector<2x512xf32> -> vector<2x512xf32>
    %54 = vector.broadcast %1 : vector<1x512xf32> to vector<2x512xf32>
    %55 = arith.addf %53, %54 : vector<2x512xf32>
    %c6_44 = arith.constant 6 : index
    %c0_45 = arith.constant 0 : index
    %c0_46 = arith.constant 0 : index
    %56 = vector.load %arg7[%c6_44, %c0_45, %c0_46] : memref<8x2x512xf32, #tpu.memory_space<vmem>>, vector<1x2x512xf32>
    %57 = vector.shape_cast %56 : vector<1x2x512xf32> to vector<2x512xf32>
    %58 = vector.shape_cast %55 : vector<2x512xf32> to vector<1x2x512xf32>
    tpu.vector_store %arg7[%c6_44, %c0_45, %c0_46], %58 {strides = array<i32>} : memref<8x2x512xf32, #tpu.memory_space<vmem>>, vector<1x2x512xf32>,
    %c7 = arith.constant 7 : index
    %c0_47 = arith.constant 0 : index
    %c0_48 = arith.constant 0 : index
    %59 = vector.load %arg0[%c7, %c0_47, %c0_48] : memref<8x2x2xf32, #tpu.memory_space<vmem>>, vector<1x2x2xf32>
    %60 = vector.shape_cast %59 : vector<1x2x2xf32> to vector<2x2xf32>
    %cst_49 = arith.constant dense<0.000000e+00> : vector<2x512xf32>
    %61 = tpu.matmul %60, %0, %cst_49 {dimension_numbers = #tpu.dot_dimension_numbers<[1], [0], [0], [1], [0, 0, 1, 1], [], []>} : vector<2x2xf32>, vector<2x512xf32>, vector<2x512xf32> -> vector<2x512xf32>
    %62 = vector.broadcast %1 : vector<1x512xf32> to vector<2x512xf32>
    %63 = arith.addf %61, %62 : vector<2x512xf32>
    %c7_50 = arith.constant 7 : index
    %c0_51 = arith.constant 0 : index
    %c0_52 = arith.constant 0 : index
    %64 = vector.load %arg7[%c7_50, %c0_51, %c0_52] : memref<8x2x512xf32, #tpu.memory_space<vmem>>, vector<1x2x512xf32>
    %65 = vector.shape_cast %64 : vector<1x2x512xf32> to vector<2x512xf32>
    %66 = vector.shape_cast %63 : vector<2x512xf32> to vector<1x2x512xf32>
    tpu.vector_store %arg7[%c7_50, %c0_51, %c0_52], %66 {strides = array<i32>} : memref<8x2x512xf32, #tpu.memory_space<vmem>>, vector<1x2x512xf32>,
    %cst_53 = arith.constant 0.000000e+00 : f32
    %67 = vector.broadcast %cst_53 : f32 to vector<2x128xf32>
    %cst_54 = arith.constant 0.000000e+00 : f32
    %68 = vector.broadcast %cst_54 : f32 to vector<2x128xf32>
    %c0_i32 = arith.constant 0 : i32
    %69 = arith.index_cast %c0_i32 : i32 to index
    %c0_55 = arith.constant 0 : index
    %c0_56 = arith.constant 0 : index
    %70 = vector.load %arg7[%69, %c0_55, %c0_56] : memref<8x2x512xf32, #tpu.memory_space<vmem>>, vector<1x2x512xf32>
    %71 = vector.shape_cast %70 : vector<1x2x512xf32> to vector<2x512xf32>
    %72 = arith.truncf %67 : vector<2x128xf32> to vector<2x128xbf16>
    %cst_57 = arith.constant dense<0.000000e+00> : vector<2x512xf32>
    %73 = tpu.matmul %72, %2, %cst_57 {dimension_numbers = #tpu.dot_dimension_numbers<[1], [0], [0], [1], [0, 0, 1, 1], [], []>} : vector<2x128xbf16>, vector<128x512xbf16>, vector<2x512xf32> -> vector<2x512xf32>
    %74 = arith.addf %71, %73 : vector<2x512xf32>
    %75 = vector.extract_strided_slice %74 {offsets = [0, 0], sizes = [2, 384], strides = [1, 1]} : vector<2x512xf32> to vector<2x384xf32>
    %76 = arith.negf %75 : vector<2x384xf32>
    %77 = math.exp %76 : vector<2x384xf32>
    %cst_58 = arith.constant 1.000000e+00 : f32
    %78 = vector.broadcast %cst_58 : f32 to vector<2x384xf32>
    %79 = arith.addf %78, %77 : vector<2x384xf32>
    %80 = arith.divf %78, %79 : vector<2x384xf32>
    %81 = vector.extract_strided_slice %74 {offsets = [0, 384], sizes = [2, 128], strides = [1, 1]} : vector<2x512xf32> to vector<2x128xf32>
    %82 = math.tanh %81 : vector<2x128xf32>
    %83 = vector.extract_strided_slice %80 {offsets = [0, 0], sizes = [2, 128], strides = [1, 1]} : vector<2x384xf32> to vector<2x128xf32>
    %84 = vector.extract_strided_slice %80 {offsets = [0, 128], sizes = [2, 128], strides = [1, 1]} : vector<2x384xf32> to vector<2x128xf32>
    %85 = vector.extract_strided_slice %80 {offsets = [0, 256], sizes = [2, 128], strides = [1, 1]} : vector<2x384xf32> to vector<2x128xf32>
    %86 = arith.mulf %84, %68 : vector<2x128xf32>
    %87 = arith.mulf %83, %82 : vector<2x128xf32>
    %88 = arith.addf %86, %87 : vector<2x128xf32>
    %89 = math.tanh %88 : vector<2x128xf32>
    %90 = arith.mulf %85, %89 : vector<2x128xf32>
    %c1_i32 = arith.constant 1 : i32
    %91 = arith.index_cast %c1_i32 : i32 to index
    %c0_59 = arith.constant 0 : index
    %c0_60 = arith.constant 0 : index
    %92 = vector.load %arg7[%91, %c0_59, %c0_60] : memref<8x2x512xf32, #tpu.memory_space<vmem>>, vector<1x2x512xf32>
    %93 = vector.shape_cast %92 : vector<1x2x512xf32> to vector<2x512xf32>
    %94 = arith.truncf %90 : vector<2x128xf32> to vector<2x128xbf16>
    %cst_61 = arith.constant dense<0.000000e+00> : vector<2x512xf32>
    %95 = tpu.matmul %94, %2, %cst_61 {dimension_numbers = #tpu.dot_dimension_numbers<[1], [0], [0], [1], [0, 0, 1, 1], [], []>} : vector<2x128xbf16>, vector<128x512xbf16>, vector<2x512xf32> -> vector<2x512xf32>
    %96 = arith.addf %93, %95 : vector<2x512xf32>
    %97 = vector.extract_strided_slice %96 {offsets = [0, 0], sizes = [2, 384], strides = [1, 1]} : vector<2x512xf32> to vector<2x384xf32>
    %98 = arith.negf %97 : vector<2x384xf32>
    %99 = math.exp %98 : vector<2x384xf32>
    %cst_62 = arith.constant 1.000000e+00 : f32
    %100 = vector.broadcast %cst_62 : f32 to vector<2x384xf32>
    %101 = arith.addf %100, %99 : vector<2x384xf32>
    %102 = arith.divf %100, %101 : vector<2x384xf32>
    %103 = vector.extract_strided_slice %96 {offsets = [0, 384], sizes = [2, 128], strides = [1, 1]} : vector<2x512xf32> to vector<2x128xf32>
    %104 = math.tanh %103 : vector<2x128xf32>
    %105 = vector.extract_strided_slice %102 {offsets = [0, 0], sizes = [2, 128], strides = [1, 1]} : vector<2x384xf32> to vector<2x128xf32>
    %106 = vector.extract_strided_slice %102 {offsets = [0, 128], sizes = [2, 128], strides = [1, 1]} : vector<2x384xf32> to vector<2x128xf32>
    %107 = vector.extract_strided_slice %102 {offsets = [0, 256], sizes = [2, 128], strides = [1, 1]} : vector<2x384xf32> to vector<2x128xf32>
    %108 = arith.mulf %106, %88 : vector<2x128xf32>
    %109 = arith.mulf %105, %104 : vector<2x128xf32>
    %110 = arith.addf %108, %109 : vector<2x128xf32>
    %111 = math.tanh %110 : vector<2x128xf32>
    %112 = arith.mulf %107, %111 : vector<2x128xf32>
    %c2_i32 = arith.constant 2 : i32
    %113 = arith.index_cast %c2_i32 : i32 to index
    %c0_63 = arith.constant 0 : index
    %c0_64 = arith.constant 0 : index
    %114 = vector.load %arg7[%113, %c0_63, %c0_64] : memref<8x2x512xf32, #tpu.memory_space<vmem>>, vector<1x2x512xf32>
    %115 = vector.shape_cast %114 : vector<1x2x512xf32> to vector<2x512xf32>
    %116 = arith.truncf %112 : vector<2x128xf32> to vector<2x128xbf16>
    %cst_65 = arith.constant dense<0.000000e+00> : vector<2x512xf32>
    %117 = tpu.matmul %116, %2, %cst_65 {dimension_numbers = #tpu.dot_dimension_numbers<[1], [0], [0], [1], [0, 0, 1, 1], [], []>} : vector<2x128xbf16>, vector<128x512xbf16>, vector<2x512xf32> -> vector<2x512xf32>
    %118 = arith.addf %115, %117 : vector<2x512xf32>
    %119 = vector.extract_strided_slice %118 {offsets = [0, 0], sizes = [2, 384], strides = [1, 1]} : vector<2x512xf32> to vector<2x384xf32>
    %120 = arith.negf %119 : vector<2x384xf32>
    %121 = math.exp %120 : vector<2x384xf32>
    %cst_66 = arith.constant 1.000000e+00 : f32
    %122 = vector.broadcast %cst_66 : f32 to vector<2x384xf32>
    %123 = arith.addf %122, %121 : vector<2x384xf32>
    %124 = arith.divf %122, %123 : vector<2x384xf32>
    %125 = vector.extract_strided_slice %118 {offsets = [0, 384], sizes = [2, 128], strides = [1, 1]} : vector<2x512xf32> to vector<2x128xf32>
    %126 = math.tanh %125 : vector<2x128xf32>
    %127 = vector.extract_strided_slice %124 {offsets = [0, 0], sizes = [2, 128], strides = [1, 1]} : vector<2x384xf32> to vector<2x128xf32>
    %128 = vector.extract_strided_slice %124 {offsets = [0, 128], sizes = [2, 128], strides = [1, 1]} : vector<2x384xf32> to vector<2x128xf32>
    %129 = vector.extract_strided_slice %124 {offsets = [0, 256], sizes = [2, 128], strides = [1, 1]} : vector<2x384xf32> to vector<2x128xf32>
    %130 = arith.mulf %128, %110 : vector<2x128xf32>
    %131 = arith.mulf %127, %126 : vector<2x128xf32>
    %132 = arith.addf %130, %131 : vector<2x128xf32>
    %133 = math.tanh %132 : vector<2x128xf32>
    %134 = arith.mulf %129, %133 : vector<2x128xf32>
    %c3_i32 = arith.constant 3 : i32
    %135 = arith.index_cast %c3_i32 : i32 to index
    %c0_67 = arith.constant 0 : index
    %c0_68 = arith.constant 0 : index
    %136 = vector.load %arg7[%135, %c0_67, %c0_68] : memref<8x2x512xf32, #tpu.memory_space<vmem>>, vector<1x2x512xf32>
    %137 = vector.shape_cast %136 : vector<1x2x512xf32> to vector<2x512xf32>
    %138 = arith.truncf %134 : vector<2x128xf32> to vector<2x128xbf16>
    %cst_69 = arith.constant dense<0.000000e+00> : vector<2x512xf32>
    %139 = tpu.matmul %138, %2, %cst_69 {dimension_numbers = #tpu.dot_dimension_numbers<[1], [0], [0], [1], [0, 0, 1, 1], [], []>} : vector<2x128xbf16>, vector<128x512xbf16>, vector<2x512xf32> -> vector<2x512xf32>
    %140 = arith.addf %137, %139 : vector<2x512xf32>
    %141 = vector.extract_strided_slice %140 {offsets = [0, 0], sizes = [2, 384], strides = [1, 1]} : vector<2x512xf32> to vector<2x384xf32>
    %142 = arith.negf %141 : vector<2x384xf32>
    %143 = math.exp %142 : vector<2x384xf32>
    %cst_70 = arith.constant 1.000000e+00 : f32
    %144 = vector.broadcast %cst_70 : f32 to vector<2x384xf32>
    %145 = arith.addf %144, %143 : vector<2x384xf32>
    %146 = arith.divf %144, %145 : vector<2x384xf32>
    %147 = vector.extract_strided_slice %140 {offsets = [0, 384], sizes = [2, 128], strides = [1, 1]} : vector<2x512xf32> to vector<2x128xf32>
    %148 = math.tanh %147 : vector<2x128xf32>
    %149 = vector.extract_strided_slice %146 {offsets = [0, 0], sizes = [2, 128], strides = [1, 1]} : vector<2x384xf32> to vector<2x128xf32>
    %150 = vector.extract_strided_slice %146 {offsets = [0, 128], sizes = [2, 128], strides = [1, 1]} : vector<2x384xf32> to vector<2x128xf32>
    %151 = vector.extract_strided_slice %146 {offsets = [0, 256], sizes = [2, 128], strides = [1, 1]} : vector<2x384xf32> to vector<2x128xf32>
    %152 = arith.mulf %150, %132 : vector<2x128xf32>
    %153 = arith.mulf %149, %148 : vector<2x128xf32>
    %154 = arith.addf %152, %153 : vector<2x128xf32>
    %155 = math.tanh %154 : vector<2x128xf32>
    %156 = arith.mulf %151, %155 : vector<2x128xf32>
    %c4_i32 = arith.constant 4 : i32
    %157 = arith.index_cast %c4_i32 : i32 to index
    %c0_71 = arith.constant 0 : index
    %c0_72 = arith.constant 0 : index
    %158 = vector.load %arg7[%157, %c0_71, %c0_72] : memref<8x2x512xf32, #tpu.memory_space<vmem>>, vector<1x2x512xf32>
    %159 = vector.shape_cast %158 : vector<1x2x512xf32> to vector<2x512xf32>
    %160 = arith.truncf %156 : vector<2x128xf32> to vector<2x128xbf16>
    %cst_73 = arith.constant dense<0.000000e+00> : vector<2x512xf32>
    %161 = tpu.matmul %160, %2, %cst_73 {dimension_numbers = #tpu.dot_dimension_numbers<[1], [0], [0], [1], [0, 0, 1, 1], [], []>} : vector<2x128xbf16>, vector<128x512xbf16>, vector<2x512xf32> -> vector<2x512xf32>
    %162 = arith.addf %159, %161 : vector<2x512xf32>
    %163 = vector.extract_strided_slice %162 {offsets = [0, 0], sizes = [2, 384], strides = [1, 1]} : vector<2x512xf32> to vector<2x384xf32>
    %164 = arith.negf %163 : vector<2x384xf32>
    %165 = math.exp %164 : vector<2x384xf32>
    %cst_74 = arith.constant 1.000000e+00 : f32
    %166 = vector.broadcast %cst_74 : f32 to vector<2x384xf32>
    %167 = arith.addf %166, %165 : vector<2x384xf32>
    %168 = arith.divf %166, %167 : vector<2x384xf32>
    %169 = vector.extract_strided_slice %162 {offsets = [0, 384], sizes = [2, 128], strides = [1, 1]} : vector<2x512xf32> to vector<2x128xf32>
    %170 = math.tanh %169 : vector<2x128xf32>
    %171 = vector.extract_strided_slice %168 {offsets = [0, 0], sizes = [2, 128], strides = [1, 1]} : vector<2x384xf32> to vector<2x128xf32>
    %172 = vector.extract_strided_slice %168 {offsets = [0, 128], sizes = [2, 128], strides = [1, 1]} : vector<2x384xf32> to vector<2x128xf32>
    %173 = vector.extract_strided_slice %168 {offsets = [0, 256], sizes = [2, 128], strides = [1, 1]} : vector<2x384xf32> to vector<2x128xf32>
    %174 = arith.mulf %172, %154 : vector<2x128xf32>
    %175 = arith.mulf %171, %170 : vector<2x128xf32>
    %176 = arith.addf %174, %175 : vector<2x128xf32>
    %177 = math.tanh %176 : vector<2x128xf32>
    %178 = arith.mulf %173, %177 : vector<2x128xf32>
    %c5_i32 = arith.constant 5 : i32
    %179 = arith.index_cast %c5_i32 : i32 to index
    %c0_75 = arith.constant 0 : index
    %c0_76 = arith.constant 0 : index
    %180 = vector.load %arg7[%179, %c0_75, %c0_76] : memref<8x2x512xf32, #tpu.memory_space<vmem>>, vector<1x2x512xf32>
    %181 = vector.shape_cast %180 : vector<1x2x512xf32> to vector<2x512xf32>
    %182 = arith.truncf %178 : vector<2x128xf32> to vector<2x128xbf16>
    %cst_77 = arith.constant dense<0.000000e+00> : vector<2x512xf32>
    %183 = tpu.matmul %182, %2, %cst_77 {dimension_numbers = #tpu.dot_dimension_numbers<[1], [0], [0], [1], [0, 0, 1, 1], [], []>} : vector<2x128xbf16>, vector<128x512xbf16>, vector<2x512xf32> -> vector<2x512xf32>
    %184 = arith.addf %181, %183 : vector<2x512xf32>
    %185 = vector.extract_strided_slice %184 {offsets = [0, 0], sizes = [2, 384], strides = [1, 1]} : vector<2x512xf32> to vector<2x384xf32>
    %186 = arith.negf %185 : vector<2x384xf32>
    %187 = math.exp %186 : vector<2x384xf32>
    %cst_78 = arith.constant 1.000000e+00 : f32
    %188 = vector.broadcast %cst_78 : f32 to vector<2x384xf32>
    %189 = arith.addf %188, %187 : vector<2x384xf32>
    %190 = arith.divf %188, %189 : vector<2x384xf32>
    %191 = vector.extract_strided_slice %184 {offsets = [0, 384], sizes = [2, 128], strides = [1, 1]} : vector<2x512xf32> to vector<2x128xf32>
    %192 = math.tanh %191 : vector<2x128xf32>
    %193 = vector.extract_strided_slice %190 {offsets = [0, 0], sizes = [2, 128], strides = [1, 1]} : vector<2x384xf32> to vector<2x128xf32>
    %194 = vector.extract_strided_slice %190 {offsets = [0, 128], sizes = [2, 128], strides = [1, 1]} : vector<2x384xf32> to vector<2x128xf32>
    %195 = vector.extract_strided_slice %190 {offsets = [0, 256], sizes = [2, 128], strides = [1, 1]} : vector<2x384xf32> to vector<2x128xf32>
    %196 = arith.mulf %194, %176 : vector<2x128xf32>
    %197 = arith.mulf %193, %192 : vector<2x128xf32>
    %198 = arith.addf %196, %197 : vector<2x128xf32>
    %199 = math.tanh %198 : vector<2x128xf32>
    %200 = arith.mulf %195, %199 : vector<2x128xf32>
    %c6_i32 = arith.constant 6 : i32
    %201 = arith.index_cast %c6_i32 : i32 to index
    %c0_79 = arith.constant 0 : index
    %c0_80 = arith.constant 0 : index
    %202 = vector.load %arg7[%201, %c0_79, %c0_80] : memref<8x2x512xf32, #tpu.memory_space<vmem>>, vector<1x2x512xf32>
    %203 = vector.shape_cast %202 : vector<1x2x512xf32> to vector<2x512xf32>
    %204 = arith.truncf %200 : vector<2x128xf32> to vector<2x128xbf16>
    %cst_81 = arith.constant dense<0.000000e+00> : vector<2x512xf32>
    %205 = tpu.matmul %204, %2, %cst_81 {dimension_numbers = #tpu.dot_dimension_numbers<[1], [0], [0], [1], [0, 0, 1, 1], [], []>} : vector<2x128xbf16>, vector<128x512xbf16>, vector<2x512xf32> -> vector<2x512xf32>
    %206 = arith.addf %203, %205 : vector<2x512xf32>
    %207 = vector.extract_strided_slice %206 {offsets = [0, 0], sizes = [2, 384], strides = [1, 1]} : vector<2x512xf32> to vector<2x384xf32>
    %208 = arith.negf %207 : vector<2x384xf32>
    %209 = math.exp %208 : vector<2x384xf32>
    %cst_82 = arith.constant 1.000000e+00 : f32
    %210 = vector.broadcast %cst_82 : f32 to vector<2x384xf32>
    %211 = arith.addf %210, %209 : vector<2x384xf32>
    %212 = arith.divf %210, %211 : vector<2x384xf32>
    %213 = vector.extract_strided_slice %206 {offsets = [0, 384], sizes = [2, 128], strides = [1, 1]} : vector<2x512xf32> to vector<2x128xf32>
    %214 = math.tanh %213 : vector<2x128xf32>
    %215 = vector.extract_strided_slice %212 {offsets = [0, 0], sizes = [2, 128], strides = [1, 1]} : vector<2x384xf32> to vector<2x128xf32>
    %216 = vector.extract_strided_slice %212 {offsets = [0, 128], sizes = [2, 128], strides = [1, 1]} : vector<2x384xf32> to vector<2x128xf32>
    %217 = vector.extract_strided_slice %212 {offsets = [0, 256], sizes = [2, 128], strides = [1, 1]} : vector<2x384xf32> to vector<2x128xf32>
    %218 = arith.mulf %216, %198 : vector<2x128xf32>
    %219 = arith.mulf %215, %214 : vector<2x128xf32>
    %220 = arith.addf %218, %219 : vector<2x128xf32>
    %221 = math.tanh %220 : vector<2x128xf32>
    %222 = arith.mulf %217, %221 : vector<2x128xf32>
    %c7_i32 = arith.constant 7 : i32
    %223 = arith.index_cast %c7_i32 : i32 to index
    %c0_83 = arith.constant 0 : index
    %c0_84 = arith.constant 0 : index
    %224 = vector.load %arg7[%223, %c0_83, %c0_84] : memref<8x2x512xf32, #tpu.memory_space<vmem>>, vector<1x2x512xf32>
    %225 = vector.shape_cast %224 : vector<1x2x512xf32> to vector<2x512xf32>
    %226 = arith.truncf %222 : vector<2x128xf32> to vector<2x128xbf16>
    %cst_85 = arith.constant dense<0.000000e+00> : vector<2x512xf32>
    %227 = tpu.matmul %226, %2, %cst_85 {dimension_numbers = #tpu.dot_dimension_numbers<[1], [0], [0], [1], [0, 0, 1, 1], [], []>} : vector<2x128xbf16>, vector<128x512xbf16>, vector<2x512xf32> -> vector<2x512xf32>
    %228 = arith.addf %225, %227 : vector<2x512xf32>
    %229 = vector.extract_strided_slice %228 {offsets = [0, 0], sizes = [2, 384], strides = [1, 1]} : vector<2x512xf32> to vector<2x384xf32>
    %230 = arith.negf %229 : vector<2x384xf32>
    %231 = math.exp %230 : vector<2x384xf32>
    %cst_86 = arith.constant 1.000000e+00 : f32
    %232 = vector.broadcast %cst_86 : f32 to vector<2x384xf32>
    %233 = arith.addf %232, %231 : vector<2x384xf32>
    %234 = arith.divf %232, %233 : vector<2x384xf32>
    %235 = vector.extract_strided_slice %228 {offsets = [0, 384], sizes = [2, 128], strides = [1, 1]} : vector<2x512xf32> to vector<2x128xf32>
    %236 = math.tanh %235 : vector<2x128xf32>
    %237 = vector.extract_strided_slice %234 {offsets = [0, 0], sizes = [2, 128], strides = [1, 1]} : vector<2x384xf32> to vector<2x128xf32>
    %238 = vector.extract_strided_slice %234 {offsets = [0, 128], sizes = [2, 128], strides = [1, 1]} : vector<2x384xf32> to vector<2x128xf32>
    %239 = vector.extract_strided_slice %234 {offsets = [0, 256], sizes = [2, 128], strides = [1, 1]} : vector<2x384xf32> to vector<2x128xf32>
    %240 = arith.mulf %238, %220 : vector<2x128xf32>
    %241 = arith.mulf %237, %236 : vector<2x128xf32>
    %242 = arith.addf %240, %241 : vector<2x128xf32>
    %243 = math.tanh %242 : vector<2x128xf32>
    %244 = arith.mulf %239, %243 : vector<2x128xf32>
    %c8_i32 = arith.constant 8 : i32
    %c0_87 = arith.constant 0 : index
    %c0_88 = arith.constant 0 : index
    %245 = vector.load %arg4[%c0_87, %c0_88] : memref<128x128xf32, #tpu.memory_space<vmem>>, vector<128x128xf32>
    %cst_89 = arith.constant dense<0.000000e+00> : vector<2x128xf32>
    %246 = tpu.matmul %244, %245, %cst_89 {dimension_numbers = #tpu.dot_dimension_numbers<[1], [0], [0], [1], [0, 0, 1, 1], [], []>} : vector<2x128xf32>, vector<128x128xf32>, vector<2x128xf32> -> vector<2x128xf32>
    %c0_90 = arith.constant 0 : index
    %c0_91 = arith.constant 0 : index
    %247 = vector.load %arg5[%c0_90, %c0_91] : memref<1x128xf32, #tpu.memory_space<vmem>>, vector<1x128xf32>
    %248 = vector.broadcast %247 : vector<1x128xf32> to vector<2x128xf32>
    %249 = arith.addf %246, %248 : vector<2x128xf32>
    %250 = tpu.iota {dimensions = array<i32: 1>} : vector<2x128xi32>
    %c67_i32 = arith.constant 67 : i32
    %251 = vector.broadcast %c67_i32 : i32 to vector<2x128xi32>
    %252 = arith.cmpi slt, %250, %251 : vector<2x128xi32>
    %cst_92 = arith.constant -1.000000e+30 : f32
    %253 = vector.broadcast %cst_92 : f32 to vector<2x128xf32>
    %254 = arith.select %252, %249, %253 : vector<2x128xi1>, vector<2x128xf32>
    %cst_93 = arith.constant dense<0xFF800000> : vector<2xf32>
    %255 = vector.multi_reduction <maximumf>, %254, %cst_93 [1] : vector<2x128xf32> to vector<2xf32>
    %256 = vector.shape_cast %255 : vector<2xf32> to vector<2x1xf32>
    %257 = vector.broadcast %256 : vector<2x1xf32> to vector<2x128xf32>
    %258 = arith.subf %254, %257 : vector<2x128xf32>
    %259 = math.exp %258 : vector<2x128xf32>
    %cst_94 = arith.constant dense<0.000000e+00> : vector<2xf32>
    %260 = vector.multi_reduction <add>, %259, %cst_94 [1] : vector<2x128xf32> to vector<2xf32>
    %261 = vector.shape_cast %260 : vector<2xf32> to vector<2x1xf32>
    %262 = tpu.reciprocal %261 : vector<2x1xf32> -> vector<2x1xf32>
    %263 = vector.broadcast %262 : vector<2x1xf32> to vector<2x128xf32>
    %264 = arith.mulf %259, %263 : vector<2x128xf32>
    %265 = vector.extract_strided_slice %249 {offsets = [0, 67], sizes = [2, 1], strides = [1, 1]} : vector<2x128xf32> to vector<2x1xf32>
    %c67_i32_95 = arith.constant 67 : i32
    %266 = vector.broadcast %c67_i32_95 : i32 to vector<2x128xi32>
    %267 = arith.cmpi eq, %250, %266 : vector<2x128xi32>
    %268 = arith.extui %267 : vector<2x128xi1> to vector<2x128xi32>
    %269 = arith.sitofp %268 : vector<2x128xi32> to vector<2x128xf32>
    %270 = vector.broadcast %265 : vector<2x1xf32> to vector<2x128xf32>
    %271 = arith.mulf %269, %270 : vector<2x128xf32>
    %272 = arith.addf %264, %271 : vector<2x128xf32>
    %c0_96 = arith.constant 0 : index
    %c0_97 = arith.constant 0 : index
    %273 = vector.load %arg6[%c0_96, %c0_97] : memref<2x128xf32, #tpu.memory_space<vmem>>, vector<2x128xf32>
    tpu.vector_store %arg6[%c0_96, %c0_97], %272 {strides = array<i32>} : memref<2x128xf32, #tpu.memory_space<vmem>>, vector<2x128xf32>,
    return
  }
}

</mosaic_0001>

<llo_original>
// kernel: ppo_actor_critic_forward.1
$region0: #{ppo_actor_critic_forward.1}
  #allocation0 [shape = 'u32[]', space=smem, size = 0x4, offset = 0x4, fixed_abs, tag = 'smem constant byte address 0x4 - core index']
  #allocation1 [shape = 'u32[144,128]{1,0:T(1,128)}', space=vmem, size = 0x12000, scoped, tag = 'internal scratch']
  #allocation2 [shape = 'f32[8,2,512]{2,1,0:T(2,128)}', space=vmem, size = 0x8000, scoped, tag = 'scratch operand']
  %s0 = inlined_call_operand.vmem [shape: f32[8,2,2], index: 0, kind: input, shape index: {}]
  %s1 = inlined_call_operand.vmem [shape: f32[2,512], index: 1, kind: input, shape index: {}]
  %s2 = inlined_call_operand.hbm [shape: bf16[128,512], index: 2, kind: input, shape index: {}]
  %s3 = inlined_call_operand.vmem [shape: f32[1,512], index: 3, kind: input, shape index: {}]
  %s4 = inlined_call_operand.hbm [shape: f32[128,128], index: 4, kind: input, shape index: {}]
  %s5 = inlined_call_operand.vmem [shape: f32[1,128], index: 5, kind: input, shape index: {}]
  %s6 = inlined_call_operand.vmem [shape: f32[2,128], index: 6, kind: output, shape index: {}]
  %s7 = sld [smem:[#allocation0]]
  $region42: #{ppo_actor_critic_forward.1} parent=0
    _
  %s9 = ssub.s32 1, %s7
  %s10 = scalar_select 0, %s9, %s7
  $region1: #{ppo_actor_critic_forward.1} parent=0
    #allocation3 [shape = 'u8[131072]{0}', space=vmem, size = 0x20000, scoped, tag = 'input window, operand 2, single buffered']
    #allocation4 [shape = 's32[1]{0}', space=sflag, size = 0x4, scoped, tag = 'scoped memory for ppo_actor_critic_forward.1']
    #allocation5 [shape = 'u8[65536]{0}', space=vmem, size = 0x10000, scoped, tag = 'input window, operand 4, single buffered']
    #allocation6 [shape = 's32[1]{0}', space=sflag, size = 0x4, scoped, tag = 'scoped memory for ppo_actor_critic_forward.1']
    %11 = vsyncpa [#allocation4], 0
    %12 = vsyncpa [#allocation6], 0
    // Predicated region
    $region2: #{ppo_actor_critic_forward.1} parent=1 // pred_check
      _
    $region3: #{ppo_actor_critic_forward.1} parent=1 // pred_check_branch
      %14 = sbr.rel (0) target = $region5
    $region4: #{ppo_actor_critic_forward.1} parent=1 // pred_region
      _
    $region5: #{ppo_actor_critic_forward.1} parent=1 // pred_fallthru
      _
    // Predicated region
    $region6: #{ppo_actor_critic_forward.1} parent=1 // pred_check
      _
    $region7: #{ppo_actor_critic_forward.1} parent=1 // pred_check_branch
      %16 = sbr.rel (0) target = $region9
    $region8: #{ppo_actor_critic_forward.1} parent=1 // pred_region
      _
    $region9: #{ppo_actor_critic_forward.1} parent=1 // pred_fallthru
      _
    // Predicated region
    $region10: #{ppo_actor_critic_forward.1} parent=1 // pred_check
      _
    $region11: #{ppo_actor_critic_forward.1} parent=1 // pred_check_branch
      %18 = sbr.rel (0) target = $region13
    $region12: #{ppo_actor_critic_forward.1} parent=1 // pred_region
      %s20 = ssub.s32 4096, 4096
      %21 = vsyncadd [#allocation4], %s20
      %s22 = sshll.u32 [#allocation3], 4
      %s23 = int_to_ptr.vmem [resolvable:$true] %s22
      %28 = dma.hbm_to_vmem [thread:$0]  %s2, 4096, %s23, [#allocation4], 256, 256, 16
    $region13: #{ppo_actor_critic_forward.1} parent=1 // pred_fallthru
      _
    // Predicated region
    $region14: #{ppo_actor_critic_forward.1} parent=1 // pred_check
      _
    $region15: #{ppo_actor_critic_forward.1} parent=1 // pred_check_branch
      %30 = sbr.rel (0) target = $region17
    $region16: #{ppo_actor_critic_forward.1} parent=1 // pred_region
      _
    $region17: #{ppo_actor_critic_forward.1} parent=1 // pred_fallthru
      _
    // Predicated region
    $region18: #{ppo_actor_critic_forward.1} parent=1 // pred_check
      _
    $region19: #{ppo_actor_critic_forward.1} parent=1 // pred_check_branch
      %32 = sbr.rel (0) target = $region21
    $region20: #{ppo_actor_critic_forward.1} parent=1 // pred_region
      %s34 = ssub.s32 2048, 2048
      %35 = vsyncadd [#allocation6], %s34
      %s36 = sshll.u32 [#allocation5], 4
      %s37 = int_to_ptr.vmem [resolvable:$true] %s36
      %42 = dma.hbm_to_vmem [thread:$0]  %s4, 2048, %s37, [#allocation6], 128, 128, 8
    $region21: #{ppo_actor_critic_forward.1} parent=1 // pred_fallthru
      _
    // Predicated region
    $region22: #{ppo_actor_critic_forward.1} parent=1 // pred_check
      _
    $region23: #{ppo_actor_critic_forward.1} parent=1 // pred_check_branch
      %44 = sbr.rel (0) target = $region25
    $region24: #{ppo_actor_critic_forward.1} parent=1 // pred_region
      _
    $region25: #{ppo_actor_critic_forward.1} parent=1 // pred_fallthru
      _
    // Predicated region
    $region26: #{ppo_actor_critic_forward.1} parent=1 // pred_check
      _
    $region27: #{ppo_actor_critic_forward.1} parent=1 // pred_check_branch
      %46 = sbr.rel (0) target = $region29
    $region28: #{ppo_actor_critic_forward.1} parent=1 // pred_region
      %47 = dma.done [#allocation4], 4096
    $region29: #{ppo_actor_critic_forward.1} parent=1 // pred_fallthru
      _
    // Predicated region
    $region30: #{ppo_actor_critic_forward.1} parent=1 // pred_check
      _
    $region31: #{ppo_actor_critic_forward.1} parent=1 // pred_check_branch
      %49 = sbr.rel (0) target = $region33
    $region32: #{ppo_actor_critic_forward.1} parent=1 // pred_region
      %50 = dma.done [#allocation6], 2048
    $region33: #{ppo_actor_critic_forward.1} parent=1 // pred_fallthru
      _
    %v52 = vld [vmem:[%s1] sm:$0xff]
    %v53 = vld [vmem:[%s3] sm:$0xf]
    %v54 = vld [vmem:[#allocation3] sm:$0xff]
    %v55 = vld [vmem:[#allocation3 + $0x8] sm:$0xff]
    %v56 = vld [vmem:[#allocation3 + $0x10] sm:$0xff]
    %v57 = vld [vmem:[#allocation3 + $0x18] sm:$0xff]
    %v58 = vld [vmem:[#allocation3 + $0x20] sm:$0xff]
    %v59 = vld [vmem:[#allocation3 + $0x28] sm:$0xff]
    %v60 = vld [vmem:[#allocation3 + $0x30] sm:$0xff]
    %v61 = vld [vmem:[#allocation3 + $0x38] sm:$0xff]
    %v62 = vld [vmem:[#allocation3 + $0x40] sm:$0xff]
    %v63 = vld [vmem:[#allocation3 + $0x48] sm:$0xff]
    %v64 = vld [vmem:[#allocation3 + $0x50] sm:$0xff]
    %v65 = vld [vmem:[#allocation3 + $0x58] sm:$0xff]
    %v66 = vld [vmem:[#allocation3 + $0x60] sm:$0xff]
    %v67 = vld [vmem:[#allocation3 + $0x68] sm:$0xff]
    %v68 = vld [vmem:[#allocation3 + $0x70] sm:$0xff]
    %v69 = vld [vmem:[#allocation3 + $0x78] sm:$0xff]
    %v70 = vld [vmem:[#allocation3 + $0x80] sm:$0xff]
    %v71 = vld [vmem:[#allocation3 + $0x88] sm:$0xff]
    %v72 = vld [vmem:[#allocation3 + $0x90] sm:$0xff]
    %v73 = vld [vmem:[#allocation3 + $0x98] sm:$0xff]
    %v74 = vld [vmem:[#allocation3 + $0xa0] sm:$0xff]
    %v75 = vld [vmem:[#allocation3 + $0xa8] sm:$0xff]
    %v76 = vld [vmem:[#allocation3 + $0xb0] sm:$0xff]
    %v77 = vld [vmem:[#allocation3 + $0xb8] sm:$0xff]
    %v78 = vld [vmem:[#allocation3 + $0xc0] sm:$0xff]
    %v79 = vld [vmem:[#allocation3 + $0xc8] sm:$0xff]
    %v80 = vld [vmem:[#allocation3 + $0xd0] sm:$0xff]
    %v81 = vld [vmem:[#allocation3 + $0xd8] sm:$0xff]
    %v82 = vld [vmem:[#allocation3 + $0xe0] sm:$0xff]
    %v83 = vld [vmem:[#allocation3 + $0xe8] sm:$0xff]
    %v84 = vld [vmem:[#allocation3 + $0xf0] sm:$0xff]
    %v85 = vld [vmem:[#allocation3 + $0xf8] sm:$0xff]
    %v86 = vld [vmem:[%s0] sm:$0x3]
    %v88 = vlaneseq
    %v89 = vshrl.u32 %v88, 7
    %v90 = vsub.s32 0, %v89
    %v91 = vrot.slane %v53, %v90
    %v92 = vlaneseq
    %v93 = vshrl.u32 %v92, 7
    %v94 = vsub.s32 1, %v93
    %v95 = vrot.slane %v53, %v94
    %v96 = vlaneseq
    %v97 = vshrl.u32 %v96, 7
    %v98 = vsub.s32 2, %v97
    %v99 = vrot.slane %v53, %v98
    %v100 = vlaneseq
    %v101 = vshrl.u32 %v100, 7
    %v102 = vsub.s32 3, %v101
    %v103 = vrot.slane %v53, %v102
    %v109 = vcombine.high %v52, %v52
    %v111 = vunpack.c.l.s4 1983009808
    %v112 = vunpack.c.0.s8 %v111
    %v113 = vlaneseq
    %v114 = vshrl.u32 %v113, 7
    %v115 = vsub.s32 %v112, %v114
    %v116 = vrot.slane %v52, %v115
    %v118 = vunpack.c.l.s4 1983009808
    %v119 = vunpack.c.0.s8 %v118
    %v120 = vlaneseq
    %v121 = vshrl.u32 %v120, 7
    %v122 = vsub.s32 %v119, %v121
    %v123 = vrot.slane %v109, %v122
    %v124 = vcombine.high %v116, %v116
    %v125 = vcombine.high %v123, %v123
    %vm126 = vcmask 15360
    %v128 = vsel %vm126, %v86, 0
    %vm130 = vcmask 1041408
    %v131 = vsel %vm130, %v116, 0
    %v133 = vsel %vm130, %v124, 0
    %v135 = vsel %vm130, %v123, 0
    %v137 = vsel %vm130, %v125, 0
    %139 = vmatprep.subr.mxu0 %v133
    %140 = vmatpush1.msra.mxu0 %v131
    %141 = vmatprep.subr.mxu0 0.0
    %142 = vmatpush1.msra.mxu0 0.0
    %143 = vmatprep.subr.mxu0 0.0
    %144 = vmatpush1.msra.mxu0 0.0
    %145 = vmatprep.subr.mxu0 0.0
    %146 = vmatpush1.msra.mxu0 0.0
    %147 = vmatprep.subr.mxu0 0.0
    %148 = vmatpush1.msra.mxu0 0.0
    %149 = vmatprep.subr.mxu0 0.0
    %150 = vmatpush1.msra.mxu0 0.0
    %151 = vmatprep.subr.mxu0 0.0
    %152 = vmatpush1.msra.mxu0 0.0
    %153 = vmatprep.subr.mxu0 0.0
    %154 = vmatpush1.msra.mxu0 0.0
    %155 = vmatprep.subr.mxu0 0.0
    %156 = vmatpush1.msra.mxu0 0.0
    %157 = vmatprep.subr.mxu0 0.0
    %158 = vmatpush1.msra.mxu0 0.0
    %159 = vmatprep.subr.mxu0 0.0
    %160 = vmatpush1.msra.mxu0 0.0
    %161 = vmatprep.subr.mxu0 0.0
    %162 = vmatpush1.msra.mxu0 0.0
    %163 = vmatprep.subr.mxu0 0.0
    %164 = vmatpush1.msra.mxu0 0.0
    %165 = vmatprep.subr.mxu0 0.0
    %166 = vmatpush1.msra.mxu0 0.0
    %167 = vmatprep.subr.mxu0 0.0
    %168 = vmatpush1.msra.mxu0 0.0
    %169 = vmatprep.subr.mxu0 0.0
    %170 = vmatpush1.msra.mxu0 0.0
    %171 = vmatprep.subr.mxu0 0.0
    %172 = vmatpush1.msra.mxu0 0.0
    %173 = vmatprep.subr.mxu0 0.0
    %174 = vmatpush1.msra.mxu0 0.0
    %175 = vmatprep.subr.mxu0 0.0
    %176 = vmatpush1.msra.mxu0 0.0
    %177 = vmatprep.subr.mxu0 0.0
    %178 = vmatpush1.msra.mxu0 0.0
    %179 = vmatprep.subr.mxu0 0.0
    %180 = vmatpush1.msra.mxu0 0.0
    %181 = vmatprep.subr.mxu0 0.0
    %182 = vmatpush1.msra.mxu0 0.0
    %183 = vmatprep.subr.mxu0 0.0
    %184 = vmatpush1.msra.mxu0 0.0
    %185 = vmatprep.subr.mxu0 0.0
    %186 = vmatpush1.msra.mxu0 0.0
    %187 = vmatprep.subr.mxu0 0.0
    %188 = vmatpush1.msra.mxu0 0.0
    %189 = vmatprep.subr.mxu0 0.0
    %190 = vmatpush1.msra.mxu0 0.0
    %191 = vmatprep.subr.mxu0 0.0
    %192 = vmatpush1.msra.mxu0 0.0
    %193 = vmatprep.subr.mxu0 0.0
    %194 = vmatpush1.msra.mxu0 0.0
    %195 = vmatprep.subr.mxu0 0.0
    %196 = vmatpush1.msra.mxu0 0.0
    %197 = vmatprep.subr.mxu0 0.0
    %198 = vmatpush1.msra.mxu0 0.0
    %199 = vmatprep.subr.mxu0 0.0
    %200 = vmatpush1.msra.mxu0 0.0
    %201 = vmatprep.subr.mxu0 0.0
    %202 = vmatpush1.msra.mxu0 0.0
    %203 = vmatprep.mubr.f32.mxu0 0.0
    %204 = vmatmul.mubr.f32.gmra.mrb[0].mxu0 %v128
    %v205 = vpop.f32.mrb[0].mxu0
    %v206 = vadd.f32 %v91, %v205
    %v207 = vpop.f32.mrb[0].mxu0
    %v208 = vadd.f32 %v95, %v207
    %209 = vdwg.mxu0
    %210 = vmatprep.subr.mxu0 %v137
    %211 = vmatpush1.msra.mxu0 %v135
    %212 = vmatprep.subr.mxu0 0.0
    %213 = vmatpush1.msra.mxu0 0.0
    %214 = vmatprep.subr.mxu0 0.0
    %215 = vmatpush1.msra.mxu0 0.0
    %216 = vmatprep.subr.mxu0 0.0
    %217 = vmatpush1.msra.mxu0 0.0
    %218 = vmatprep.subr.mxu0 0.0
    %219 = vmatpush1.msra.mxu0 0.0
    %220 = vmatprep.subr.mxu0 0.0
    %221 = vmatpush1.msra.mxu0 0.0
    %222 = vmatprep.subr.mxu0 0.0
    %223 = vmatpush1.msra.mxu0 0.0
    %224 = vmatprep.subr.mxu0 0.0
    %225 = vmatpush1.msra.mxu0 0.0
    %226 = vmatprep.subr.mxu0 0.0
    %227 = vmatpush1.msra.mxu0 0.0
    %228 = vmatprep.subr.mxu0 0.0
    %229 = vmatpush1.msra.mxu0 0.0
    %230 = vmatprep.subr.mxu0 0.0
    %231 = vmatpush1.msra.mxu0 0.0
    %232 = vmatprep.subr.mxu0 0.0
    %233 = vmatpush1.msra.mxu0 0.0
    %234 = vmatprep.subr.mxu0 0.0
    %235 = vmatpush1.msra.mxu0 0.0
    %236 = vmatprep.subr.mxu0 0.0
    %237 = vmatpush1.msra.mxu0 0.0
    %238 = vmatprep.subr.mxu0 0.0
    %239 = vmatpush1.msra.mxu0 0.0
    %240 = vmatprep.subr.mxu0 0.0
    %241 = vmatpush1.msra.mxu0 0.0
    %242 = vmatprep.subr.mxu0 0.0
    %243 = vmatpush1.msra.mxu0 0.0
    %244 = vmatprep.subr.mxu0 0.0
    %245 = vmatpush1.msra.mxu0 0.0
    %246 = vmatprep.subr.mxu0 0.0
    %247 = vmatpush1.msra.mxu0 0.0
    %248 = vmatprep.subr.mxu0 0.0
    %249 = vmatpush1.msra.mxu0 0.0
    %250 = vmatprep.subr.mxu0 0.0
    %251 = vmatpush1.msra.mxu0 0.0
    %252 = vmatprep.subr.mxu0 0.0
    %253 = vmatpush1.msra.mxu0 0.0
    %254 = vmatprep.subr.mxu0 0.0
    %255 = vmatpush1.msra.mxu0 0.0
    %256 = vmatprep.subr.mxu0 0.0
    %257 = vmatpush1.msra.mxu0 0.0
    %258 = vmatprep.subr.mxu0 0.0
    %259 = vmatpush1.msra.mxu0 0.0
    %260 = vmatprep.subr.mxu0 0.0
    %261 = vmatpush1.msra.mxu0 0.0
    %262 = vmatprep.subr.mxu0 0.0
    %263 = vmatpush1.msra.mxu0 0.0
    %264 = vmatprep.subr.mxu0 0.0
    %265 = vmatpush1.msra.mxu0 0.0
    %266 = vmatprep.subr.mxu0 0.0
    %267 = vmatpush1.msra.mxu0 0.0
    %268 = vmatprep.subr.mxu0 0.0
    %269 = vmatpush1.msra.mxu0 0.0
    %270 = vmatprep.subr.mxu0 0.0
    %271 = vmatpush1.msra.mxu0 0.0
    %272 = vmatprep.subr.mxu0 0.0
    %273 = vmatpush1.msra.mxu0 0.0
    %274 = vmatprep.mubr.f32.mxu0 0.0
    %275 = vmatmul.mubr.f32.gmra.mrb[0].mxu0 %v128
    %v276 = vpop.f32.mrb[0].mxu0
    %v277 = vadd.f32 %v99, %v276
    %v278 = vpop.f32.mrb[0].mxu0
    %v279 = vadd.f32 %v103, %v278
    %280 = vdwg.mxu0
    %v285 = vcombine.low %v206, %v208
    %v286 = vcombine.low %v277, %v279
    %v288 = vunpack.c.l.s4 1983009808
    %v289 = vunpack.c.0.s8 %v288
    %v290 = vlaneseq
    %v291 = vshrl.u32 %v290, 7
    %v292 = vsub.s32 %v289, %v291
    %v293 = vrot.slane %v285, %v292
    %v295 = vunpack.c.l.s4 1983009808
    %v296 = vunpack.c.0.s8 %v295
    %v297 = vlaneseq
    %v298 = vshrl.u32 %v297, 7
    %v299 = vsub.s32 %v296, %v298
    %v300 = vrot.slane %v286, %v299
    %v301 = vcombine.low %v293, %v300
    %303 = vst [vmem:[#allocation2] sm:$0xff] %v301
    %s304 = scalar_lea.vmem %s0, 2
    %v305 = vld [vmem:[%s304] sm:$0x3]
    %v307 = vsel %vm126, %v305, 0
    %309 = vmatprep.subr.mxu0 %v133
    %310 = vmatpush1.msra.mxu0 %v131
    %311 = vmatprep.subr.mxu0 0.0
    %312 = vmatpush1.msra.mxu0 0.0
    %313 = vmatprep.subr.mxu0 0.0
    %314 = vmatpush1.msra.mxu0 0.0
    %315 = vmatprep.subr.mxu0 0.0
    %316 = vmatpush1.msra.mxu0 0.0
    %317 = vmatprep.subr.mxu0 0.0
    %318 = vmatpush1.msra.mxu0 0.0
    %319 = vmatprep.subr.mxu0 0.0
    %320 = vmatpush1.msra.mxu0 0.0
    %321 = vmatprep.subr.mxu0 0.0
    %322 = vmatpush1.msra.mxu0 0.0
    %323 = vmatprep.subr.mxu0 0.0
    %324 = vmatpush1.msra.mxu0 0.0
    %325 = vmatprep.subr.mxu0 0.0
    %326 = vmatpush1.msra.mxu0 0.0
    %327 = vmatprep.subr.mxu0 0.0
    %328 = vmatpush1.msra.mxu0 0.0
    %329 = vmatprep.subr.mxu0 0.0
    %330 = vmatpush1.msra.mxu0 0.0
    %331 = vmatprep.subr.mxu0 0.0
    %332 = vmatpush1.msra.mxu0 0.0
    %333 = vmatprep.subr.mxu0 0.0
    %334 = vmatpush1.msra.mxu0 0.0
    %335 = vmatprep.subr.mxu0 0.0
    %336 = vmatpush1.msra.mxu0 0.0
    %337 = vmatprep.subr.mxu0 0.0
    %338 = vmatpush1.msra.mxu0 0.0
    %339 = vmatprep.subr.mxu0 0.0
    %340 = vmatpush1.msra.mxu0 0.0
    %341 = vmatprep.subr.mxu0 0.0
    %342 = vmatpush1.msra.mxu0 0.0
    %343 = vmatprep.subr.mxu0 0.0
    %344 = vmatpush1.msra.mxu0 0.0
    %345 = vmatprep.subr.mxu0 0.0
    %346 = vmatpush1.msra.mxu0 0.0
    %347 = vmatprep.subr.mxu0 0.0
    %348 = vmatpush1.msra.mxu0 0.0
    %349 = vmatprep.subr.mxu0 0.0
    %350 = vmatpush1.msra.mxu0 0.0
    %351 = vmatprep.subr.mxu0 0.0
    %352 = vmatpush1.msra.mxu0 0.0
    %353 = vmatprep.subr.mxu0 0.0
    %354 = vmatpush1.msra.mxu0 0.0
    %355 = vmatprep.subr.mxu0 0.0
    %356 = vmatpush1.msra.mxu0 0.0
    %357 = vmatprep.subr.mxu0 0.0
    %358 = vmatpush1.msra.mxu0 0.0
    %359 = vmatprep.subr.mxu0 0.0
    %360 = vmatpush1.msra.mxu0 0.0
    %361 = vmatprep.subr.mxu0 0.0
    %362 = vmatpush1.msra.mxu0 0.0
    %363 = vmatprep.subr.mxu0 0.0
    %364 = vmatpush1.msra.mxu0 0.0
    %365 = vmatprep.subr.mxu0 0.0
    %366 = vmatpush1.msra.mxu0 0.0
    %367 = vmatprep.subr.mxu0 0.0
    %368 = vmatpush1.msra.mxu0 0.0
    %369 = vmatprep.subr.mxu0 0.0
    %370 = vmatpush1.msra.mxu0 0.0
    %371 = vmatprep.subr.mxu0 0.0
    %372 = vmatpush1.msra.mxu0 0.0
    %373 = vmatprep.mubr.f32.mxu0 0.0
    %374 = vmatmul.mubr.f32.gmra.mrb[0].mxu0 %v307
    %v375 = vpop.f32.mrb[0].mxu0
    %v376 = vadd.f32 %v91, %v375
    %v377 = vpop.f32.mrb[0].mxu0
    %v378 = vadd.f32 %v95, %v377
    %379 = vdwg.mxu0
    %380 = vmatprep.subr.mxu0 %v137
    %381 = vmatpush1.msra.mxu0 %v135
    %382 = vmatprep.subr.mxu0 0.0
    %383 = vmatpush1.msra.mxu0 0.0
    %384 = vmatprep.subr.mxu0 0.0
    %385 = vmatpush1.msra.mxu0 0.0
    %386 = vmatprep.subr.mxu0 0.0
    %387 = vmatpush1.msra.mxu0 0.0
    %388 = vmatprep.subr.mxu0 0.0
    %389 = vmatpush1.msra.mxu0 0.0
    %390 = vmatprep.subr.mxu0 0.0
    %391 = vmatpush1.msra.mxu0 0.0
    %392 = vmatprep.subr.mxu0 0.0
    %393 = vmatpush1.msra.mxu0 0.0
    %394 = vmatprep.subr.mxu0 0.0
    %395 = vmatpush1.msra.mxu0 0.0
    %396 = vmatprep.subr.mxu0 0.0
    %397 = vmatpush1.msra.mxu0 0.0
    %398 = vmatprep.subr.mxu0 0.0
    %399 = vmatpush1.msra.mxu0 0.0
    %400 = vmatprep.subr.mxu0 0.0
    %401 = vmatpush1.msra.mxu0 0.0
    %402 = vmatprep.subr.mxu0 0.0
    %403 = vmatpush1.msra.mxu0 0.0
    %404 = vmatprep.subr.mxu0 0.0
    %405 = vmatpush1.msra.mxu0 0.0
    %406 = vmatprep.subr.mxu0 0.0
    %407 = vmatpush1.msra.mxu0 0.0
    %408 = vmatprep.subr.mxu0 0.0
    %409 = vmatpush1.msra.mxu0 0.0
    %410 = vmatprep.subr.mxu0 0.0
    %411 = vmatpush1.msra.mxu0 0.0
    %412 = vmatprep.subr.mxu0 0.0
    %413 = vmatpush1.msra.mxu0 0.0
    %414 = vmatprep.subr.mxu0 0.0
    %415 = vmatpush1.msra.mxu0 0.0
    %416 = vmatprep.subr.mxu0 0.0
    %417 = vmatpush1.msra.mxu0 0.0
    %418 = vmatprep.subr.mxu0 0.0
    %419 = vmatpush1.msra.mxu0 0.0
    %420 = vmatprep.subr.mxu0 0.0
    %421 = vmatpush1.msra.mxu0 0.0
    %422 = vmatprep.subr.mxu0 0.0
    %423 = vmatpush1.msra.mxu0 0.0
    %424 = vmatprep.subr.mxu0 0.0
    %425 = vmatpush1.msra.mxu0 0.0
    %426 = vmatprep.subr.mxu0 0.0
    %427 = vmatpush1.msra.mxu0 0.0
    %428 = vmatprep.subr.mxu0 0.0
    %429 = vmatpush1.msra.mxu0 0.0
    %430 = vmatprep.subr.mxu0 0.0
    %431 = vmatpush1.msra.mxu0 0.0
    %432 = vmatprep.subr.mxu0 0.0
    %433 = vmatpush1.msra.mxu0 0.0
    %434 = vmatprep.subr.mxu0 0.0
    %435 = vmatpush1.msra.mxu0 0.0
    %436 = vmatprep.subr.mxu0 0.0
    %437 = vmatpush1.msra.mxu0 0.0
    %438 = vmatprep.subr.mxu0 0.0
    %439 = vmatpush1.msra.mxu0 0.0
    %440 = vmatprep.subr.mxu0 0.0
    %441 = vmatpush1.msra.mxu0 0.0
    %442 = vmatprep.subr.mxu0 0.0
    %443 = vmatpush1.msra.mxu0 0.0
    %444 = vmatprep.mubr.f32.mxu0 0.0
    %445 = vmatmul.mubr.f32.gmra.mrb[0].mxu0 %v307
    %v446 = vpop.f32.mrb[0].mxu0
    %v447 = vadd.f32 %v99, %v446
    %v448 = vpop.f32.mrb[0].mxu0
    %v449 = vadd.f32 %v103, %v448
    %450 = vdwg.mxu0
    %v455 = vcombine.low %v376, %v378
    %v456 = vcombine.low %v447, %v449
    %v458 = vunpack.c.l.s4 1983009808
    %v459 = vunpack.c.0.s8 %v458
    %v460 = vlaneseq
    %v461 = vshrl.u32 %v460, 7
    %v462 = vsub.s32 %v459, %v461
    %v463 = vrot.slane %v455, %v462
    %v465 = vunpack.c.l.s4 1983009808
    %v466 = vunpack.c.0.s8 %v465
    %v467 = vlaneseq
    %v468 = vshrl.u32 %v467, 7
    %v469 = vsub.s32 %v466, %v468
    %v470 = vrot.slane %v456, %v469
    %v471 = vcombine.low %v463, %v470
    %s473 = scalar_lea.vmem [#allocation2], 8
    %474 = vst [vmem:[%s473] sm:$0xff] %v471
    %s475 = scalar_lea.vmem %s0, 4
    %v476 = vld [vmem:[%s475] sm:$0x3]
    %v478 = vsel %vm126, %v476, 0
    %480 = vmatprep.subr.mxu0 %v133
    %481 = vmatpush1.msra.mxu0 %v131
    %482 = vmatprep.subr.mxu0 0.0
    %483 = vmatpush1.msra.mxu0 0.0
    %484 = vmatprep.subr.mxu0 0.0
    %485 = vmatpush1.msra.mxu0 0.0
    %486 = vmatprep.subr.mxu0 0.0
    %487 = vmatpush1.msra.mxu0 0.0
    %488 = vmatprep.subr.mxu0 0.0
    %489 = vmatpush1.msra.mxu0 0.0
    %490 = vmatprep.subr.mxu0 0.0
    %491 = vmatpush1.msra.mxu0 0.0
    %492 = vmatprep.subr.mxu0 0.0
    %493 = vmatpush1.msra.mxu0 0.0
    %494 = vmatprep.subr.mxu0 0.0
    %495 = vmatpush1.msra.mxu0 0.0
    %496 = vmatprep.subr.mxu0 0.0
    %497 = vmatpush1.msra.mxu0 0.0
    %498 = vmatprep.subr.mxu0 0.0
    %499 = vmatpush1.msra.mxu0 0.0
    %500 = vmatprep.subr.mxu0 0.0
    %501 = vmatpush1.msra.mxu0 0.0
    %502 = vmatprep.subr.mxu0 0.0
    %503 = vmatpush1.msra.mxu0 0.0
    %504 = vmatprep.subr.mxu0 0.0
    %505 = vmatpush1.msra.mxu0 0.0
    %506 = vmatprep.subr.mxu0 0.0
    %507 = vmatpush1.msra.mxu0 0.0
    %508 = vmatprep.subr.mxu0 0.0
    %509 = vmatpush1.msra.mxu0 0.0
    %510 = vmatprep.subr.mxu0 0.0
    %511 = vmatpush1.msra.mxu0 0.0
    %512 = vmatprep.subr.mxu0 0.0
    %513 = vmatpush1.msra.mxu0 0.0
    %514 = vmatprep.subr.mxu0 0.0
    %515 = vmatpush1.msra.mxu0 0.0
    %516 = vmatprep.subr.mxu0 0.0
    %517 = vmatpush1.msra.mxu0 0.0
    %518 = vmatprep.subr.mxu0 0.0
    %519 = vmatpush1.msra.mxu0 0.0
    %520 = vmatprep.subr.mxu0 0.0
    %521 = vmatpush1.msra.mxu0 0.0
    %522 = vmatprep.subr.mxu0 0.0
    %523 = vmatpush1.msra.mxu0 0.0
    %524 = vmatprep.subr.mxu0 0.0
    %525 = vmatpush1.msra.mxu0 0.0
    %526 = vmatprep.subr.mxu0 0.0
    %527 = vmatpush1.msra.mxu0 0.0
    %528 = vmatprep.subr.mxu0 0.0
    %529 = vmatpush1.msra.mxu0 0.0
    %530 = vmatprep.subr.mxu0 0.0
    %531 = vmatpush1.msra.mxu0 0.0
    %532 = vmatprep.subr.mxu0 0.0
    %533 = vmatpush1.msra.mxu0 0.0
    %534 = vmatprep.subr.mxu0 0.0
    %535 = vmatpush1.msra.mxu0 0.0
    %536 = vmatprep.subr.mxu0 0.0
    %537 = vmatpush1.msra.mxu0 0.0
    %538 = vmatprep.subr.mxu0 0.0
    %539 = vmatpush1.msra.mxu0 0.0
    %540 = vmatprep.subr.mxu0 0.0
    %541 = vmatpush1.msra.mxu0 0.0
    %542 = vmatprep.subr.mxu0 0.0
    %543 = vmatpush1.msra.mxu0 0.0
    %544 = vmatprep.mubr.f32.mxu0 0.0
    %545 = vmatmul.mubr.f32.gmra.mrb[0].mxu0 %v478
    %v546 = vpop.f32.mrb[0].mxu0
    %v547 = vadd.f32 %v91, %v546
    %v548 = vpop.f32.mrb[0].mxu0
    %v549 = vadd.f32 %v95, %v548
    %550 = vdwg.mxu0
    %551 = vmatprep.subr.mxu0 %v137
    %552 = vmatpush1.msra.mxu0 %v135
    %553 = vmatprep.subr.mxu0 0.0
    %554 = vmatpush1.msra.mxu0 0.0
    %555 = vmatprep.subr.mxu0 0.0
    %556 = vmatpush1.msra.mxu0 0.0
    %557 = vmatprep.subr.mxu0 0.0
    %558 = vmatpush1.msra.mxu0 0.0
    %559 = vmatprep.subr.mxu0 0.0
    %560 = vmatpush1.msra.mxu0 0.0
    %561 = vmatprep.subr.mxu0 0.0
    %562 = vmatpush1.msra.mxu0 0.0
    %563 = vmatprep.subr.mxu0 0.0
    %564 = vmatpush1.msra.mxu0 0.0
    %565 = vmatprep.subr.mxu0 0.0
    %566 = vmatpush1.msra.mxu0 0.0
    %567 = vmatprep.subr.mxu0 0.0
    %568 = vmatpush1.msra.mxu0 0.0
    %569 = vmatprep.subr.mxu0 0.0
    %570 = vmatpush1.msra.mxu0 0.0
    %571 = vmatprep.subr.mxu0 0.0
    %572 = vmatpush1.msra.mxu0 0.0
    %573 = vmatprep.subr.mxu0 0.0
    %574 = vmatpush1.msra.mxu0 0.0
    %575 = vmatprep.subr.mxu0 0.0
    %576 = vmatpush1.msra.mxu0 0.0
    %577 = vmatprep.subr.mxu0 0.0
    %578 = vmatpush1.msra.mxu0 0.0
    %579 = vmatprep.subr.mxu0 0.0
    %580 = vmatpush1.msra.mxu0 0.0
    %581 = vmatprep.subr.mxu0 0.0
    %582 = vmatpush1.msra.mxu0 0.0
    %583 = vmatprep.subr.mxu0 0.0
    %584 = vmatpush1.msra.mxu0 0.0
    %585 = vmatprep.subr.mxu0 0.0
    %586 = vmatpush1.msra.mxu0 0.0
    %587 = vmatprep.subr.mxu0 0.0
    %588 = vmatpush1.msra.mxu0 0.0
    %589 = vmatprep.subr.mxu0 0.0
    %590 = vmatpush1.msra.mxu0 0.0
    %591 = vmatprep.subr.mxu0 0.0
    %592 = vmatpush1.msra.mxu0 0.0
    %593 = vmatprep.subr.mxu0 0.0
    %594 = vmatpush1.msra.mxu0 0.0
    %595 = vmatprep.subr.mxu0 0.0
    %596 = vmatpush1.msra.mxu0 0.0
    %597 = vmatprep.subr.mxu0 0.0
    %598 = vmatpush1.msra.mxu0 0.0
    %599 = vmatprep.subr.mxu0 0.0
    %600 = vmatpush1.msra.mxu0 0.0
    %601 = vmatprep.subr.mxu0 0.0
    %602 = vmatpush1.msra.mxu0 0.0
    %603 = vmatprep.subr.mxu0 0.0
    %604 = vmatpush1.msra.mxu0 0.0
    %605 = vmatprep.subr.mxu0 0.0
    %606 = vmatpush1.msra.mxu0 0.0
    %607 = vmatprep.subr.mxu0 0.0
    %608 = vmatpush1.msra.mxu0 0.0
    %609 = vmatprep.subr.mxu0 0.0
    %610 = vmatpush1.msra.mxu0 0.0
    %611 = vmatprep.subr.mxu0 0.0
    %612 = vmatpush1.msra.mxu0 0.0
    %613 = vmatprep.subr.mxu0 0.0
    %614 = vmatpush1.msra.mxu0 0.0
    %615 = vmatprep.mubr.f32.mxu0 0.0
    %616 = vmatmul.mubr.f32.gmra.mrb[0].mxu0 %v478
    %v617 = vpop.f32.mrb[0].mxu0
    %v618 = vadd.f32 %v99, %v617
    %v619 = vpop.f32.mrb[0].mxu0
    %v620 = vadd.f32 %v103, %v619
    %621 = vdwg.mxu0
    %v626 = vcombine.low %v547, %v549
    %v627 = vcombine.low %v618, %v620
    %v629 = vunpack.c.l.s4 1983009808
    %v630 = vunpack.c.0.s8 %v629
    %v631 = vlaneseq
    %v632 = vshrl.u32 %v631, 7
    %v633 = vsub.s32 %v630, %v632
    %v634 = vrot.slane %v626, %v633
    %v636 = vunpack.c.l.s4 1983009808
    %v637 = vunpack.c.0.s8 %v636
    %v638 = vlaneseq
    %v639 = vshrl.u32 %v638, 7
    %v640 = vsub.s32 %v637, %v639
    %v641 = vrot.slane %v627, %v640
    %v642 = vcombine.low %v634, %v641
    %s644 = scalar_lea.vmem [#allocation2], 16
    %645 = vst [vmem:[%s644] sm:$0xff] %v642
    %s646 = scalar_lea.vmem %s0, 6
    %v647 = vld [vmem:[%s646] sm:$0x3]
    %v649 = vsel %vm126, %v647, 0
    %651 = vmatprep.subr.mxu0 %v133
    %652 = vmatpush1.msra.mxu0 %v131
    %653 = vmatprep.subr.mxu0 0.0
    %654 = vmatpush1.msra.mxu0 0.0
    %655 = vmatprep.subr.mxu0 0.0
    %656 = vmatpush1.msra.mxu0 0.0
    %657 = vmatprep.subr.mxu0 0.0
    %658 = vmatpush1.msra.mxu0 0.0
    %659 = vmatprep.subr.mxu0 0.0
    %660 = vmatpush1.msra.mxu0 0.0
    %661 = vmatprep.subr.mxu0 0.0
    %662 = vmatpush1.msra.mxu0 0.0
    %663 = vmatprep.subr.mxu0 0.0
    %664 = vmatpush1.msra.mxu0 0.0
    %665 = vmatprep.subr.mxu0 0.0
    %666 = vmatpush1.msra.mxu0 0.0
    %667 = vmatprep.subr.mxu0 0.0
    %668 = vmatpush1.msra.mxu0 0.0
    %669 = vmatprep.subr.mxu0 0.0
    %670 = vmatpush1.msra.mxu0 0.0
    %671 = vmatprep.subr.mxu0 0.0
    %672 = vmatpush1.msra.mxu0 0.0
    %673 = vmatprep.subr.mxu0 0.0
    %674 = vmatpush1.msra.mxu0 0.0
    %675 = vmatprep.subr.mxu0 0.0
    %676 = vmatpush1.msra.mxu0 0.0
    %677 = vmatprep.subr.mxu0 0.0
    %678 = vmatpush1.msra.mxu0 0.0
    %679 = vmatprep.subr.mxu0 0.0
    %680 = vmatpush1.msra.mxu0 0.0
    %681 = vmatprep.subr.mxu0 0.0
    %682 = vmatpush1.msra.mxu0 0.0
    %683 = vmatprep.subr.mxu0 0.0
    %684 = vmatpush1.msra.mxu0 0.0
    %685 = vmatprep.subr.mxu0 0.0
    %686 = vmatpush1.msra.mxu0 0.0
    %687 = vmatprep.subr.mxu0 0.0
    %688 = vmatpush1.msra.mxu0 0.0
    %689 = vmatprep.subr.mxu0 0.0
    %690 = vmatpush1.msra.mxu0 0.0
    %691 = vmatprep.subr.mxu0 0.0
    %692 = vmatpush1.msra.mxu0 0.0
    %693 = vmatprep.subr.mxu0 0.0
    %694 = vmatpush1.msra.mxu0 0.0
    %695 = vmatprep.subr.mxu0 0.0
    %696 = vmatpush1.msra.mxu0 0.0
    %697 = vmatprep.subr.mxu0 0.0
    %698 = vmatpush1.msra.mxu0 0.0
    %699 = vmatprep.subr.mxu0 0.0
    %700 = vmatpush1.msra.mxu0 0.0
    %701 = vmatprep.subr.mxu0 0.0
    %702 = vmatpush1.msra.mxu0 0.0
    %703 = vmatprep.subr.mxu0 0.0
    %704 = vmatpush1.msra.mxu0 0.0
    %705 = vmatprep.subr.mxu0 0.0
    %706 = vmatpush1.msra.mxu0 0.0
    %707 = vmatprep.subr.mxu0 0.0
    %708 = vmatpush1.msra.mxu0 0.0
    %709 = vmatprep.subr.mxu0 0.0
    %710 = vmatpush1.msra.mxu0 0.0
    %711 = vmatprep.subr.mxu0 0.0
    %712 = vmatpush1.msra.mxu0 0.0
    %713 = vmatprep.subr.mxu0 0.0
    %714 = vmatpush1.msra.mxu0 0.0
    %715 = vmatprep.mubr.f32.mxu0 0.0
    %716 = vmatmul.mubr.f32.gmra.mrb[0].mxu0 %v649
    %v717 = vpop.f32.mrb[0].mxu0
    %v718 = vadd.f32 %v91, %v717
    %v719 = vpop.f32.mrb[0].mxu0
    %v720 = vadd.f32 %v95, %v719
    %721 = vdwg.mxu0
    %722 = vmatprep.subr.mxu0 %v137
    %723 = vmatpush1.msra.mxu0 %v135
    %724 = vmatprep.subr.mxu0 0.0
    %725 = vmatpush1.msra.mxu0 0.0
    %726 = vmatprep.subr.mxu0 0.0
    %727 = vmatpush1.msra.mxu0 0.0
    %728 = vmatprep.subr.mxu0 0.0
    %729 = vmatpush1.msra.mxu0 0.0
    %730 = vmatprep.subr.mxu0 0.0
    %731 = vmatpush1.msra.mxu0 0.0
    %732 = vmatprep.subr.mxu0 0.0
    %733 = vmatpush1.msra.mxu0 0.0
    %734 = vmatprep.subr.mxu0 0.0
    %735 = vmatpush1.msra.mxu0 0.0
    %736 = vmatprep.subr.mxu0 0.0
    %737 = vmatpush1.msra.mxu0 0.0
    %738 = vmatprep.subr.mxu0 0.0
    %739 = vmatpush1.msra.mxu0 0.0
    %740 = vmatprep.subr.mxu0 0.0
    %741 = vmatpush1.msra.mxu0 0.0
    %742 = vmatprep.subr.mxu0 0.0
    %743 = vmatpush1.msra.mxu0 0.0
    %744 = vmatprep.subr.mxu0 0.0
    %745 = vmatpush1.msra.mxu0 0.0
    %746 = vmatprep.subr.mxu0 0.0
    %747 = vmatpush1.msra.mxu0 0.0
    %748 = vmatprep.subr.mxu0 0.0
    %749 = vmatpush1.msra.mxu0 0.0
    %750 = vmatprep.subr.mxu0 0.0
    %751 = vmatpush1.msra.mxu0 0.0
    %752 = vmatprep.subr.mxu0 0.0
    %753 = vmatpush1.msra.mxu0 0.0
    %754 = vmatprep.subr.mxu0 0.0
    %755 = vmatpush1.msra.mxu0 0.0
    %756 = vmatprep.subr.mxu0 0.0
    %757 = vmatpush1.msra.mxu0 0.0
    %758 = vmatprep.subr.mxu0 0.0
    %759 = vmatpush1.msra.mxu0 0.0
    %760 = vmatprep.subr.mxu0 0.0
    %761 = vmatpush1.msra.mxu0 0.0
    %762 = vmatprep.subr.mxu0 0.0
    %763 = vmatpush1.msra.mxu0 0.0
    %764 = vmatprep.subr.mxu0 0.0
    %765 = vmatpush1.msra.mxu0 0.0
    %766 = vmatprep.subr.mxu0 0.0
    %767 = vmatpush1.msra.mxu0 0.0
    %768 = vmatprep.subr.mxu0 0.0
    %769 = vmatpush1.msra.mxu0 0.0
    %770 = vmatprep.subr.mxu0 0.0
    %771 = vmatpush1.msra.mxu0 0.0
    %772 = vmatprep.subr.mxu0 0.0
    %773 = vmatpush1.msra.mxu0 0.0
    %774 = vmatprep.subr.mxu0 0.0
    %775 = vmatpush1.msra.mxu0 0.0
    %776 = vmatprep.subr.mxu0 0.0
    %777 = vmatpush1.msra.mxu0 0.0
    %778 = vmatprep.subr.mxu0 0.0
    %779 = vmatpush1.msra.mxu0 0.0
    %780 = vmatprep.subr.mxu0 0.0
    %781 = vmatpush1.msra.mxu0 0.0
    %782 = vmatprep.subr.mxu0 0.0
    %783 = vmatpush1.msra.mxu0 0.0
    %784 = vmatprep.subr.mxu0 0.0
    %785 = vmatpush1.msra.mxu0 0.0
    %786 = vmatprep.mubr.f32.mxu0 0.0
    %787 = vmatmul.mubr.f32.gmra.mrb[0].mxu0 %v649
    %v788 = vpop.f32.mrb[0].mxu0
    %v789 = vadd.f32 %v99, %v788
    %v790 = vpop.f32.mrb[0].mxu0
    %v791 = vadd.f32 %v103, %v790
    %792 = vdwg.mxu0
    %v797 = vcombine.low %v718, %v720
    %v798 = vcombine.low %v789, %v791
    %v800 = vunpack.c.l.s4 1983009808
    %v801 = vunpack.c.0.s8 %v800
    %v802 = vlaneseq
    %v803 = vshrl.u32 %v802, 7
    %v804 = vsub.s32 %v801, %v803
    %v805 = vrot.slane %v797, %v804
    %v807 = vunpack.c.l.s4 1983009808
    %v808 = vunpack.c.0.s8 %v807
    %v809 = vlaneseq
    %v810 = vshrl.u32 %v809, 7
    %v811 = vsub.s32 %v808, %v810
    %v812 = vrot.slane %v798, %v811
    %v813 = vcombine.low %v805, %v812
    %s815 = scalar_lea.vmem [#allocation2], 24
    %816 = vst [vmem:[%s815] sm:$0xff] %v813
    %s817 = scalar_lea.vmem %s0, 8
    %v818 = vld [vmem:[%s817] sm:$0x3]
    %v820 = vsel %vm126, %v818, 0
    %822 = vmatprep.subr.mxu0 %v133
    %823 = vmatpush1.msra.mxu0 %v131
    %824 = vmatprep.subr.mxu0 0.0
    %825 = vmatpush1.msra.mxu0 0.0
    %826 = vmatprep.subr.mxu0 0.0
    %827 = vmatpush1.msra.mxu0 0.0
    %828 = vmatprep.subr.mxu0 0.0
    %829 = vmatpush1.msra.mxu0 0.0
    %830 = vmatprep.subr.mxu0 0.0
    %831 = vmatpush1.msra.mxu0 0.0
    %832 = vmatprep.subr.mxu0 0.0
    %833 = vmatpush1.msra.mxu0 0.0
    %834 = vmatprep.subr.mxu0 0.0
    %835 = vmatpush1.msra.mxu0 0.0
    %836 = vmatprep.subr.mxu0 0.0
    %837 = vmatpush1.msra.mxu0 0.0
    %838 = vmatprep.subr.mxu0 0.0
    %839 = vmatpush1.msra.mxu0 0.0
    %840 = vmatprep.subr.mxu0 0.0
    %841 = vmatpush1.msra.mxu0 0.0
    %842 = vmatprep.subr.mxu0 0.0
    %843 = vmatpush1.msra.mxu0 0.0
    %844 = vmatprep.subr.mxu0 0.0
    %845 = vmatpush1.msra.mxu0 0.0
    %846 = vmatprep.subr.mxu0 0.0
    %847 = vmatpush1.msra.mxu0 0.0
    %848 = vmatprep.subr.mxu0 0.0
    %849 = vmatpush1.msra.mxu0 0.0
    %850 = vmatprep.subr.mxu0 0.0
    %851 = vmatpush1.msra.mxu0 0.0
    %852 = vmatprep.subr.mxu0 0.0
    %853 = vmatpush1.msra.mxu0 0.0
    %854 = vmatprep.subr.mxu0 0.0
    %855 = vmatpush1.msra.mxu0 0.0
    %856 = vmatprep.subr.mxu0 0.0
    %857 = vmatpush1.msra.mxu0 0.0
    %858 = vmatprep.subr.mxu0 0.0
    %859 = vmatpush1.msra.mxu0 0.0
    %860 = vmatprep.subr.mxu0 0.0
    %861 = vmatpush1.msra.mxu0 0.0
    %862 = vmatprep.subr.mxu0 0.0
    %863 = vmatpush1.msra.mxu0 0.0
    %864 = vmatprep.subr.mxu0 0.0
    %865 = vmatpush1.msra.mxu0 0.0
    %866 = vmatprep.subr.mxu0 0.0
    %867 = vmatpush1.msra.mxu0 0.0
    %868 = vmatprep.subr.mxu0 0.0
    %869 = vmatpush1.msra.mxu0 0.0
    %870 = vmatprep.subr.mxu0 0.0
    %871 = vmatpush1.msra.mxu0 0.0
    %872 = vmatprep.subr.mxu0 0.0
    %873 = vmatpush1.msra.mxu0 0.0
    %874 = vmatprep.subr.mxu0 0.0
    %875 = vmatpush1.msra.mxu0 0.0
    %876 = vmatprep.subr.mxu0 0.0
    %877 = vmatpush1.msra.mxu0 0.0
    %878 = vmatprep.subr.mxu0 0.0
    %879 = vmatpush1.msra.mxu0 0.0
    %880 = vmatprep.subr.mxu0 0.0
    %881 = vmatpush1.msra.mxu0 0.0
    %882 = vmatprep.subr.mxu0 0.0
    %883 = vmatpush1.msra.mxu0 0.0
    %884 = vmatprep.subr.mxu0 0.0
    %885 = vmatpush1.msra.mxu0 0.0
    %886 = vmatprep.mubr.f32.mxu0 0.0
    %887 = vmatmul.mubr.f32.gmra.mrb[0].mxu0 %v820
    %v888 = vpop.f32.mrb[0].mxu0
    %v889 = vadd.f32 %v91, %v888
    %v890 = vpop.f32.mrb[0].mxu0
    %v891 = vadd.f32 %v95, %v890
    %892 = vdwg.mxu0
    %893 = vmatprep.subr.mxu0 %v137
    %894 = vmatpush1.msra.mxu0 %v135
    %895 = vmatprep.subr.mxu0 0.0
    %896 = vmatpush1.msra.mxu0 0.0
    %897 = vmatprep.subr.mxu0 0.0
    %898 = vmatpush1.msra.mxu0 0.0
    %899 = vmatprep.subr.mxu0 0.0
    %900 = vmatpush1.msra.mxu0 0.0
    %901 = vmatprep.subr.mxu0 0.0
    %902 = vmatpush1.msra.mxu0 0.0
    %903 = vmatprep.subr.mxu0 0.0
    %904 = vmatpush1.msra.mxu0 0.0
    %905 = vmatprep.subr.mxu0 0.0
    %906 = vmatpush1.msra.mxu0 0.0
    %907 = vmatprep.subr.mxu0 0.0
    %908 = vmatpush1.msra.mxu0 0.0
    %909 = vmatprep.subr.mxu0 0.0
    %910 = vmatpush1.msra.mxu0 0.0
    %911 = vmatprep.subr.mxu0 0.0
    %912 = vmatpush1.msra.mxu0 0.0
    %913 = vmatprep.subr.mxu0 0.0
    %914 = vmatpush1.msra.mxu0 0.0
    %915 = vmatprep.subr.mxu0 0.0
    %916 = vmatpush1.msra.mxu0 0.0
    %917 = vmatprep.subr.mxu0 0.0
    %918 = vmatpush1.msra.mxu0 0.0
    %919 = vmatprep.subr.mxu0 0.0
    %920 = vmatpush1.msra.mxu0 0.0
    %921 = vmatprep.subr.mxu0 0.0
    %922 = vmatpush1.msra.mxu0 0.0
    %923 = vmatprep.subr.mxu0 0.0
    %924 = vmatpush1.msra.mxu0 0.0
    %925 = vmatprep.subr.mxu0 0.0
    %926 = vmatpush1.msra.mxu0 0.0
    %927 = vmatprep.subr.mxu0 0.0
    %928 = vmatpush1.msra.mxu0 0.0
    %929 = vmatprep.subr.mxu0 0.0
    %930 = vmatpush1.msra.mxu0 0.0
    %931 = vmatprep.subr.mxu0 0.0
    %932 = vmatpush1.msra.mxu0 0.0
    %933 = vmatprep.subr.mxu0 0.0
    %934 = vmatpush1.msra.mxu0 0.0
    %935 = vmatprep.subr.mxu0 0.0
    %936 = vmatpush1.msra.mxu0 0.0
    %937 = vmatprep.subr.mxu0 0.0
    %938 = vmatpush1.msra.mxu0 0.0
    %939 = vmatprep.subr.mxu0 0.0
    %940 = vmatpush1.msra.mxu0 0.0
    %941 = vmatprep.subr.mxu0 0.0
    %942 = vmatpush1.msra.mxu0 0.0
    %943 = vmatprep.subr.mxu0 0.0
    %944 = vmatpush1.msra.mxu0 0.0
    %945 = vmatprep.subr.mxu0 0.0
    %946 = vmatpush1.msra.mxu0 0.0
    %947 = vmatprep.subr.mxu0 0.0
    %948 = vmatpush1.msra.mxu0 0.0
    %949 = vmatprep.subr.mxu0 0.0
    %950 = vmatpush1.msra.mxu0 0.0
    %951 = vmatprep.subr.mxu0 0.0
    %952 = vmatpush1.msra.mxu0 0.0
    %953 = vmatprep.subr.mxu0 0.0
    %954 = vmatpush1.msra.mxu0 0.0
    %955 = vmatprep.subr.mxu0 0.0
    %956 = vmatpush1.msra.mxu0 0.0
    %957 = vmatprep.mubr.f32.mxu0 0.0
    %958 = vmatmul.mubr.f32.gmra.mrb[0].mxu0 %v820
    %v959 = vpop.f32.mrb[0].mxu0
    %v960 = vadd.f32 %v99, %v959
    %v961 = vpop.f32.mrb[0].mxu0
    %v962 = vadd.f32 %v103, %v961
    %963 = vdwg.mxu0
    %v968 = vcombine.low %v889, %v891
    %v969 = vcombine.low %v960, %v962
    %v971 = vunpack.c.l.s4 1983009808
    %v972 = vunpack.c.0.s8 %v971
    %v973 = vlaneseq
    %v974 = vshrl.u32 %v973, 7
    %v975 = vsub.s32 %v972, %v974
    %v976 = vrot.slane %v968, %v975
    %v978 = vunpack.c.l.s4 1983009808
    %v979 = vunpack.c.0.s8 %v978
    %v980 = vlaneseq
    %v981 = vshrl.u32 %v980, 7
    %v982 = vsub.s32 %v979, %v981
    %v983 = vrot.slane %v969, %v982
    %v984 = vcombine.low %v976, %v983
    %s986 = scalar_lea.vmem [#allocation2], 32
    %987 = vst [vmem:[%s986] sm:$0xff] %v984
    %s988 = scalar_lea.vmem %s0, 10
    %v989 = vld [vmem:[%s988] sm:$0x3]
    %v991 = vsel %vm126, %v989, 0
    %993 = vmatprep.subr.mxu0 %v133
    %994 = vmatpush1.msra.mxu0 %v131
    %995 = vmatprep.subr.mxu0 0.0
    %996 = vmatpush1.msra.mxu0 0.0
    %997 = vmatprep.subr.mxu0 0.0
    %998 = vmatpush1.msra.mxu0 0.0
    %999 = vmatprep.subr.mxu0 0.0
    %1000 = vmatpush1.msra.mxu0 0.0
    %1001 = vmatprep.subr.mxu0 0.0
    %1002 = vmatpush1.msra.mxu0 0.0
    %1003 = vmatprep.subr.mxu0 0.0
    %1004 = vmatpush1.msra.mxu0 0.0
    %1005 = vmatprep.subr.mxu0 0.0
    %1006 = vmatpush1.msra.mxu0 0.0
    %1007 = vmatprep.subr.mxu0 0.0
    %1008 = vmatpush1.msra.mxu0 0.0
    %1009 = vmatprep.subr.mxu0 0.0
    %1010 = vmatpush1.msra.mxu0 0.0
    %1011 = vmatprep.subr.mxu0 0.0
    %1012 = vmatpush1.msra.mxu0 0.0
    %1013 = vmatprep.subr.mxu0 0.0
    %1014 = vmatpush1.msra.mxu0 0.0
    %1015 = vmatprep.subr.mxu0 0.0
    %1016 = vmatpush1.msra.mxu0 0.0
    %1017 = vmatprep.subr.mxu0 0.0
    %1018 = vmatpush1.msra.mxu0 0.0
    %1019 = vmatprep.subr.mxu0 0.0
    %1020 = vmatpush1.msra.mxu0 0.0
    %1021 = vmatprep.subr.mxu0 0.0
    %1022 = vmatpush1.msra.mxu0 0.0
    %1023 = vmatprep.subr.mxu0 0.0
    %1024 = vmatpush1.msra.mxu0 0.0
    %1025 = vmatprep.subr.mxu0 0.0
    %1026 = vmatpush1.msra.mxu0 0.0
    %1027 = vmatprep.subr.mxu0 0.0
    %1028 = vmatpush1.msra.mxu0 0.0
    %1029 = vmatprep.subr.mxu0 0.0
    %1030 = vmatpush1.msra.mxu0 0.0
    %1031 = vmatprep.subr.mxu0 0.0
    %1032 = vmatpush1.msra.mxu0 0.0
    %1033 = vmatprep.subr.mxu0 0.0
    %1034 = vmatpush1.msra.mxu0 0.0
    %1035 = vmatprep.subr.mxu0 0.0
    %1036 = vmatpush1.msra.mxu0 0.0
    %1037 = vmatprep.subr.mxu0 0.0
    %1038 = vmatpush1.msra.mxu0 0.0
    %1039 = vmatprep.subr.mxu0 0.0
    %1040 = vmatpush1.msra.mxu0 0.0
    %1041 = vmatprep.subr.mxu0 0.0
    %1042 = vmatpush1.msra.mxu0 0.0
    %1043 = vmatprep.subr.mxu0 0.0
    %1044 = vmatpush1.msra.mxu0 0.0
    %1045 = vmatprep.subr.mxu0 0.0
    %1046 = vmatpush1.msra.mxu0 0.0
    %1047 = vmatprep.subr.mxu0 0.0
    %1048 = vmatpush1.msra.mxu0 0.0
    %1049 = vmatprep.subr.mxu0 0.0
    %1050 = vmatpush1.msra.mxu0 0.0
    %1051 = vmatprep.subr.mxu0 0.0
    %1052 = vmatpush1.msra.mxu0 0.0
    %1053 = vmatprep.subr.mxu0 0.0
    %1054 = vmatpush1.msra.mxu0 0.0
    %1055 = vmatprep.subr.mxu0 0.0
    %1056 = vmatpush1.msra.mxu0 0.0
    %1057 = vmatprep.mubr.f32.mxu0 0.0
    %1058 = vmatmul.mubr.f32.gmra.mrb[0].mxu0 %v991
    %v1059 = vpop.f32.mrb[0].mxu0
    %v1060 = vadd.f32 %v91, %v1059
    %v1061 = vpop.f32.mrb[0].mxu0
    %v1062 = vadd.f32 %v95, %v1061
    %1063 = vdwg.mxu0
    %1064 = vmatprep.subr.mxu0 %v137
    %1065 = vmatpush1.msra.mxu0 %v135
    %1066 = vmatprep.subr.mxu0 0.0
    %1067 = vmatpush1.msra.mxu0 0.0
    %1068 = vmatprep.subr.mxu0 0.0
    %1069 = vmatpush1.msra.mxu0 0.0
    %1070 = vmatprep.subr.mxu0 0.0
    %1071 = vmatpush1.msra.mxu0 0.0
    %1072 = vmatprep.subr.mxu0 0.0
    %1073 = vmatpush1.msra.mxu0 0.0
    %1074 = vmatprep.subr.mxu0 0.0
    %1075 = vmatpush1.msra.mxu0 0.0
    %1076 = vmatprep.subr.mxu0 0.0
    %1077 = vmatpush1.msra.mxu0 0.0
    %1078 = vmatprep.subr.mxu0 0.0
    %1079 = vmatpush1.msra.mxu0 0.0
    %1080 = vmatprep.subr.mxu0 0.0
    %1081 = vmatpush1.msra.mxu0 0.0
    %1082 = vmatprep.subr.mxu0 0.0
    %1083 = vmatpush1.msra.mxu0 0.0
    %1084 = vmatprep.subr.mxu0 0.0
    %1085 = vmatpush1.msra.mxu0 0.0
    %1086 = vmatprep.subr.mxu0 0.0
    %1087 = vmatpush1.msra.mxu0 0.0
    %1088 = vmatprep.subr.mxu0 0.0
    %1089 = vmatpush1.msra.mxu0 0.0
    %1090 = vmatprep.subr.mxu0 0.0
    %1091 = vmatpush1.msra.mxu0 0.0
    %1092 = vmatprep.subr.mxu0 0.0
    %1093 = vmatpush1.msra.mxu0 0.0
    %1094 = vmatprep.subr.mxu0 0.0
    %1095 = vmatpush1.msra.mxu0 0.0
    %1096 = vmatprep.subr.mxu0 0.0
    %1097 = vmatpush1.msra.mxu0 0.0
    %1098 = vmatprep.subr.mxu0 0.0
    %1099 = vmatpush1.msra.mxu0 0.0
    %1100 = vmatprep.subr.mxu0 0.0
    %1101 = vmatpush1.msra.mxu0 0.0
    %1102 = vmatprep.subr.mxu0 0.0
    %1103 = vmatpush1.msra.mxu0 0.0
    %1104 = vmatprep.subr.mxu0 0.0
    %1105 = vmatpush1.msra.mxu0 0.0
    %1106 = vmatprep.subr.mxu0 0.0
    %1107 = vmatpush1.msra.mxu0 0.0
    %1108 = vmatprep.subr.mxu0 0.0
    %1109 = vmatpush1.msra.mxu0 0.0
    %1110 = vmatprep.subr.mxu0 0.0
    %1111 = vmatpush1.msra.mxu0 0.0
    %1112 = vmatprep.subr.mxu0 0.0
    %1113 = vmatpush1.msra.mxu0 0.0
    %1114 = vmatprep.subr.mxu0 0.0
    %1115 = vmatpush1.msra.mxu0 0.0
    %1116 = vmatprep.subr.mxu0 0.0
    %1117 = vmatpush1.msra.mxu0 0.0
    %1118 = vmatprep.subr.mxu0 0.0
    %1119 = vmatpush1.msra.mxu0 0.0
    %1120 = vmatprep.subr.mxu0 0.0
    %1121 = vmatpush1.msra.mxu0 0.0
    %1122 = vmatprep.subr.mxu0 0.0
    %1123 = vmatpush1.msra.mxu0 0.0
    %1124 = vmatprep.subr.mxu0 0.0
    %1125 = vmatpush1.msra.mxu0 0.0
    %1126 = vmatprep.subr.mxu0 0.0
    %1127 = vmatpush1.msra.mxu0 0.0
    %1128 = vmatprep.mubr.f32.mxu0 0.0
    %1129 = vmatmul.mubr.f32.gmra.mrb[0].mxu0 %v991
    %v1130 = vpop.f32.mrb[0].mxu0
    %v1131 = vadd.f32 %v99, %v1130
    %v1132 = vpop.f32.mrb[0].mxu0
    %v1133 = vadd.f32 %v103, %v1132
    %1134 = vdwg.mxu0
    %v1139 = vcombine.low %v1060, %v1062
    %v1140 = vcombine.low %v1131, %v1133
    %v1142 = vunpack.c.l.s4 1983009808
    %v1143 = vunpack.c.0.s8 %v1142
    %v1144 = vlaneseq
    %v1145 = vshrl.u32 %v1144, 7
    %v1146 = vsub.s32 %v1143, %v1145
    %v1147 = vrot.slane %v1139, %v1146
    %v1149 = vunpack.c.l.s4 1983009808
    %v1150 = vunpack.c.0.s8 %v1149
    %v1151 = vlaneseq
    %v1152 = vshrl.u32 %v1151, 7
    %v1153 = vsub.s32 %v1150, %v1152
    %v1154 = vrot.slane %v1140, %v1153
    %v1155 = vcombine.low %v1147, %v1154
    %s1157 = scalar_lea.vmem [#allocation2], 40
    %1158 = vst [vmem:[%s1157] sm:$0xff] %v1155
    %s1159 = scalar_lea.vmem %s0, 12
    %v1160 = vld [vmem:[%s1159] sm:$0x3]
    %v1162 = vsel %vm126, %v1160, 0
    %1164 = vmatprep.subr.mxu0 %v133
    %1165 = vmatpush1.msra.mxu0 %v131
    %1166 = vmatprep.subr.mxu0 0.0
    %1167 = vmatpush1.msra.mxu0 0.0
    %1168 = vmatprep.subr.mxu0 0.0
    %1169 = vmatpush1.msra.mxu0 0.0
    %1170 = vmatprep.subr.mxu0 0.0
    %1171 = vmatpush1.msra.mxu0 0.0
    %1172 = vmatprep.subr.mxu0 0.0
    %1173 = vmatpush1.msra.mxu0 0.0
    %1174 = vmatprep.subr.mxu0 0.0
    %1175 = vmatpush1.msra.mxu0 0.0
    %1176 = vmatprep.subr.mxu0 0.0
    %1177 = vmatpush1.msra.mxu0 0.0
    %1178 = vmatprep.subr.mxu0 0.0
    %1179 = vmatpush1.msra.mxu0 0.0
    %1180 = vmatprep.subr.mxu0 0.0
    %1181 = vmatpush1.msra.mxu0 0.0
    %1182 = vmatprep.subr.mxu0 0.0
    %1183 = vmatpush1.msra.mxu0 0.0
    %1184 = vmatprep.subr.mxu0 0.0
    %1185 = vmatpush1.msra.mxu0 0.0
    %1186 = vmatprep.subr.mxu0 0.0
    %1187 = vmatpush1.msra.mxu0 0.0
    %1188 = vmatprep.subr.mxu0 0.0
    %1189 = vmatpush1.msra.mxu0 0.0
    %1190 = vmatprep.subr.mxu0 0.0
    %1191 = vmatpush1.msra.mxu0 0.0
    %1192 = vmatprep.subr.mxu0 0.0
    %1193 = vmatpush1.msra.mxu0 0.0
    %1194 = vmatprep.subr.mxu0 0.0
    %1195 = vmatpush1.msra.mxu0 0.0
    %1196 = vmatprep.subr.mxu0 0.0
    %1197 = vmatpush1.msra.mxu0 0.0
    %1198 = vmatprep.subr.mxu0 0.0
    %1199 = vmatpush1.msra.mxu0 0.0
    %1200 = vmatprep.subr.mxu0 0.0
    %1201 = vmatpush1.msra.mxu0 0.0
    %1202 = vmatprep.subr.mxu0 0.0
    %1203 = vmatpush1.msra.mxu0 0.0
    %1204 = vmatprep.subr.mxu0 0.0
    %1205 = vmatpush1.msra.mxu0 0.0
    %1206 = vmatprep.subr.mxu0 0.0
    %1207 = vmatpush1.msra.mxu0 0.0
    %1208 = vmatprep.subr.mxu0 0.0
    %1209 = vmatpush1.msra.mxu0 0.0
    %1210 = vmatprep.subr.mxu0 0.0
    %1211 = vmatpush1.msra.mxu0 0.0
    %1212 = vmatprep.subr.mxu0 0.0
    %1213 = vmatpush1.msra.mxu0 0.0
    %1214 = vmatprep.subr.mxu0 0.0
    %1215 = vmatpush1.msra.mxu0 0.0
    %1216 = vmatprep.subr.mxu0 0.0
    %1217 = vmatpush1.msra.mxu0 0.0
    %1218 = vmatprep.subr.mxu0 0.0
    %1219 = vmatpush1.msra.mxu0 0.0
    %1220 = vmatprep.subr.mxu0 0.0
    %1221 = vmatpush1.msra.mxu0 0.0
    %1222 = vmatprep.subr.mxu0 0.0
    %1223 = vmatpush1.msra.mxu0 0.0
    %1224 = vmatprep.subr.mxu0 0.0
    %1225 = vmatpush1.msra.mxu0 0.0
    %1226 = vmatprep.subr.mxu0 0.0
    %1227 = vmatpush1.msra.mxu0 0.0
    %1228 = vmatprep.mubr.f32.mxu0 0.0
    %1229 = vmatmul.mubr.f32.gmra.mrb[0].mxu0 %v1162
    %v1230 = vpop.f32.mrb[0].mxu0
    %v1231 = vadd.f32 %v91, %v1230
    %v1232 = vpop.f32.mrb[0].mxu0
    %v1233 = vadd.f32 %v95, %v1232
    %1234 = vdwg.mxu0
    %1235 = vmatprep.subr.mxu0 %v137
    %1236 = vmatpush1.msra.mxu0 %v135
    %1237 = vmatprep.subr.mxu0 0.0
    %1238 = vmatpush1.msra.mxu0 0.0
    %1239 = vmatprep.subr.mxu0 0.0
    %1240 = vmatpush1.msra.mxu0 0.0
    %1241 = vmatprep.subr.mxu0 0.0
    %1242 = vmatpush1.msra.mxu0 0.0
    %1243 = vmatprep.subr.mxu0 0.0
    %1244 = vmatpush1.msra.mxu0 0.0
    %1245 = vmatprep.subr.mxu0 0.0
    %1246 = vmatpush1.msra.mxu0 0.0
    %1247 = vmatprep.subr.mxu0 0.0
    %1248 = vmatpush1.msra.mxu0 0.0
    %1249 = vmatprep.subr.mxu0 0.0
    %1250 = vmatpush1.msra.mxu0 0.0
    %1251 = vmatprep.subr.mxu0 0.0
    %1252 = vmatpush1.msra.mxu0 0.0
    %1253 = vmatprep.subr.mxu0 0.0
    %1254 = vmatpush1.msra.mxu0 0.0
    %1255 = vmatprep.subr.mxu0 0.0
    %1256 = vmatpush1.msra.mxu0 0.0
    %1257 = vmatprep.subr.mxu0 0.0
    %1258 = vmatpush1.msra.mxu0 0.0
    %1259 = vmatprep.subr.mxu0 0.0
    %1260 = vmatpush1.msra.mxu0 0.0
    %1261 = vmatprep.subr.mxu0 0.0
    %1262 = vmatpush1.msra.mxu0 0.0
    %1263 = vmatprep.subr.mxu0 0.0
    %1264 = vmatpush1.msra.mxu0 0.0
    %1265 = vmatprep.subr.mxu0 0.0
    %1266 = vmatpush1.msra.mxu0 0.0
    %1267 = vmatprep.subr.mxu0 0.0
    %1268 = vmatpush1.msra.mxu0 0.0
    %1269 = vmatprep.subr.mxu0 0.0
    %1270 = vmatpush1.msra.mxu0 0.0
    %1271 = vmatprep.subr.mxu0 0.0
    %1272 = vmatpush1.msra.mxu0 0.0
    %1273 = vmatprep.subr.mxu0 0.0
    %1274 = vmatpush1.msra.mxu0 0.0
    %1275 = vmatprep.subr.mxu0 0.0
    %1276 = vmatpush1.msra.mxu0 0.0
    %1277 = vmatprep.subr.mxu0 0.0
    %1278 = vmatpush1.msra.mxu0 0.0
    %1279 = vmatprep.subr.mxu0 0.0
    %1280 = vmatpush1.msra.mxu0 0.0
    %1281 = vmatprep.subr.mxu0 0.0
    %1282 = vmatpush1.msra.mxu0 0.0
    %1283 = vmatprep.subr.mxu0 0.0
    %1284 = vmatpush1.msra.mxu0 0.0
    %1285 = vmatprep.subr.mxu0 0.0
    %1286 = vmatpush1.msra.mxu0 0.0
    %1287 = vmatprep.subr.mxu0 0.0
    %1288 = vmatpush1.msra.mxu0 0.0
    %1289 = vmatprep.subr.mxu0 0.0
    %1290 = vmatpush1.msra.mxu0 0.0
    %1291 = vmatprep.subr.mxu0 0.0
    %1292 = vmatpush1.msra.mxu0 0.0
    %1293 = vmatprep.subr.mxu0 0.0
    %1294 = vmatpush1.msra.mxu0 0.0
    %1295 = vmatprep.subr.mxu0 0.0
    %1296 = vmatpush1.msra.mxu0 0.0
    %1297 = vmatprep.subr.mxu0 0.0
    %1298 = vmatpush1.msra.mxu0 0.0
    %1299 = vmatprep.mubr.f32.mxu0 0.0
    %1300 = vmatmul.mubr.f32.gmra.mrb[0].mxu0 %v1162
    %v1301 = vpop.f32.mrb[0].mxu0
    %v1302 = vadd.f32 %v99, %v1301
    %v1303 = vpop.f32.mrb[0].mxu0
    %v1304 = vadd.f32 %v103, %v1303
    %1305 = vdwg.mxu0
    %v1310 = vcombine.low %v1231, %v1233
    %v1311 = vcombine.low %v1302, %v1304
    %v1313 = vunpack.c.l.s4 1983009808
    %v1314 = vunpack.c.0.s8 %v1313
    %v1315 = vlaneseq
    %v1316 = vshrl.u32 %v1315, 7
    %v1317 = vsub.s32 %v1314, %v1316
    %v1318 = vrot.slane %v1310, %v1317
    %v1320 = vunpack.c.l.s4 1983009808
    %v1321 = vunpack.c.0.s8 %v1320
    %v1322 = vlaneseq
    %v1323 = vshrl.u32 %v1322, 7
    %v1324 = vsub.s32 %v1321, %v1323
    %v1325 = vrot.slane %v1311, %v1324
    %v1326 = vcombine.low %v1318, %v1325
    %s1328 = scalar_lea.vmem [#allocation2], 48
    %1329 = vst [vmem:[%s1328] sm:$0xff] %v1326
    %s1330 = scalar_lea.vmem %s0, 14
    %v1331 = vld [vmem:[%s1330] sm:$0x3]
    %v1333 = vsel %vm126, %v1331, 0
    %1335 = vmatprep.subr.mxu0 %v133
    %1336 = vmatpush1.msra.mxu0 %v131
    %1337 = vmatprep.subr.mxu0 0.0
    %1338 = vmatpush1.msra.mxu0 0.0
    %1339 = vmatprep.subr.mxu0 0.0
    %1340 = vmatpush1.msra.mxu0 0.0
    %1341 = vmatprep.subr.mxu0 0.0
    %1342 = vmatpush1.msra.mxu0 0.0
    %1343 = vmatprep.subr.mxu0 0.0
    %1344 = vmatpush1.msra.mxu0 0.0
    %1345 = vmatprep.subr.mxu0 0.0
    %1346 = vmatpush1.msra.mxu0 0.0
    %1347 = vmatprep.subr.mxu0 0.0
    %1348 = vmatpush1.msra.mxu0 0.0
    %1349 = vmatprep.subr.mxu0 0.0
    %1350 = vmatpush1.msra.mxu0 0.0
    %1351 = vmatprep.subr.mxu0 0.0
    %1352 = vmatpush1.msra.mxu0 0.0
    %1353 = vmatprep.subr.mxu0 0.0
    %1354 = vmatpush1.msra.mxu0 0.0
    %1355 = vmatprep.subr.mxu0 0.0
    %1356 = vmatpush1.msra.mxu0 0.0
    %1357 = vmatprep.subr.mxu0 0.0
    %1358 = vmatpush1.msra.mxu0 0.0
    %1359 = vmatprep.subr.mxu0 0.0
    %1360 = vmatpush1.msra.mxu0 0.0
    %1361 = vmatprep.subr.mxu0 0.0
    %1362 = vmatpush1.msra.mxu0 0.0
    %1363 = vmatprep.subr.mxu0 0.0
    %1364 = vmatpush1.msra.mxu0 0.0
    %1365 = vmatprep.subr.mxu0 0.0
    %1366 = vmatpush1.msra.mxu0 0.0
    %1367 = vmatprep.subr.mxu0 0.0
    %1368 = vmatpush1.msra.mxu0 0.0
    %1369 = vmatprep.subr.mxu0 0.0
    %1370 = vmatpush1.msra.mxu0 0.0
    %1371 = vmatprep.subr.mxu0 0.0
    %1372 = vmatpush1.msra.mxu0 0.0
    %1373 = vmatprep.subr.mxu0 0.0
    %1374 = vmatpush1.msra.mxu0 0.0
    %1375 = vmatprep.subr.mxu0 0.0
    %1376 = vmatpush1.msra.mxu0 0.0
    %1377 = vmatprep.subr.mxu0 0.0
    %1378 = vmatpush1.msra.mxu0 0.0
    %1379 = vmatprep.subr.mxu0 0.0
    %1380 = vmatpush1.msra.mxu0 0.0
    %1381 = vmatprep.subr.mxu0 0.0
    %1382 = vmatpush1.msra.mxu0 0.0
    %1383 = vmatprep.subr.mxu0 0.0
    %1384 = vmatpush1.msra.mxu0 0.0
    %1385 = vmatprep.subr.mxu0 0.0
    %1386 = vmatpush1.msra.mxu0 0.0
    %1387 = vmatprep.subr.mxu0 0.0
    %1388 = vmatpush1.msra.mxu0 0.0
    %1389 = vmatprep.subr.mxu0 0.0
    %1390 = vmatpush1.msra.mxu0 0.0
    %1391 = vmatprep.subr.mxu0 0.0
    %1392 = vmatpush1.msra.mxu0 0.0
    %1393 = vmatprep.subr.mxu0 0.0
    %1394 = vmatpush1.msra.mxu0 0.0
    %1395 = vmatprep.subr.mxu0 0.0
    %1396 = vmatpush1.msra.mxu0 0.0
    %1397 = vmatprep.subr.mxu0 0.0
    %1398 = vmatpush1.msra.mxu0 0.0
    %1399 = vmatprep.mubr.f32.mxu0 0.0
    %1400 = vmatmul.mubr.f32.gmra.mrb[0].mxu0 %v1333
    %v1401 = vpop.f32.mrb[0].mxu0
    %v1402 = vadd.f32 %v91, %v1401
    %v1403 = vpop.f32.mrb[0].mxu0
    %v1404 = vadd.f32 %v95, %v1403
    %1405 = vdwg.mxu0
    %1406 = vmatprep.subr.mxu0 %v137
    %1407 = vmatpush1.msra.mxu0 %v135
    %1408 = vmatprep.subr.mxu0 0.0
    %1409 = vmatpush1.msra.mxu0 0.0
    %1410 = vmatprep.subr.mxu0 0.0
    %1411 = vmatpush1.msra.mxu0 0.0
    %1412 = vmatprep.subr.mxu0 0.0
    %1413 = vmatpush1.msra.mxu0 0.0
    %1414 = vmatprep.subr.mxu0 0.0
    %1415 = vmatpush1.msra.mxu0 0.0
    %1416 = vmatprep.subr.mxu0 0.0
    %1417 = vmatpush1.msra.mxu0 0.0
    %1418 = vmatprep.subr.mxu0 0.0
    %1419 = vmatpush1.msra.mxu0 0.0
    %1420 = vmatprep.subr.mxu0 0.0
    %1421 = vmatpush1.msra.mxu0 0.0
    %1422 = vmatprep.subr.mxu0 0.0
    %1423 = vmatpush1.msra.mxu0 0.0
    %1424 = vmatprep.subr.mxu0 0.0
    %1425 = vmatpush1.msra.mxu0 0.0
    %1426 = vmatprep.subr.mxu0 0.0
    %1427 = vmatpush1.msra.mxu0 0.0
    %1428 = vmatprep.subr.mxu0 0.0
    %1429 = vmatpush1.msra.mxu0 0.0
    %1430 = vmatprep.subr.mxu0 0.0
    %1431 = vmatpush1.msra.mxu0 0.0
    %1432 = vmatprep.subr.mxu0 0.0
    %1433 = vmatpush1.msra.mxu0 0.0
    %1434 = vmatprep.subr.mxu0 0.0
    %1435 = vmatpush1.msra.mxu0 0.0
    %1436 = vmatprep.subr.mxu0 0.0
    %1437 = vmatpush1.msra.mxu0 0.0
    %1438 = vmatprep.subr.mxu0 0.0
    %1439 = vmatpush1.msra.mxu0 0.0
    %1440 = vmatprep.subr.mxu0 0.0
    %1441 = vmatpush1.msra.mxu0 0.0
    %1442 = vmatprep.subr.mxu0 0.0
    %1443 = vmatpush1.msra.mxu0 0.0
    %1444 = vmatprep.subr.mxu0 0.0
    %1445 = vmatpush1.msra.mxu0 0.0
    %1446 = vmatprep.subr.mxu0 0.0
    %1447 = vmatpush1.msra.mxu0 0.0
    %1448 = vmatprep.subr.mxu0 0.0
    %1449 = vmatpush1.msra.mxu0 0.0
    %1450 = vmatprep.subr.mxu0 0.0
    %1451 = vmatpush1.msra.mxu0 0.0
    %1452 = vmatprep.subr.mxu0 0.0
    %1453 = vmatpush1.msra.mxu0 0.0
    %1454 = vmatprep.subr.mxu0 0.0
    %1455 = vmatpush1.msra.mxu0 0.0
    %1456 = vmatprep.subr.mxu0 0.0
    %1457 = vmatpush1.msra.mxu0 0.0
    %1458 = vmatprep.subr.mxu0 0.0
    %1459 = vmatpush1.msra.mxu0 0.0
    %1460 = vmatprep.subr.mxu0 0.0
    %1461 = vmatpush1.msra.mxu0 0.0
    %1462 = vmatprep.subr.mxu0 0.0
    %1463 = vmatpush1.msra.mxu0 0.0
    %1464 = vmatprep.subr.mxu0 0.0
    %1465 = vmatpush1.msra.mxu0 0.0
    %1466 = vmatprep.subr.mxu0 0.0
    %1467 = vmatpush1.msra.mxu0 0.0
    %1468 = vmatprep.subr.mxu0 0.0
    %1469 = vmatpush1.msra.mxu0 0.0
    %1470 = vmatprep.mubr.f32.mxu0 0.0
    %1471 = vmatmul.mubr.f32.gmra.mrb[0].mxu0 %v1333
    %v1472 = vpop.f32.mrb[0].mxu0
    %v1473 = vadd.f32 %v99, %v1472
    %v1474 = vpop.f32.mrb[0].mxu0
    %v1475 = vadd.f32 %v103, %v1474
    %1476 = vdwg.mxu0
    %v1481 = vcombine.low %v1402, %v1404
    %v1482 = vcombine.low %v1473, %v1475
    %v1484 = vunpack.c.l.s4 1983009808
    %v1485 = vunpack.c.0.s8 %v1484
    %v1486 = vlaneseq
    %v1487 = vshrl.u32 %v1486, 7
    %v1488 = vsub.s32 %v1485, %v1487
    %v1489 = vrot.slane %v1481, %v1488
    %v1491 = vunpack.c.l.s4 1983009808
    %v1492 = vunpack.c.0.s8 %v1491
    %v1493 = vlaneseq
    %v1494 = vshrl.u32 %v1493, 7
    %v1495 = vsub.s32 %v1492, %v1494
    %v1496 = vrot.slane %v1482, %v1495
    %v1497 = vcombine.low %v1489, %v1496
    %s1499 = scalar_lea.vmem [#allocation2], 56
    %1500 = vst [vmem:[%s1499] sm:$0xff] %v1497
    %v1501 = vld [vmem:[#allocation2] sm:$0xff]
    %v1534 = vunpack.c.l.b16 %v54
    %v1535 = vunpack.c.h.b16 %v54
    %v1536 = vunpack.c.l.b16 %v55
    %v1537 = vunpack.c.h.b16 %v55
    %v1538 = vunpack.c.l.b16 %v56
    %v1539 = vunpack.c.h.b16 %v56
    %v1540 = vunpack.c.l.b16 %v57
    %v1541 = vunpack.c.h.b16 %v57
    %v1542 = vunpack.c.l.b16 %v58
    %v1543 = vunpack.c.h.b16 %v58
    %v1544 = vunpack.c.l.b16 %v59
    %v1545 = vunpack.c.h.b16 %v59
    %v1546 = vunpack.c.l.b16 %v60
    %v1547 = vunpack.c.h.b16 %v60
    %v1548 = vunpack.c.l.b16 %v61
    %v1549 = vunpack.c.h.b16 %v61
    %v1550 = vunpack.c.l.b16 %v62
    %v1551 = vunpack.c.h.b16 %v62
    %v1552 = vunpack.c.l.b16 %v63
    %v1553 = vunpack.c.h.b16 %v63
    %v1554 = vunpack.c.l.b16 %v64
    %v1555 = vunpack.c.h.b16 %v64
    %v1556 = vunpack.c.l.b16 %v65
    %v1557 = vunpack.c.h.b16 %v65
    %v1558 = vunpack.c.l.b16 %v66
    %v1559 = vunpack.c.h.b16 %v66
    %v1560 = vunpack.c.l.b16 %v67
    %v1561 = vunpack.c.h.b16 %v67
    %v1562 = vunpack.c.l.b16 %v68
    %v1563 = vunpack.c.h.b16 %v68
    %v1564 = vunpack.c.l.b16 %v69
    %v1565 = vunpack.c.h.b16 %v69
    %v1566 = vunpack.c.l.b16 %v70
    %v1567 = vunpack.c.h.b16 %v70
    %v1568 = vunpack.c.l.b16 %v71
    %v1569 = vunpack.c.h.b16 %v71
    %v1570 = vunpack.c.l.b16 %v72
    %v1571 = vunpack.c.h.b16 %v72
    %v1572 = vunpack.c.l.b16 %v73
    %v1573 = vunpack.c.h.b16 %v73
    %v1574 = vunpack.c.l.b16 %v74
    %v1575 = vunpack.c.h.b16 %v74
    %v1576 = vunpack.c.l.b16 %v75
    %v1577 = vunpack.c.h.b16 %v75
    %v1578 = vunpack.c.l.b16 %v76
    %v1579 = vunpack.c.h.b16 %v76
    %v1580 = vunpack.c.l.b16 %v77
    %v1581 = vunpack.c.h.b16 %v77
    %v1582 = vunpack.c.l.b16 %v78
    %v1583 = vunpack.c.h.b16 %v78
    %v1584 = vunpack.c.l.b16 %v79
    %v1585 = vunpack.c.h.b16 %v79
    %v1586 = vunpack.c.l.b16 %v80
    %v1587 = vunpack.c.h.b16 %v80
    %v1588 = vunpack.c.l.b16 %v81
    %v1589 = vunpack.c.h.b16 %v81
    %v1590 = vunpack.c.l.b16 %v82
    %v1591 = vunpack.c.h.b16 %v82
    %v1592 = vunpack.c.l.b16 %v83
    %v1593 = vunpack.c.h.b16 %v83
    %v1594 = vunpack.c.l.b16 %v84
    %v1595 = vunpack.c.h.b16 %v84
    %v1596 = vunpack.c.l.b16 %v85
    %v1597 = vunpack.c.h.b16 %v85
    %v1598 = vpack.c.b16 %v1538, %v1534
    %v1599 = vpack.c.b16 %v1539, %v1535
    %v1600 = vpack.c.b16 %v1540, %v1536
    %v1601 = vpack.c.b16 %v1541, %v1537
    %v1602 = vpack.c.b16 %v1546, %v1542
    %v1603 = vpack.c.b16 %v1547, %v1543
    %v1604 = vpack.c.b16 %v1548, %v1544
    %v1605 = vpack.c.b16 %v1549, %v1545
    %v1606 = vpack.c.b16 %v1554, %v1550
    %v1607 = vpack.c.b16 %v1555, %v1551
    %v1608 = vpack.c.b16 %v1556, %v1552
    %v1609 = vpack.c.b16 %v1557, %v1553
    %v1610 = vpack.c.b16 %v1562, %v1558
    %v1611 = vpack.c.b16 %v1563, %v1559
    %v1612 = vpack.c.b16 %v1564, %v1560
    %v1613 = vpack.c.b16 %v1565, %v1561
    %v1614 = vpack.c.b16 %v1570, %v1566
    %v1615 = vpack.c.b16 %v1571, %v1567
    %v1616 = vpack.c.b16 %v1572, %v1568
    %v1617 = vpack.c.b16 %v1573, %v1569
    %v1618 = vpack.c.b16 %v1578, %v1574
    %v1619 = vpack.c.b16 %v1579, %v1575
    %v1620 = vpack.c.b16 %v1580, %v1576
    %v1621 = vpack.c.b16 %v1581, %v1577
    %v1622 = vpack.c.b16 %v1586, %v1582
    %v1623 = vpack.c.b16 %v1587, %v1583
    %v1624 = vpack.c.b16 %v1588, %v1584
    %v1625 = vpack.c.b16 %v1589, %v1585
    %v1626 = vpack.c.b16 %v1594, %v1590
    %v1627 = vpack.c.b16 %v1595, %v1591
    %v1628 = vpack.c.b16 %v1596, %v1592
    %v1629 = vpack.c.b16 %v1597, %v1593
    %1662 = vmatprep.subr.bf16.mxu0 %v1599
    %1663 = vmatpush1.bf16.msra.mxu0 %v1598
    %1664 = vmatprep.subr.bf16.mxu0 %v1603
    %1665 = vmatpush1.bf16.msra.mxu0 %v1602
    %1666 = vmatprep.subr.bf16.mxu0 %v1607
    %1667 = vmatpush1.bf16.msra.mxu0 %v1606
    %1668 = vmatprep.subr.bf16.mxu0 %v1611
    %1669 = vmatpush1.bf16.msra.mxu0 %v1610
    %1670 = vmatprep.subr.bf16.mxu0 %v1615
    %1671 = vmatpush1.bf16.msra.mxu0 %v1614
    %1672 = vmatprep.subr.bf16.mxu0 %v1619
    %1673 = vmatpush1.bf16.msra.mxu0 %v1618
    %1674 = vmatprep.subr.bf16.mxu0 %v1623
    %1675 = vmatpush1.bf16.msra.mxu0 %v1622
    %1676 = vmatprep.subr.bf16.mxu0 %v1627
    %1677 = vmatpush1.bf16.msra.mxu0 %v1626
    %1678 = vmatprep.subr.bf16.mxu0 0
    %1679 = vmatpush1.bf16.msra.mxu0 0
    %1680 = vmatprep.subr.bf16.mxu0 0
    %1681 = vmatpush1.bf16.msra.mxu0 0
    %1682 = vmatprep.subr.bf16.mxu0 0
    %1683 = vmatpush1.bf16.msra.mxu0 0
    %1684 = vmatprep.subr.bf16.mxu0 0
    %1685 = vmatpush1.bf16.msra.mxu0 0
    %1686 = vmatprep.subr.bf16.mxu0 0
    %1687 = vmatpush1.bf16.msra.mxu0 0
    %1688 = vmatprep.subr.bf16.mxu0 0
    %1689 = vmatpush1.bf16.msra.mxu0 0
    %1690 = vmatprep.subr.bf16.mxu0 0
    %1691 = vmatpush1.bf16.msra.mxu0 0
    %1692 = vmatprep.subr.bf16.mxu0 0
    %1693 = vmatpush1.bf16.msra.mxu0 0
    %1694 = vmatprep.mubr.bf16.mxu0 0
    %1695 = vmatmul.mubr.bf16.gmra.mrb[0].mxu0 0
    %v1696 = vpop.f32.mrb[0].mxu0
    %v1697 = vadd.f32 0.0, %v1696
    %v1698 = vpop.f32.mrb[0].mxu0
    %v1699 = vadd.f32 0.0, %v1698
    %v1700 = vpop.f32.mrb[0].mxu0
    %v1701 = vpop.f32.mrb[0].mxu0
    %1702 = vdwg.mxu0
    %1703 = vmatprep.subr.bf16.mxu0 %v1601
    %1704 = vmatpush1.bf16.msra.mxu0 %v1600
    %1705 = vmatprep.subr.bf16.mxu0 %v1605
    %1706 = vmatpush1.bf16.msra.mxu0 %v1604
    %1707 = vmatprep.subr.bf16.mxu0 %v1609
    %1708 = vmatpush1.bf16.msra.mxu0 %v1608
    %1709 = vmatprep.subr.bf16.mxu0 %v1613
    %1710 = vmatpush1.bf16.msra.mxu0 %v1612
    %1711 = vmatprep.subr.bf16.mxu0 %v1617
    %1712 = vmatpush1.bf16.msra.mxu0 %v1616
    %1713 = vmatprep.subr.bf16.mxu0 %v1621
    %1714 = vmatpush1.bf16.msra.mxu0 %v1620
    %1715 = vmatprep.subr.bf16.mxu0 %v1625
    %1716 = vmatpush1.bf16.msra.mxu0 %v1624
    %1717 = vmatprep.subr.bf16.mxu0 %v1629
    %1718 = vmatpush1.bf16.msra.mxu0 %v1628
    %1719 = vmatprep.subr.bf16.mxu0 0
    %1720 = vmatpush1.bf16.msra.mxu0 0
    %1721 = vmatprep.subr.bf16.mxu0 0
    %1722 = vmatpush1.bf16.msra.mxu0 0
    %1723 = vmatprep.subr.bf16.mxu0 0
    %1724 = vmatpush1.bf16.msra.mxu0 0
    %1725 = vmatprep.subr.bf16.mxu0 0
    %1726 = vmatpush1.bf16.msra.mxu0 0
    %1727 = vmatprep.subr.bf16.mxu0 0
    %1728 = vmatpush1.bf16.msra.mxu0 0
    %1729 = vmatprep.subr.bf16.mxu0 0
    %1730 = vmatpush1.bf16.msra.mxu0 0
    %1731 = vmatprep.subr.bf16.mxu0 0
    %1732 = vmatpush1.bf16.msra.mxu0 0
    %1733 = vmatprep.subr.bf16.mxu0 0
    %1734 = vmatpush1.bf16.msra.mxu0 0
    %1735 = vmatprep.mubr.bf16.mxu0 0
    %1736 = vmatmul.mubr.bf16.gmra.mrb[0].mxu0 0
    %v1737 = vpop.f32.mrb[0].mxu0
    %v1738 = vadd.f32 0.0, %v1737
    %v1739 = vpop.f32.mrb[0].mxu0
    %v1740 = vadd.f32 0.0, %v1739
    %v1741 = vpop.f32.mrb[0].mxu0
    %v1742 = vpop.f32.mrb[0].mxu0
    %1743 = vdwg.mxu0
    %v1748 = vcombine.low %v1697, %v1699
    %v1749 = vcombine.low %v1738, %v1740
    %v1751 = vunpack.c.l.s4 1983009808
    %v1752 = vunpack.c.0.s8 %v1751
    %v1753 = vlaneseq
    %v1754 = vshrl.u32 %v1753, 7
    %v1755 = vsub.s32 %v1752, %v1754
    %v1756 = vrot.slane %v1748, %v1755
    %v1758 = vunpack.c.l.s4 1983009808
    %v1759 = vunpack.c.0.s8 %v1758
    %v1760 = vlaneseq
    %v1761 = vshrl.u32 %v1760, 7
    %v1762 = vsub.s32 %v1759, %v1761
    %v1763 = vrot.slane %v1749, %v1762
    %v1764 = vcombine.low %v1756, %v1763
    %v1766 = vadd.f32 %v1501, %v1764
    %v1767 = vxor.u32 %v1766, 2147483648
    %v1768 = vmul.f32 %v1767, 1.442695
    %v1769 = vpow.pop %v1768
    %v1770 = vadd.f32 %v1769, 1.0
    %v1771 = vrcp.pop %v1770
    %v1772 = vmul.f32 1.0, %v1771
    %v1774 = vrot.slane %v1766, 6
    %v1776 = vtanh.pop %v1774
    %v1778 = vrot.slane %v1772, 2
    %v1780 = vmul.f32 %v1778, 0.0
    %v1781 = vmul.f32 %v1772, %v1776
    %v1782 = vadd.f32 %v1780, %v1781
    %v1783 = vtanh.pop %v1782
    %v1784 = vrot.slane %v1772, 4
    %v1786 = vmul.f32 %v1784, %v1783
    %v1787 = vld [vmem:[%s473] sm:$0xff]
    %v1788 = vpack.c.bf16 %v1786, %v1786
    %1789 = vmatprep.subr.bf16.mxu0 %v1599
    %1790 = vmatpush1.bf16.msra.mxu0 %v1598
    %1791 = vmatprep.subr.bf16.mxu0 %v1603
    %1792 = vmatpush1.bf16.msra.mxu0 %v1602
    %1793 = vmatprep.subr.bf16.mxu0 %v1607
    %1794 = vmatpush1.bf16.msra.mxu0 %v1606
    %1795 = vmatprep.subr.bf16.mxu0 %v1611
    %1796 = vmatpush1.bf16.msra.mxu0 %v1610
    %1797 = vmatprep.subr.bf16.mxu0 %v1615
    %1798 = vmatpush1.bf16.msra.mxu0 %v1614
    %1799 = vmatprep.subr.bf16.mxu0 %v1619
    %1800 = vmatpush1.bf16.msra.mxu0 %v1618
    %1801 = vmatprep.subr.bf16.mxu0 %v1623
    %1802 = vmatpush1.bf16.msra.mxu0 %v1622
    %1803 = vmatprep.subr.bf16.mxu0 %v1627
    %1804 = vmatpush1.bf16.msra.mxu0 %v1626
    %1805 = vmatprep.subr.bf16.mxu0 0
    %1806 = vmatpush1.bf16.msra.mxu0 0
    %1807 = vmatprep.subr.bf16.mxu0 0
    %1808 = vmatpush1.bf16.msra.mxu0 0
    %1809 = vmatprep.subr.bf16.mxu0 0
    %1810 = vmatpush1.bf16.msra.mxu0 0
    %1811 = vmatprep.subr.bf16.mxu0 0
    %1812 = vmatpush1.bf16.msra.mxu0 0
    %1813 = vmatprep.subr.bf16.mxu0 0
    %1814 = vmatpush1.bf16.msra.mxu0 0
    %1815 = vmatprep.subr.bf16.mxu0 0
    %1816 = vmatpush1.bf16.msra.mxu0 0
    %1817 = vmatprep.subr.bf16.mxu0 0
    %1818 = vmatpush1.bf16.msra.mxu0 0
    %1819 = vmatprep.subr.bf16.mxu0 0
    %1820 = vmatpush1.bf16.msra.mxu0 0
    %1821 = vmatprep.mubr.bf16.mxu0 0
    %1822 = vmatmul.mubr.bf16.gmra.mrb[0].mxu0 %v1788
    %v1823 = vpop.f32.mrb[0].mxu0
    %v1824 = vadd.f32 0.0, %v1823
    %v1825 = vpop.f32.mrb[0].mxu0
    %v1826 = vadd.f32 0.0, %v1825
    %v1827 = vpop.f32.mrb[0].mxu0
    %v1828 = vpop.f32.mrb[0].mxu0
    %1829 = vdwg.mxu0
    %1830 = vmatprep.subr.bf16.mxu0 %v1601
    %1831 = vmatpush1.bf16.msra.mxu0 %v1600
    %1832 = vmatprep.subr.bf16.mxu0 %v1605
    %1833 = vmatpush1.bf16.msra.mxu0 %v1604
    %1834 = vmatprep.subr.bf16.mxu0 %v1609
    %1835 = vmatpush1.bf16.msra.mxu0 %v1608
    %1836 = vmatprep.subr.bf16.mxu0 %v1613
    %1837 = vmatpush1.bf16.msra.mxu0 %v1612
    %1838 = vmatprep.subr.bf16.mxu0 %v1617
    %1839 = vmatpush1.bf16.msra.mxu0 %v1616
    %1840 = vmatprep.subr.bf16.mxu0 %v1621
    %1841 = vmatpush1.bf16.msra.mxu0 %v1620
    %1842 = vmatprep.subr.bf16.mxu0 %v1625
    %1843 = vmatpush1.bf16.msra.mxu0 %v1624
    %1844 = vmatprep.subr.bf16.mxu0 %v1629
    %1845 = vmatpush1.bf16.msra.mxu0 %v1628
    %1846 = vmatprep.subr.bf16.mxu0 0
    %1847 = vmatpush1.bf16.msra.mxu0 0
    %1848 = vmatprep.subr.bf16.mxu0 0
    %1849 = vmatpush1.bf16.msra.mxu0 0
    %1850 = vmatprep.subr.bf16.mxu0 0
    %1851 = vmatpush1.bf16.msra.mxu0 0
    %1852 = vmatprep.subr.bf16.mxu0 0
    %1853 = vmatpush1.bf16.msra.mxu0 0
    %1854 = vmatprep.subr.bf16.mxu0 0
    %1855 = vmatpush1.bf16.msra.mxu0 0
    %1856 = vmatprep.subr.bf16.mxu0 0
    %1857 = vmatpush1.bf16.msra.mxu0 0
    %1858 = vmatprep.subr.bf16.mxu0 0
    %1859 = vmatpush1.bf16.msra.mxu0 0
    %1860 = vmatprep.subr.bf16.mxu0 0
    %1861 = vmatpush1.bf16.msra.mxu0 0
    %1862 = vmatprep.mubr.bf16.mxu0 0
    %1863 = vmatmul.mubr.bf16.gmra.mrb[0].mxu0 %v1788
    %v1864 = vpop.f32.mrb[0].mxu0
    %v1865 = vadd.f32 0.0, %v1864
    %v1866 = vpop.f32.mrb[0].mxu0
    %v1867 = vadd.f32 0.0, %v1866
    %v1868 = vpop.f32.mrb[0].mxu0
    %v1869 = vpop.f32.mrb[0].mxu0
    %1870 = vdwg.mxu0
    %v1875 = vcombine.low %v1824, %v1826
    %v1876 = vcombine.low %v1865, %v1867
    %v1878 = vunpack.c.l.s4 1983009808
    %v1879 = vunpack.c.0.s8 %v1878
    %v1880 = vlaneseq
    %v1881 = vshrl.u32 %v1880, 7
    %v1882 = vsub.s32 %v1879, %v1881
    %v1883 = vrot.slane %v1875, %v1882
    %v1885 = vunpack.c.l.s4 1983009808
    %v1886 = vunpack.c.0.s8 %v1885
    %v1887 = vlaneseq
    %v1888 = vshrl.u32 %v1887, 7
    %v1889 = vsub.s32 %v1886, %v1888
    %v1890 = vrot.slane %v1876, %v1889
    %v1891 = vcombine.low %v1883, %v1890
    %v1893 = vadd.f32 %v1787, %v1891
    %v1894 = vxor.u32 %v1893, 2147483648
    %v1895 = vmul.f32 %v1894, 1.442695
    %v1896 = vpow.pop %v1895
    %v1897 = vadd.f32 %v1896, 1.0
    %v1898 = vrcp.pop %v1897
    %v1899 = vmul.f32 1.0, %v1898
    %v1901 = vrot.slane %v1893, 6
    %v1903 = vtanh.pop %v1901
    %v1905 = vrot.slane %v1899, 2
    %v1907 = vmul.f32 %v1905, %v1782
    %v1908 = vmul.f32 %v1899, %v1903
    %v1909 = vadd.f32 %v1907, %v1908
    %v1910 = vtanh.pop %v1909
    %v1911 = vrot.slane %v1899, 4
    %v1913 = vmul.f32 %v1911, %v1910
    %v1914 = vld [vmem:[%s644] sm:$0xff]
    %v1915 = vpack.c.bf16 %v1913, %v1913
    %1916 = vmatprep.subr.bf16.mxu0 %v1599
    %1917 = vmatpush1.bf16.msra.mxu0 %v1598
    %1918 = vmatprep.subr.bf16.mxu0 %v1603
    %1919 = vmatpush1.bf16.msra.mxu0 %v1602
    %1920 = vmatprep.subr.bf16.mxu0 %v1607
    %1921 = vmatpush1.bf16.msra.mxu0 %v1606
    %1922 = vmatprep.subr.bf16.mxu0 %v1611
    %1923 = vmatpush1.bf16.msra.mxu0 %v1610
    %1924 = vmatprep.subr.bf16.mxu0 %v1615
    %1925 = vmatpush1.bf16.msra.mxu0 %v1614
    %1926 = vmatprep.subr.bf16.mxu0 %v1619
    %1927 = vmatpush1.bf16.msra.mxu0 %v1618
    %1928 = vmatprep.subr.bf16.mxu0 %v1623
    %1929 = vmatpush1.bf16.msra.mxu0 %v1622
    %1930 = vmatprep.subr.bf16.mxu0 %v1627
    %1931 = vmatpush1.bf16.msra.mxu0 %v1626
    %1932 = vmatprep.subr.bf16.mxu0 0
    %1933 = vmatpush1.bf16.msra.mxu0 0
    %1934 = vmatprep.subr.bf16.mxu0 0
    %1935 = vmatpush1.bf16.msra.mxu0 0
    %1936 = vmatprep.subr.bf16.mxu0 0
    %1937 = vmatpush1.bf16.msra.mxu0 0
    %1938 = vmatprep.subr.bf16.mxu0 0
    %1939 = vmatpush1.bf16.msra.mxu0 0
    %1940 = vmatprep.subr.bf16.mxu0 0
    %1941 = vmatpush1.bf16.msra.mxu0 0
    %1942 = vmatprep.subr.bf16.mxu0 0
    %1943 = vmatpush1.bf16.msra.mxu0 0
    %1944 = vmatprep.subr.bf16.mxu0 0
    %1945 = vmatpush1.bf16.msra.mxu0 0
    %1946 = vmatprep.subr.bf16.mxu0 0
    %1947 = vmatpush1.bf16.msra.mxu0 0
    %1948 = vmatprep.mubr.bf16.mxu0 0
    %1949 = vmatmul.mubr.bf16.gmra.mrb[0].mxu0 %v1915
    %v1950 = vpop.f32.mrb[0].mxu0
    %v1951 = vadd.f32 0.0, %v1950
    %v1952 = vpop.f32.mrb[0].mxu0
    %v1953 = vadd.f32 0.0, %v1952
    %v1954 = vpop.f32.mrb[0].mxu0
    %v1955 = vpop.f32.mrb[0].mxu0
    %1956 = vdwg.mxu0
    %1957 = vmatprep.subr.bf16.mxu0 %v1601
    %1958 = vmatpush1.bf16.msra.mxu0 %v1600
    %1959 = vmatprep.subr.bf16.mxu0 %v1605
    %1960 = vmatpush1.bf16.msra.mxu0 %v1604
    %1961 = vmatprep.subr.bf16.mxu0 %v1609
    %1962 = vmatpush1.bf16.msra.mxu0 %v1608
    %1963 = vmatprep.subr.bf16.mxu0 %v1613
    %1964 = vmatpush1.bf16.msra.mxu0 %v1612
    %1965 = vmatprep.subr.bf16.mxu0 %v1617
    %1966 = vmatpush1.bf16.msra.mxu0 %v1616
    %1967 = vmatprep.subr.bf16.mxu0 %v1621
    %1968 = vmatpush1.bf16.msra.mxu0 %v1620
    %1969 = vmatprep.subr.bf16.mxu0 %v1625
    %1970 = vmatpush1.bf16.msra.mxu0 %v1624
    %1971 = vmatprep.subr.bf16.mxu0 %v1629
    %1972 = vmatpush1.bf16.msra.mxu0 %v1628
    %1973 = vmatprep.subr.bf16.mxu0 0
    %1974 = vmatpush1.bf16.msra.mxu0 0
    %1975 = vmatprep.subr.bf16.mxu0 0
    %1976 = vmatpush1.bf16.msra.mxu0 0
    %1977 = vmatprep.subr.bf16.mxu0 0
    %1978 = vmatpush1.bf16.msra.mxu0 0
    %1979 = vmatprep.subr.bf16.mxu0 0
    %1980 = vmatpush1.bf16.msra.mxu0 0
    %1981 = vmatprep.subr.bf16.mxu0 0
    %1982 = vmatpush1.bf16.msra.mxu0 0
    %1983 = vmatprep.subr.bf16.mxu0 0
    %1984 = vmatpush1.bf16.msra.mxu0 0
    %1985 = vmatprep.subr.bf16.mxu0 0
    %1986 = vmatpush1.bf16.msra.mxu0 0
    %1987 = vmatprep.subr.bf16.mxu0 0
    %1988 = vmatpush1.bf16.msra.mxu0 0
    %1989 = vmatprep.mubr.bf16.mxu0 0
    %1990 = vmatmul.mubr.bf16.gmra.mrb[0].mxu0 %v1915
    %v1991 = vpop.f32.mrb[0].mxu0
    %v1992 = vadd.f32 0.0, %v1991
    %v1993 = vpop.f32.mrb[0].mxu0
    %v1994 = vadd.f32 0.0, %v1993
    %v1995 = vpop.f32.mrb[0].mxu0
    %v1996 = vpop.f32.mrb[0].mxu0
    %1997 = vdwg.mxu0
    %v2002 = vcombine.low %v1951, %v1953
    %v2003 = vcombine.low %v1992, %v1994
    %v2005 = vunpack.c.l.s4 1983009808
    %v2006 = vunpack.c.0.s8 %v2005
    %v2007 = vlaneseq
    %v2008 = vshrl.u32 %v2007, 7
    %v2009 = vsub.s32 %v2006, %v2008
    %v2010 = vrot.slane %v2002, %v2009
    %v2012 = vunpack.c.l.s4 1983009808
    %v2013 = vunpack.c.0.s8 %v2012
    %v2014 = vlaneseq
    %v2015 = vshrl.u32 %v2014, 7
    %v2016 = vsub.s32 %v2013, %v2015
    %v2017 = vrot.slane %v2003, %v2016
    %v2018 = vcombine.low %v2010, %v2017
    %v2020 = vadd.f32 %v1914, %v2018
    %v2021 = vxor.u32 %v2020, 2147483648
    %v2022 = vmul.f32 %v2021, 1.442695
    %v2023 = vpow.pop %v2022
    %v2024 = vadd.f32 %v2023, 1.0
    %v2025 = vrcp.pop %v2024
    %v2026 = vmul.f32 1.0, %v2025
    %v2028 = vrot.slane %v2020, 6
    %v2030 = vtanh.pop %v2028
    %v2032 = vrot.slane %v2026, 2
    %v2034 = vmul.f32 %v2032, %v1909
    %v2035 = vmul.f32 %v2026, %v2030
    %v2036 = vadd.f32 %v2034, %v2035
    %v2037 = vtanh.pop %v2036
    %v2038 = vrot.slane %v2026, 4
    %v2040 = vmul.f32 %v2038, %v2037
    %v2041 = vld [vmem:[%s815] sm:$0xff]
    %v2042 = vpack.c.bf16 %v2040, %v2040
    %2043 = vmatprep.subr.bf16.mxu0 %v1599
    %2044 = vmatpush1.bf16.msra.mxu0 %v1598
    %2045 = vmatprep.subr.bf16.mxu0 %v1603
    %2046 = vmatpush1.bf16.msra.mxu0 %v1602
    %2047 = vmatprep.subr.bf16.mxu0 %v1607
    %2048 = vmatpush1.bf16.msra.mxu0 %v1606
    %2049 = vmatprep.subr.bf16.mxu0 %v1611
    %2050 = vmatpush1.bf16.msra.mxu0 %v1610
    %2051 = vmatprep.subr.bf16.mxu0 %v1615
    %2052 = vmatpush1.bf16.msra.mxu0 %v1614
    %2053 = vmatprep.subr.bf16.mxu0 %v1619
    %2054 = vmatpush1.bf16.msra.mxu0 %v1618
    %2055 = vmatprep.subr.bf16.mxu0 %v1623
    %2056 = vmatpush1.bf16.msra.mxu0 %v1622
    %2057 = vmatprep.subr.bf16.mxu0 %v1627
    %2058 = vmatpush1.bf16.msra.mxu0 %v1626
    %2059 = vmatprep.subr.bf16.mxu0 0
    %2060 = vmatpush1.bf16.msra.mxu0 0
    %2061 = vmatprep.subr.bf16.mxu0 0
    %2062 = vmatpush1.bf16.msra.mxu0 0
    %2063 = vmatprep.subr.bf16.mxu0 0
    %2064 = vmatpush1.bf16.msra.mxu0 0
    %2065 = vmatprep.subr.bf16.mxu0 0
    %2066 = vmatpush1.bf16.msra.mxu0 0
    %2067 = vmatprep.subr.bf16.mxu0 0
    %2068 = vmatpush1.bf16.msra.mxu0 0
    %2069 = vmatprep.subr.bf16.mxu0 0
    %2070 = vmatpush1.bf16.msra.mxu0 0
    %2071 = vmatprep.subr.bf16.mxu0 0
    %2072 = vmatpush1.bf16.msra.mxu0 0
    %2073 = vmatprep.subr.bf16.mxu0 0
    %2074 = vmatpush1.bf16.msra.mxu0 0
    %2075 = vmatprep.mubr.bf16.mxu0 0
    %2076 = vmatmul.mubr.bf16.gmra.mrb[0].mxu0 %v2042
    %v2077 = vpop.f32.mrb[0].mxu0
    %v2078 = vadd.f32 0.0, %v2077
    %v2079 = vpop.f32.mrb[0].mxu0
    %v2080 = vadd.f32 0.0, %v2079
    %v2081 = vpop.f32.mrb[0].mxu0
    %v2082 = vpop.f32.mrb[0].mxu0
    %2083 = vdwg.mxu0
    %2084 = vmatprep.subr.bf16.mxu0 %v1601
    %2085 = vmatpush1.bf16.msra.mxu0 %v1600
    %2086 = vmatprep.subr.bf16.mxu0 %v1605
    %2087 = vmatpush1.bf16.msra.mxu0 %v1604
    %2088 = vmatprep.subr.bf16.mxu0 %v1609
    %2089 = vmatpush1.bf16.msra.mxu0 %v1608
    %2090 = vmatprep.subr.bf16.mxu0 %v1613
    %2091 = vmatpush1.bf16.msra.mxu0 %v1612
    %2092 = vmatprep.subr.bf16.mxu0 %v1617
    %2093 = vmatpush1.bf16.msra.mxu0 %v1616
    %2094 = vmatprep.subr.bf16.mxu0 %v1621
    %2095 = vmatpush1.bf16.msra.mxu0 %v1620
    %2096 = vmatprep.subr.bf16.mxu0 %v1625
    %2097 = vmatpush1.bf16.msra.mxu0 %v1624
    %2098 = vmatprep.subr.bf16.mxu0 %v1629
    %2099 = vmatpush1.bf16.msra.mxu0 %v1628
    %2100 = vmatprep.subr.bf16.mxu0 0
    %2101 = vmatpush1.bf16.msra.mxu0 0
    %2102 = vmatprep.subr.bf16.mxu0 0
    %2103 = vmatpush1.bf16.msra.mxu0 0
    %2104 = vmatprep.subr.bf16.mxu0 0
    %2105 = vmatpush1.bf16.msra.mxu0 0
    %2106 = vmatprep.subr.bf16.mxu0 0
    %2107 = vmatpush1.bf16.msra.mxu0 0
    %2108 = vmatprep.subr.bf16.mxu0 0
    %2109 = vmatpush1.bf16.msra.mxu0 0
    %2110 = vmatprep.subr.bf16.mxu0 0
    %2111 = vmatpush1.bf16.msra.mxu0 0
    %2112 = vmatprep.subr.bf16.mxu0 0
    %2113 = vmatpush1.bf16.msra.mxu0 0
    %2114 = vmatprep.subr.bf16.mxu0 0
    %2115 = vmatpush1.bf16.msra.mxu0 0
    %2116 = vmatprep.mubr.bf16.mxu0 0
    %2117 = vmatmul.mubr.bf16.gmra.mrb[0].mxu0 %v2042
    %v2118 = vpop.f32.mrb[0].mxu0
    %v2119 = vadd.f32 0.0, %v2118
    %v2120 = vpop.f32.mrb[0].mxu0
    %v2121 = vadd.f32 0.0, %v2120
    %v2122 = vpop.f32.mrb[0].mxu0
    %v2123 = vpop.f32.mrb[0].mxu0
    %2124 = vdwg.mxu0
    %v2129 = vcombine.low %v2078, %v2080
    %v2130 = vcombine.low %v2119, %v2121
    %v2132 = vunpack.c.l.s4 1983009808
    %v2133 = vunpack.c.0.s8 %v2132
    %v2134 = vlaneseq
    %v2135 = vshrl.u32 %v2134, 7
    %v2136 = vsub.s32 %v2133, %v2135
    %v2137 = vrot.slane %v2129, %v2136
    %v2139 = vunpack.c.l.s4 1983009808
    %v2140 = vunpack.c.0.s8 %v2139
    %v2141 = vlaneseq
    %v2142 = vshrl.u32 %v2141, 7
    %v2143 = vsub.s32 %v2140, %v2142
    %v2144 = vrot.slane %v2130, %v2143
    %v2145 = vcombine.low %v2137, %v2144
    %v2147 = vadd.f32 %v2041, %v2145
    %v2148 = vxor.u32 %v2147, 2147483648
    %v2149 = vmul.f32 %v2148, 1.442695
    %v2150 = vpow.pop %v2149
    %v2151 = vadd.f32 %v2150, 1.0
    %v2152 = vrcp.pop %v2151
    %v2153 = vmul.f32 1.0, %v2152
    %v2155 = vrot.slane %v2147, 6
    %v2157 = vtanh.pop %v2155
    %v2159 = vrot.slane %v2153, 2
    %v2161 = vmul.f32 %v2159, %v2036
    %v2162 = vmul.f32 %v2153, %v2157
    %v2163 = vadd.f32 %v2161, %v2162
    %v2164 = vtanh.pop %v2163
    %v2165 = vrot.slane %v2153, 4
    %v2167 = vmul.f32 %v2165, %v2164
    %v2168 = vld [vmem:[%s986] sm:$0xff]
    %v2169 = vpack.c.bf16 %v2167, %v2167
    %2170 = vmatprep.subr.bf16.mxu0 %v1599
    %2171 = vmatpush1.bf16.msra.mxu0 %v1598
    %2172 = vmatprep.subr.bf16.mxu0 %v1603
    %2173 = vmatpush1.bf16.msra.mxu0 %v1602
    %2174 = vmatprep.subr.bf16.mxu0 %v1607
    %2175 = vmatpush1.bf16.msra.mxu0 %v1606
    %2176 = vmatprep.subr.bf16.mxu0 %v1611
    %2177 = vmatpush1.bf16.msra.mxu0 %v1610
    %2178 = vmatprep.subr.bf16.mxu0 %v1615
    %2179 = vmatpush1.bf16.msra.mxu0 %v1614
    %2180 = vmatprep.subr.bf16.mxu0 %v1619
    %2181 = vmatpush1.bf16.msra.mxu0 %v1618
    %2182 = vmatprep.subr.bf16.mxu0 %v1623
    %2183 = vmatpush1.bf16.msra.mxu0 %v1622
    %2184 = vmatprep.subr.bf16.mxu0 %v1627
    %2185 = vmatpush1.bf16.msra.mxu0 %v1626
    %2186 = vmatprep.subr.bf16.mxu0 0
    %2187 = vmatpush1.bf16.msra.mxu0 0
    %2188 = vmatprep.subr.bf16.mxu0 0
    %2189 = vmatpush1.bf16.msra.mxu0 0
    %2190 = vmatprep.subr.bf16.mxu0 0
    %2191 = vmatpush1.bf16.msra.mxu0 0
    %2192 = vmatprep.subr.bf16.mxu0 0
    %2193 = vmatpush1.bf16.msra.mxu0 0
    %2194 = vmatprep.subr.bf16.mxu0 0
    %2195 = vmatpush1.bf16.msra.mxu0 0
    %2196 = vmatprep.subr.bf16.mxu0 0
    %2197 = vmatpush1.bf16.msra.mxu0 0
    %2198 = vmatprep.subr.bf16.mxu0 0
    %2199 = vmatpush1.bf16.msra.mxu0 0
    %2200 = vmatprep.subr.bf16.mxu0 0
    %2201 = vmatpush1.bf16.msra.mxu0 0
    %2202 = vmatprep.mubr.bf16.mxu0 0
    %2203 = vmatmul.mubr.bf16.gmra.mrb[0].mxu0 %v2169
    %v2204 = vpop.f32.mrb[0].mxu0
    %v2205 = vadd.f32 0.0, %v2204
    %v2206 = vpop.f32.mrb[0].mxu0
    %v2207 = vadd.f32 0.0, %v2206
    %v2208 = vpop.f32.mrb[0].mxu0
    %v2209 = vpop.f32.mrb[0].mxu0
    %2210 = vdwg.mxu0
    %2211 = vmatprep.subr.bf16.mxu0 %v1601
    %2212 = vmatpush1.bf16.msra.mxu0 %v1600
    %2213 = vmatprep.subr.bf16.mxu0 %v1605
    %2214 = vmatpush1.bf16.msra.mxu0 %v1604
    %2215 = vmatprep.subr.bf16.mxu0 %v1609
    %2216 = vmatpush1.bf16.msra.mxu0 %v1608
    %2217 = vmatprep.subr.bf16.mxu0 %v1613
    %2218 = vmatpush1.bf16.msra.mxu0 %v1612
    %2219 = vmatprep.subr.bf16.mxu0 %v1617
    %2220 = vmatpush1.bf16.msra.mxu0 %v1616
    %2221 = vmatprep.subr.bf16.mxu0 %v1621
    %2222 = vmatpush1.bf16.msra.mxu0 %v1620
    %2223 = vmatprep.subr.bf16.mxu0 %v1625
    %2224 = vmatpush1.bf16.msra.mxu0 %v1624
    %2225 = vmatprep.subr.bf16.mxu0 %v1629
    %2226 = vmatpush1.bf16.msra.mxu0 %v1628
    %2227 = vmatprep.subr.bf16.mxu0 0
    %2228 = vmatpush1.bf16.msra.mxu0 0
    %2229 = vmatprep.subr.bf16.mxu0 0
    %2230 = vmatpush1.bf16.msra.mxu0 0
    %2231 = vmatprep.subr.bf16.mxu0 0
    %2232 = vmatpush1.bf16.msra.mxu0 0
    %2233 = vmatprep.subr.bf16.mxu0 0
    %2234 = vmatpush1.bf16.msra.mxu0 0
    %2235 = vmatprep.subr.bf16.mxu0 0
    %2236 = vmatpush1.bf16.msra.mxu0 0
    %2237 = vmatprep.subr.bf16.mxu0 0
    %2238 = vmatpush1.bf16.msra.mxu0 0
    %2239 = vmatprep.subr.bf16.mxu0 0
    %2240 = vmatpush1.bf16.msra.mxu0 0
    %2241 = vmatprep.subr.bf16.mxu0 0
    %2242 = vmatpush1.bf16.msra.mxu0 0
    %2243 = vmatprep.mubr.bf16.mxu0 0
    %2244 = vmatmul.mubr.bf16.gmra.mrb[0].mxu0 %v2169
    %v2245 = vpop.f32.mrb[0].mxu0
    %v2246 = vadd.f32 0.0, %v2245
    %v2247 = vpop.f32.mrb[0].mxu0
    %v2248 = vadd.f32 0.0, %v2247
    %v2249 = vpop.f32.mrb[0].mxu0
    %v2250 = vpop.f32.mrb[0].mxu0
    %2251 = vdwg.mxu0
    %v2256 = vcombine.low %v2205, %v2207
    %v2257 = vcombine.low %v2246, %v2248
    %v2259 = vunpack.c.l.s4 1983009808
    %v2260 = vunpack.c.0.s8 %v2259
    %v2261 = vlaneseq
    %v2262 = vshrl.u32 %v2261, 7
    %v2263 = vsub.s32 %v2260, %v2262
    %v2264 = vrot.slane %v2256, %v2263
    %v2266 = vunpack.c.l.s4 1983009808
    %v2267 = vunpack.c.0.s8 %v2266
    %v2268 = vlaneseq
    %v2269 = vshrl.u32 %v2268, 7
    %v2270 = vsub.s32 %v2267, %v2269
    %v2271 = vrot.slane %v2257, %v2270
    %v2272 = vcombine.low %v2264, %v2271
    %v2274 = vadd.f32 %v2168, %v2272
    %v2275 = vxor.u32 %v2274, 2147483648
    %v2276 = vmul.f32 %v2275, 1.442695
    %v2277 = vpow.pop %v2276
    %v2278 = vadd.f32 %v2277, 1.0
    %v2279 = vrcp.pop %v2278
    %v2280 = vmul.f32 1.0, %v2279
    %v2282 = vrot.slane %v2274, 6
    %v2284 = vtanh.pop %v2282
    %v2286 = vrot.slane %v2280, 2
    %v2288 = vmul.f32 %v2286, %v2163
    %v2289 = vmul.f32 %v2280, %v2284
    %v2290 = vadd.f32 %v2288, %v2289
    %v2291 = vtanh.pop %v2290
    %v2292 = vrot.slane %v2280, 4
    %v2294 = vmul.f32 %v2292, %v2291
    %v2295 = vld [vmem:[%s1157] sm:$0xff]
    %v2296 = vpack.c.bf16 %v2294, %v2294
    %2297 = vmatprep.subr.bf16.mxu0 %v1599
    %2298 = vmatpush1.bf16.msra.mxu0 %v1598
    %2299 = vmatprep.subr.bf16.mxu0 %v1603
    %2300 = vmatpush1.bf16.msra.mxu0 %v1602
    %2301 = vmatprep.subr.bf16.mxu0 %v1607
    %2302 = vmatpush1.bf16.msra.mxu0 %v1606
    %2303 = vmatprep.subr.bf16.mxu0 %v1611
    %2304 = vmatpush1.bf16.msra.mxu0 %v1610
    %2305 = vmatprep.subr.bf16.mxu0 %v1615
    %2306 = vmatpush1.bf16.msra.mxu0 %v1614
    %2307 = vmatprep.subr.bf16.mxu0 %v1619
    %2308 = vmatpush1.bf16.msra.mxu0 %v1618
    %2309 = vmatprep.subr.bf16.mxu0 %v1623
    %2310 = vmatpush1.bf16.msra.mxu0 %v1622
    %2311 = vmatprep.subr.bf16.mxu0 %v1627
    %2312 = vmatpush1.bf16.msra.mxu0 %v1626
    %2313 = vmatprep.subr.bf16.mxu0 0
    %2314 = vmatpush1.bf16.msra.mxu0 0
    %2315 = vmatprep.subr.bf16.mxu0 0
    %2316 = vmatpush1.bf16.msra.mxu0 0
    %2317 = vmatprep.subr.bf16.mxu0 0
    %2318 = vmatpush1.bf16.msra.mxu0 0
    %2319 = vmatprep.subr.bf16.mxu0 0
    %2320 = vmatpush1.bf16.msra.mxu0 0
    %2321 = vmatprep.subr.bf16.mxu0 0
    %2322 = vmatpush1.bf16.msra.mxu0 0
    %2323 = vmatprep.subr.bf16.mxu0 0
    %2324 = vmatpush1.bf16.msra.mxu0 0
    %2325 = vmatprep.subr.bf16.mxu0 0
    %2326 = vmatpush1.bf16.msra.mxu0 0
    %2327 = vmatprep.subr.bf16.mxu0 0
    %2328 = vmatpush1.bf16.msra.mxu0 0
    %2329 = vmatprep.mubr.bf16.mxu0 0
    %2330 = vmatmul.mubr.bf16.gmra.mrb[0].mxu0 %v2296
    %v2331 = vpop.f32.mrb[0].mxu0
    %v2332 = vadd.f32 0.0, %v2331
    %v2333 = vpop.f32.mrb[0].mxu0
    %v2334 = vadd.f32 0.0, %v2333
    %v2335 = vpop.f32.mrb[0].mxu0
    %v2336 = vpop.f32.mrb[0].mxu0
    %2337 = vdwg.mxu0
    %2338 = vmatprep.subr.bf16.mxu0 %v1601
    %2339 = vmatpush1.bf16.msra.mxu0 %v1600
    %2340 = vmatprep.subr.bf16.mxu0 %v1605
    %2341 = vmatpush1.bf16.msra.mxu0 %v1604
    %2342 = vmatprep.subr.bf16.mxu0 %v1609
    %2343 = vmatpush1.bf16.msra.mxu0 %v1608
    %2344 = vmatprep.subr.bf16.mxu0 %v1613
    %2345 = vmatpush1.bf16.msra.mxu0 %v1612
    %2346 = vmatprep.subr.bf16.mxu0 %v1617
    %2347 = vmatpush1.bf16.msra.mxu0 %v1616
    %2348 = vmatprep.subr.bf16.mxu0 %v1621
    %2349 = vmatpush1.bf16.msra.mxu0 %v1620
    %2350 = vmatprep.subr.bf16.mxu0 %v1625
    %2351 = vmatpush1.bf16.msra.mxu0 %v1624
    %2352 = vmatprep.subr.bf16.mxu0 %v1629
    %2353 = vmatpush1.bf16.msra.mxu0 %v1628
    %2354 = vmatprep.subr.bf16.mxu0 0
    %2355 = vmatpush1.bf16.msra.mxu0 0
    %2356 = vmatprep.subr.bf16.mxu0 0
    %2357 = vmatpush1.bf16.msra.mxu0 0
    %2358 = vmatprep.subr.bf16.mxu0 0
    %2359 = vmatpush1.bf16.msra.mxu0 0
    %2360 = vmatprep.subr.bf16.mxu0 0
    %2361 = vmatpush1.bf16.msra.mxu0 0
    %2362 = vmatprep.subr.bf16.mxu0 0
    %2363 = vmatpush1.bf16.msra.mxu0 0
    %2364 = vmatprep.subr.bf16.mxu0 0
    %2365 = vmatpush1.bf16.msra.mxu0 0
    %2366 = vmatprep.subr.bf16.mxu0 0
    %2367 = vmatpush1.bf16.msra.mxu0 0
    %2368 = vmatprep.subr.bf16.mxu0 0
    %2369 = vmatpush1.bf16.msra.mxu0 0
    %2370 = vmatprep.mubr.bf16.mxu0 0
    %2371 = vmatmul.mubr.bf16.gmra.mrb[0].mxu0 %v2296
    %v2372 = vpop.f32.mrb[0].mxu0
    %v2373 = vadd.f32 0.0, %v2372
    %v2374 = vpop.f32.mrb[0].mxu0
    %v2375 = vadd.f32 0.0, %v2374
    %v2376 = vpop.f32.mrb[0].mxu0
    %v2377 = vpop.f32.mrb[0].mxu0
    %2378 = vdwg.mxu0
    %v2383 = vcombine.low %v2332, %v2334
    %v2384 = vcombine.low %v2373, %v2375
    %v2386 = vunpack.c.l.s4 1983009808
    %v2387 = vunpack.c.0.s8 %v2386
    %v2388 = vlaneseq
    %v2389 = vshrl.u32 %v2388, 7
    %v2390 = vsub.s32 %v2387, %v2389
    %v2391 = vrot.slane %v2383, %v2390
    %v2393 = vunpack.c.l.s4 1983009808
    %v2394 = vunpack.c.0.s8 %v2393
    %v2395 = vlaneseq
    %v2396 = vshrl.u32 %v2395, 7
    %v2397 = vsub.s32 %v2394, %v2396
    %v2398 = vrot.slane %v2384, %v2397
    %v2399 = vcombine.low %v2391, %v2398
    %v2401 = vadd.f32 %v2295, %v2399
    %v2402 = vxor.u32 %v2401, 2147483648
    %v2403 = vmul.f32 %v2402, 1.442695
    %v2404 = vpow.pop %v2403
    %v2405 = vadd.f32 %v2404, 1.0
    %v2406 = vrcp.pop %v2405
    %v2407 = vmul.f32 1.0, %v2406
    %v2409 = vrot.slane %v2401, 6
    %v2411 = vtanh.pop %v2409
    %v2413 = vrot.slane %v2407, 2
    %v2415 = vmul.f32 %v2413, %v2290
    %v2416 = vmul.f32 %v2407, %v2411
    %v2417 = vadd.f32 %v2415, %v2416
    %v2418 = vtanh.pop %v2417
    %v2419 = vrot.slane %v2407, 4
    %v2421 = vmul.f32 %v2419, %v2418
    %v2422 = vld [vmem:[%s1328] sm:$0xff]
    %v2423 = vpack.c.bf16 %v2421, %v2421
    %2424 = vmatprep.subr.bf16.mxu0 %v1599
    %2425 = vmatpush1.bf16.msra.mxu0 %v1598
    %2426 = vmatprep.subr.bf16.mxu0 %v1603
    %2427 = vmatpush1.bf16.msra.mxu0 %v1602
    %2428 = vmatprep.subr.bf16.mxu0 %v1607
    %2429 = vmatpush1.bf16.msra.mxu0 %v1606
    %2430 = vmatprep.subr.bf16.mxu0 %v1611
    %2431 = vmatpush1.bf16.msra.mxu0 %v1610
    %2432 = vmatprep.subr.bf16.mxu0 %v1615
    %2433 = vmatpush1.bf16.msra.mxu0 %v1614
    %2434 = vmatprep.subr.bf16.mxu0 %v1619
    %2435 = vmatpush1.bf16.msra.mxu0 %v1618
    %2436 = vmatprep.subr.bf16.mxu0 %v1623
    %2437 = vmatpush1.bf16.msra.mxu0 %v1622
    %2438 = vmatprep.subr.bf16.mxu0 %v1627
    %2439 = vmatpush1.bf16.msra.mxu0 %v1626
    %2440 = vmatprep.subr.bf16.mxu0 0
    %2441 = vmatpush1.bf16.msra.mxu0 0
    %2442 = vmatprep.subr.bf16.mxu0 0
    %2443 = vmatpush1.bf16.msra.mxu0 0
    %2444 = vmatprep.subr.bf16.mxu0 0
    %2445 = vmatpush1.bf16.msra.mxu0 0
    %2446 = vmatprep.subr.bf16.mxu0 0
    %2447 = vmatpush1.bf16.msra.mxu0 0
    %2448 = vmatprep.subr.bf16.mxu0 0
    %2449 = vmatpush1.bf16.msra.mxu0 0
    %2450 = vmatprep.subr.bf16.mxu0 0
    %2451 = vmatpush1.bf16.msra.mxu0 0
    %2452 = vmatprep.subr.bf16.mxu0 0
    %2453 = vmatpush1.bf16.msra.mxu0 0
    %2454 = vmatprep.subr.bf16.mxu0 0
    %2455 = vmatpush1.bf16.msra.mxu0 0
    %2456 = vmatprep.mubr.bf16.mxu0 0
    %2457 = vmatmul.mubr.bf16.gmra.mrb[0].mxu0 %v2423
    %v2458 = vpop.f32.mrb[0].mxu0
    %v2459 = vadd.f32 0.0, %v2458
    %v2460 = vpop.f32.mrb[0].mxu0
    %v2461 = vadd.f32 0.0, %v2460
    %v2462 = vpop.f32.mrb[0].mxu0
    %v2463 = vpop.f32.mrb[0].mxu0
    %2464 = vdwg.mxu0
    %2465 = vmatprep.subr.bf16.mxu0 %v1601
    %2466 = vmatpush1.bf16.msra.mxu0 %v1600
    %2467 = vmatprep.subr.bf16.mxu0 %v1605
    %2468 = vmatpush1.bf16.msra.mxu0 %v1604
    %2469 = vmatprep.subr.bf16.mxu0 %v1609
    %2470 = vmatpush1.bf16.msra.mxu0 %v1608
    %2471 = vmatprep.subr.bf16.mxu0 %v1613
    %2472 = vmatpush1.bf16.msra.mxu0 %v1612
    %2473 = vmatprep.subr.bf16.mxu0 %v1617
    %2474 = vmatpush1.bf16.msra.mxu0 %v1616
    %2475 = vmatprep.subr.bf16.mxu0 %v1621
    %2476 = vmatpush1.bf16.msra.mxu0 %v1620
    %2477 = vmatprep.subr.bf16.mxu0 %v1625
    %2478 = vmatpush1.bf16.msra.mxu0 %v1624
    %2479 = vmatprep.subr.bf16.mxu0 %v1629
    %2480 = vmatpush1.bf16.msra.mxu0 %v1628
    %2481 = vmatprep.subr.bf16.mxu0 0
    %2482 = vmatpush1.bf16.msra.mxu0 0
    %2483 = vmatprep.subr.bf16.mxu0 0
    %2484 = vmatpush1.bf16.msra.mxu0 0
    %2485 = vmatprep.subr.bf16.mxu0 0
    %2486 = vmatpush1.bf16.msra.mxu0 0
    %2487 = vmatprep.subr.bf16.mxu0 0
    %2488 = vmatpush1.bf16.msra.mxu0 0
    %2489 = vmatprep.subr.bf16.mxu0 0
    %2490 = vmatpush1.bf16.msra.mxu0 0
    %2491 = vmatprep.subr.bf16.mxu0 0
    %2492 = vmatpush1.bf16.msra.mxu0 0
    %2493 = vmatprep.subr.bf16.mxu0 0
    %2494 = vmatpush1.bf16.msra.mxu0 0
    %2495 = vmatprep.subr.bf16.mxu0 0
    %2496 = vmatpush1.bf16.msra.mxu0 0
    %2497 = vmatprep.mubr.bf16.mxu0 0
    %2498 = vmatmul.mubr.bf16.gmra.mrb[0].mxu0 %v2423
    %v2499 = vpop.f32.mrb[0].mxu0
    %v2500 = vadd.f32 0.0, %v2499
    %v2501 = vpop.f32.mrb[0].mxu0
    %v2502 = vadd.f32 0.0, %v2501
    %v2503 = vpop.f32.mrb[0].mxu0
    %v2504 = vpop.f32.mrb[0].mxu0
    %2505 = vdwg.mxu0
    %v2510 = vcombine.low %v2459, %v2461
    %v2511 = vcombine.low %v2500, %v2502
    %v2513 = vunpack.c.l.s4 1983009808
    %v2514 = vunpack.c.0.s8 %v2513
    %v2515 = vlaneseq
    %v2516 = vshrl.u32 %v2515, 7
    %v2517 = vsub.s32 %v2514, %v2516
    %v2518 = vrot.slane %v2510, %v2517
    %v2520 = vunpack.c.l.s4 1983009808
    %v2521 = vunpack.c.0.s8 %v2520
    %v2522 = vlaneseq
    %v2523 = vshrl.u32 %v2522, 7
    %v2524 = vsub.s32 %v2521, %v2523
    %v2525 = vrot.slane %v2511, %v2524
    %v2526 = vcombine.low %v2518, %v2525
    %v2528 = vadd.f32 %v2422, %v2526
    %v2529 = vxor.u32 %v2528, 2147483648
    %v2530 = vmul.f32 %v2529, 1.442695
    %v2531 = vpow.pop %v2530
    %v2532 = vadd.f32 %v2531, 1.0
    %v2533 = vrcp.pop %v2532
    %v2534 = vmul.f32 1.0, %v2533
    %v2536 = vrot.slane %v2528, 6
    %v2538 = vtanh.pop %v2536
    %v2540 = vrot.slane %v2534, 2
    %v2542 = vmul.f32 %v2540, %v2417
    %v2543 = vmul.f32 %v2534, %v2538
    %v2544 = vadd.f32 %v2542, %v2543
    %v2545 = vtanh.pop %v2544
    %v2546 = vrot.slane %v2534, 4
    %v2548 = vmul.f32 %v2546, %v2545
    %v2549 = vld [vmem:[%s1499] sm:$0xff]
    %v2550 = vpack.c.bf16 %v2548, %v2548
    %2551 = vmatprep.subr.bf16.mxu0 %v1599
    %2552 = vmatpush1.bf16.msra.mxu0 %v1598
    %2553 = vmatprep.subr.bf16.mxu0 %v1603
    %2554 = vmatpush1.bf16.msra.mxu0 %v1602
    %2555 = vmatprep.subr.bf16.mxu0 %v1607
    %2556 = vmatpush1.bf16.msra.mxu0 %v1606
    %2557 = vmatprep.subr.bf16.mxu0 %v1611
    %2558 = vmatpush1.bf16.msra.mxu0 %v1610
    %2559 = vmatprep.subr.bf16.mxu0 %v1615
    %2560 = vmatpush1.bf16.msra.mxu0 %v1614
    %2561 = vmatprep.subr.bf16.mxu0 %v1619
    %2562 = vmatpush1.bf16.msra.mxu0 %v1618
    %2563 = vmatprep.subr.bf16.mxu0 %v1623
    %2564 = vmatpush1.bf16.msra.mxu0 %v1622
    %2565 = vmatprep.subr.bf16.mxu0 %v1627
    %2566 = vmatpush1.bf16.msra.mxu0 %v1626
    %2567 = vmatprep.subr.bf16.mxu0 0
    %2568 = vmatpush1.bf16.msra.mxu0 0
    %2569 = vmatprep.subr.bf16.mxu0 0
    %2570 = vmatpush1.bf16.msra.mxu0 0
    %2571 = vmatprep.subr.bf16.mxu0 0
    %2572 = vmatpush1.bf16.msra.mxu0 0
    %2573 = vmatprep.subr.bf16.mxu0 0
    %2574 = vmatpush1.bf16.msra.mxu0 0
    %2575 = vmatprep.subr.bf16.mxu0 0
    %2576 = vmatpush1.bf16.msra.mxu0 0
    %2577 = vmatprep.subr.bf16.mxu0 0
    %2578 = vmatpush1.bf16.msra.mxu0 0
    %2579 = vmatprep.subr.bf16.mxu0 0
    %2580 = vmatpush1.bf16.msra.mxu0 0
    %2581 = vmatprep.subr.bf16.mxu0 0
    %2582 = vmatpush1.bf16.msra.mxu0 0
    %2583 = vmatprep.mubr.bf16.mxu0 0
    %2584 = vmatmul.mubr.bf16.gmra.mrb[0].mxu0 %v2550
    %v2585 = vpop.f32.mrb[0].mxu0
    %v2586 = vadd.f32 0.0, %v2585
    %v2587 = vpop.f32.mrb[0].mxu0
    %v2588 = vadd.f32 0.0, %v2587
    %v2589 = vpop.f32.mrb[0].mxu0
    %v2590 = vpop.f32.mrb[0].mxu0
    %2591 = vdwg.mxu0
    %2592 = vmatprep.subr.bf16.mxu0 %v1601
    %2593 = vmatpush1.bf16.msra.mxu0 %v1600
    %2594 = vmatprep.subr.bf16.mxu0 %v1605
    %2595 = vmatpush1.bf16.msra.mxu0 %v1604
    %2596 = vmatprep.subr.bf16.mxu0 %v1609
    %2597 = vmatpush1.bf16.msra.mxu0 %v1608
    %2598 = vmatprep.subr.bf16.mxu0 %v1613
    %2599 = vmatpush1.bf16.msra.mxu0 %v1612
    %2600 = vmatprep.subr.bf16.mxu0 %v1617
    %2601 = vmatpush1.bf16.msra.mxu0 %v1616
    %2602 = vmatprep.subr.bf16.mxu0 %v1621
    %2603 = vmatpush1.bf16.msra.mxu0 %v1620
    %2604 = vmatprep.subr.bf16.mxu0 %v1625
    %2605 = vmatpush1.bf16.msra.mxu0 %v1624
    %2606 = vmatprep.subr.bf16.mxu0 %v1629
    %2607 = vmatpush1.bf16.msra.mxu0 %v1628
    %2608 = vmatprep.subr.bf16.mxu0 0
    %2609 = vmatpush1.bf16.msra.mxu0 0
    %2610 = vmatprep.subr.bf16.mxu0 0
    %2611 = vmatpush1.bf16.msra.mxu0 0
    %2612 = vmatprep.subr.bf16.mxu0 0
    %2613 = vmatpush1.bf16.msra.mxu0 0
    %2614 = vmatprep.subr.bf16.mxu0 0
    %2615 = vmatpush1.bf16.msra.mxu0 0
    %2616 = vmatprep.subr.bf16.mxu0 0
    %2617 = vmatpush1.bf16.msra.mxu0 0
    %2618 = vmatprep.subr.bf16.mxu0 0
    %2619 = vmatpush1.bf16.msra.mxu0 0
    %2620 = vmatprep.subr.bf16.mxu0 0
    %2621 = vmatpush1.bf16.msra.mxu0 0
    %2622 = vmatprep.subr.bf16.mxu0 0
    %2623 = vmatpush1.bf16.msra.mxu0 0
    %2624 = vmatprep.mubr.bf16.mxu0 0
    %2625 = vmatmul.mubr.bf16.gmra.mrb[0].mxu0 %v2550
    %v2626 = vpop.f32.mrb[0].mxu0
    %v2627 = vadd.f32 0.0, %v2626
    %v2628 = vpop.f32.mrb[0].mxu0
    %v2629 = vadd.f32 0.0, %v2628
    %v2630 = vpop.f32.mrb[0].mxu0
    %v2631 = vpop.f32.mrb[0].mxu0
    %2632 = vdwg.mxu0
    %v2637 = vcombine.low %v2586, %v2588
    %v2638 = vcombine.low %v2627, %v2629
    %v2640 = vunpack.c.l.s4 1983009808
    %v2641 = vunpack.c.0.s8 %v2640
    %v2642 = vlaneseq
    %v2643 = vshrl.u32 %v2642, 7
    %v2644 = vsub.s32 %v2641, %v2643
    %v2645 = vrot.slane %v2637, %v2644
    %v2647 = vunpack.c.l.s4 1983009808
    %v2648 = vunpack.c.0.s8 %v2647
    %v2649 = vlaneseq
    %v2650 = vshrl.u32 %v2649, 7
    %v2651 = vsub.s32 %v2648, %v2650
    %v2652 = vrot.slane %v2638, %v2651
    %v2653 = vcombine.low %v2645, %v2652
    %v2655 = vadd.f32 %v2549, %v2653
    %v2656 = vxor.u32 %v2655, 2147483648
    %v2657 = vmul.f32 %v2656, 1.442695
    %v2658 = vpow.pop %v2657
    %v2659 = vadd.f32 %v2658, 1.0
    %v2660 = vrcp.pop %v2659
    %v2661 = vmul.f32 1.0, %v2660
    %v2663 = vrot.slane %v2655, 6
    %v2665 = vtanh.pop %v2663
    %v2667 = vrot.slane %v2661, 2
    %v2669 = vmul.f32 %v2667, %v2544
    %v2670 = vmul.f32 %v2661, %v2665
    %v2671 = vadd.f32 %v2669, %v2670
    %v2672 = vtanh.pop %v2671
    %v2673 = vrot.slane %v2661, 4
    %v2675 = vmul.f32 %v2673, %v2672
    %v2676 = vld [vmem:[#allocation5] sm:$0xff]
    %v2677 = vld [vmem:[#allocation5 + $0x8] sm:$0xff]
    %v2678 = vld [vmem:[#allocation5 + $0x10] sm:$0xff]
    %v2679 = vld [vmem:[#allocation5 + $0x18] sm:$0xff]
    %v2680 = vld [vmem:[#allocation5 + $0x20] sm:$0xff]
    %v2681 = vld [vmem:[#allocation5 + $0x28] sm:$0xff]
    %v2682 = vld [vmem:[#allocation5 + $0x30] sm:$0xff]
    %v2683 = vld [vmem:[#allocation5 + $0x38] sm:$0xff]
    %v2684 = vld [vmem:[#allocation5 + $0x40] sm:$0xff]
    %v2685 = vld [vmem:[#allocation5 + $0x48] sm:$0xff]
    %v2686 = vld [vmem:[#allocation5 + $0x50] sm:$0xff]
    %v2687 = vld [vmem:[#allocation5 + $0x58] sm:$0xff]
    %v2688 = vld [vmem:[#allocation5 + $0x60] sm:$0xff]
    %v2689 = vld [vmem:[#allocation5 + $0x68] sm:$0xff]
    %v2690 = vld [vmem:[#allocation5 + $0x70] sm:$0xff]
    %v2691 = vld [vmem:[#allocation5 + $0x78] sm:$0xff]
    %v2692 = vld [vmem:[%s5] sm:$0x1]
    %v2694 = vlaneseq
    %v2695 = vshrl.u32 %v2694, 7
    %v2696 = vsub.s32 0, %v2695
    %v2697 = vrot.slane %v2692, %v2696
    %2699 = vmatprep.subr.mxu0 0.0
    %2700 = vmatpush1.msra.mxu0 %v2676
    %2701 = vmatprep.subr.mxu0 0.0
    %2702 = vmatpush1.msra.mxu0 %v2677
    %2703 = vmatprep.subr.mxu0 0.0
    %2704 = vmatpush1.msra.mxu0 %v2678
    %2705 = vmatprep.subr.mxu0 0.0
    %2706 = vmatpush1.msra.mxu0 %v2679
    %2707 = vmatprep.subr.mxu0 0.0
    %2708 = vmatpush1.msra.mxu0 %v2680
    %2709 = vmatprep.subr.mxu0 0.0
    %2710 = vmatpush1.msra.mxu0 %v2681
    %2711 = vmatprep.subr.mxu0 0.0
    %2712 = vmatpush1.msra.mxu0 %v2682
    %2713 = vmatprep.subr.mxu0 0.0
    %2714 = vmatpush1.msra.mxu0 %v2683
    %2715 = vmatprep.subr.mxu0 0.0
    %2716 = vmatpush1.msra.mxu0 %v2684
    %2717 = vmatprep.subr.mxu0 0.0
    %2718 = vmatpush1.msra.mxu0 %v2685
    %2719 = vmatprep.subr.mxu0 0.0
    %2720 = vmatpush1.msra.mxu0 %v2686
    %2721 = vmatprep.subr.mxu0 0.0
    %2722 = vmatpush1.msra.mxu0 %v2687
    %2723 = vmatprep.subr.mxu0 0.0
    %2724 = vmatpush1.msra.mxu0 %v2688
    %2725 = vmatprep.subr.mxu0 0.0
    %2726 = vmatpush1.msra.mxu0 %v2689
    %2727 = vmatprep.subr.mxu0 0.0
    %2728 = vmatpush1.msra.mxu0 %v2690
    %2729 = vmatprep.subr.mxu0 0.0
    %2730 = vmatpush1.msra.mxu0 %v2691
    %2731 = vmatprep.subr.mxu0 0.0
    %2732 = vmatpush1.msra.mxu0 0.0
    %2733 = vmatprep.subr.mxu0 0.0
    %2734 = vmatpush1.msra.mxu0 0.0
    %2735 = vmatprep.subr.mxu0 0.0
    %2736 = vmatpush1.msra.mxu0 0.0
    %2737 = vmatprep.subr.mxu0 0.0
    %2738 = vmatpush1.msra.mxu0 0.0
    %2739 = vmatprep.subr.mxu0 0.0
    %2740 = vmatpush1.msra.mxu0 0.0
    %2741 = vmatprep.subr.mxu0 0.0
    %2742 = vmatpush1.msra.mxu0 0.0
    %2743 = vmatprep.subr.mxu0 0.0
    %2744 = vmatpush1.msra.mxu0 0.0
    %2745 = vmatprep.subr.mxu0 0.0
    %2746 = vmatpush1.msra.mxu0 0.0
    %2747 = vmatprep.subr.mxu0 0.0
    %2748 = vmatpush1.msra.mxu0 0.0
    %2749 = vmatprep.subr.mxu0 0.0
    %2750 = vmatpush1.msra.mxu0 0.0
    %2751 = vmatprep.subr.mxu0 0.0
    %2752 = vmatpush1.msra.mxu0 0.0
    %2753 = vmatprep.subr.mxu0 0.0
    %2754 = vmatpush1.msra.mxu0 0.0
    %2755 = vmatprep.subr.mxu0 0.0
    %2756 = vmatpush1.msra.mxu0 0.0
    %2757 = vmatprep.subr.mxu0 0.0
    %2758 = vmatpush1.msra.mxu0 0.0
    %2759 = vmatprep.subr.mxu0 0.0
    %2760 = vmatpush1.msra.mxu0 0.0
    %2761 = vmatprep.subr.mxu0 0.0
    %2762 = vmatpush1.msra.mxu0 0.0
    %2763 = vmatprep.mubr.f32.mxu0 0.0
    %2764 = vmatmul.mubr.f32.gmra.mrb[0].mxu0 %v2675
    %v2765 = vpop.f32.mrb[0].mxu0
    %v2766 = vadd.f32 %v2697, %v2765
    %v2767 = vpop.f32.mrb[0].mxu0
    %2768 = vdwg.mxu0
    %v2769 = vlaneseq
    %v2770 = vand.u32 %v2769, 127
    %vm2771 = vcmp.lt.s32.totalorder %v2770, 67
    %v2772 = vsel %vm2771, %v2766, -1e+30
    %v2773 = vsel %vm130, %v2772, -inf
    %2774 = vmax.xlane.f32.xlu0 %v2773
    %v2775 = vpop.xlane.xlu0 %2774
    %v2776 = vsub.f32 %v2772, %v2775
    %v2777 = vmul.f32 %v2776, 1.442695
    %v2778 = vpow.pop %v2777
    %v2779 = vsel %vm130, %v2778, 0.0
    %2780 = vadd.xlane.f32.xlu0 %v2779
    %v2781 = vpop.xlane.xlu0 %2780
    %v2782 = vrcp.pop %v2781
    %v2783 = vmul.f32 %v2778, %v2782
    %vm2784 = vcmp.eq.s32.totalorder %v2770, 67
    %v2785 = vsel %vm2784, 1, 0
    %v2786 = vcvt.s32.f32 %v2785
    %2788 = vset.pattern.permute.xlu0 67
    %2789 = vperm.xlu0 %2788, %v2766
    %v2790 = vpop.permute.xlu0 %2789
    %v2792 = vmul.f32 %v2786, %v2790
    %v2793 = vadd.f32 %v2783, %v2792
    %2794 = vst [vmem:[%s6] sm:$0x3] %v2793
    // Predicated region
    $region34: #{ppo_actor_critic_forward.1} parent=1 // pred_check
      _
    $region35: #{ppo_actor_critic_forward.1} parent=1 // pred_check_branch
      %2796 = sbr.rel (0) target = $region37
    $region36: #{ppo_actor_critic_forward.1} parent=1 // pred_region
      _
    $region37: #{ppo_actor_critic_forward.1} parent=1 // pred_fallthru
      _
    // Predicated region
    $region38: #{ppo_actor_critic_forward.1} parent=1 // pred_check
      _
    $region39: #{ppo_actor_critic_forward.1} parent=1 // pred_check_branch
      %2798 = sbr.rel (0) target = $region41
    $region40: #{ppo_actor_critic_forward.1} parent=1 // pred_region
      _
    $region41: #{ppo_actor_critic_forward.1} parent=1 // pred_fallthru
      _
    %2799 = vsyncpa [#allocation4], 1
    %2800 = vsyncpa [#allocation6], 1

</llo_original>
